<compile_context>
chip_gen: v5e
topology: v5e:2x2
jax: 0.10.0
libtpu: 0.0.40
codegen_flags: <defaults>
</compile_context>

<pallas_src>
import functools
import math

import jax
import jax.numpy as jnp
import numpy as np
from jax.experimental import pallas as pl
from jax.experimental.pallas import tpu as pltpu


# --------------------------------------------------------------------------- #
# Kernels
# --------------------------------------------------------------------------- #
def _matmul_bias_kernel(x_ref, w_ref, b_ref, o_ref, acc_ref):
    """o = x @ w + b, tiled over (M, N, K); K is the reduction (last grid axis).

    MXU operands are cast to bf16; accumulation stays f32 in VMEM scratch."""
    @pl.when(pl.program_id(2) == 0)
    def _():
        acc_ref[...] = jnp.zeros_like(acc_ref)

    acc_ref[...] += jnp.dot(x_ref[...].astype(jnp.bfloat16),
                            w_ref[...].astype(jnp.bfloat16),
                            preferred_element_type=jnp.float32)

    @pl.when(pl.program_id(2) == pl.num_programs(2) - 1)
    def _():
        o_ref[...] = (acc_ref[...] + b_ref[...]).astype(o_ref.dtype)


def _flash_attn_kernel(q_ref, k_ref, v_ref, g_ref, o_ref, m_sc, l_sc, acc_sc, *,
                       kv_axis):
    """Online-softmax attention for one (batch, head, q-tile).

    kv tiles iterate on grid axis `kv_axis` (innermost).  The softmax scale is
    already folded into Wq; sigmoid gating and the reciprocal normalization are
    fused into the final-kv epilogue."""
    kv = pl.program_id(kv_axis)

    @pl.when(kv == 0)
    def _():
        m_sc[...] = jnp.full_like(m_sc, -jnp.inf)
        l_sc[...] = jnp.zeros_like(l_sc)
        acc_sc[...] = jnp.zeros_like(acc_sc)

    q = q_ref[...].astype(jnp.bfloat16)          # (tq, dh)
    k = k_ref[...].astype(jnp.bfloat16)          # (tkv, dh)
    v = v_ref[...].astype(jnp.bfloat16)          # (tkv, dh)
    # s[i, j] = sum_d q[i, d] * k[j, d]  (contraction over dh, no transpose copy)
    s = jax.lax.dot_general(q, k, (((1,), (1,)), ((), ())),
                            preferred_element_type=jnp.float32)      # (tq, tkv)

    m_prev = m_sc[...]
    m_new = jnp.maximum(m_prev, s.max(axis=-1, keepdims=True))
    alpha = jnp.exp(m_prev - m_new)
    p = jnp.exp(s - m_new)
    l_sc[...] = alpha * l_sc[...] + p.sum(axis=-1, keepdims=True)
    acc_sc[...] = alpha * acc_sc[...] + jnp.dot(p.astype(jnp.bfloat16), v,
                                                preferred_element_type=jnp.float32)
    m_sc[...] = m_new

    @pl.when(kv == pl.num_programs(kv_axis) - 1)
    def _():
        gate = jax.nn.sigmoid(g_ref[...].astype(jnp.float32))
        inv_l = pl.reciprocal(l_sc[...], approx=True)    # EUP slot, off the VPU
        o_ref[...] = (acc_sc[...] * inv_l * gate).astype(o_ref.dtype)


# --------------------------------------------------------------------------- #
# pallas_call wrappers
# --------------------------------------------------------------------------- #
_VMEM_LIMIT = 32 * 1024 * 1024  # safe on v5e/v6e/v7x


def _pick_tile(d, cap, align):
    """Largest tile <= cap that evenly divides d AND is `align`-aligned.

    Falls back to the full dimension (which is always a legal, if big, block)."""
    if d <= cap:
        return d
    t = (cap // align) * align
    while t >= align:
        if d % t == 0:
            return t
        t -= align
    return d


def pallas_linear(x2d, w_t, bias_row, out_dtype, *,
                  tm_cap=512, tn_cap=1024, tk_cap=512):
    """x2d: (M, K), w_t: (K, N), bias_row: (1, N)  ->  (M, N) in out_dtype."""
    M, K = x2d.shape
    _, N = w_t.shape
    tm = _pick_tile(M, tm_cap, 8)
    tn = _pick_tile(N, tn_cap, 128)
    tk = _pick_tile(K, tk_cap, 128)
    grid = (M // tm, N // tn, K // tk)
    bytes_accessed = (M * K * x2d.dtype.itemsize
                      + (M // tm) * K * N * w_t.dtype.itemsize
                      + M * N * jnp.dtype(out_dtype).itemsize)
    return pl.pallas_call(
        _matmul_bias_kernel,
        out_shape=jax.ShapeDtypeStruct((M, N), out_dtype),
        grid=grid,
        in_specs=[
            pl.BlockSpec((tm, tk), lambda i, j, k: (i, k)),
            pl.BlockSpec((tk, tn), lambda i, j, k: (k, j)),
            pl.BlockSpec((1, tn), lambda i, j, k: (0, j)),
        ],
        out_specs=pl.BlockSpec((tm, tn), lambda i, j, k: (i, j)),
        scratch_shapes=[pltpu.VMEM((tm, tn), jnp.float32)],
        compiler_params=pltpu.CompilerParams(
            dimension_semantics=("parallel", "parallel", "arbitrary"),
            vmem_limit_bytes=_VMEM_LIMIT),
        cost_estimate=pl.CostEstimate(
            flops=2 * M * N * K, transcendentals=0,
            bytes_accessed=int(bytes_accessed)),
    )(x2d, w_t, bias_row)


def pallas_attention_fused(proj, batch, seq, num_heads, dh, out_dtype, *,
                           tq_cap=512, tkv_cap=512):
    """Flash attention + fused sigmoid gating, reading heads directly from the
    fused projection buffer.

    proj: (batch*seq, 4*inner) laid out as [q*scale | k | v | gates] with heads
    contiguous inside each section.  Returns (batch*seq, inner)."""
    m = batch * seq
    inner = num_heads * dh
    tq = _pick_tile(seq, tq_cap, 8)
    tkv = _pick_tile(seq, tkv_cap, 8)
    nqb, nkb = seq // tq, seq // tkv
    grid = (batch, num_heads, nqb, nkb)
    kern = functools.partial(_flash_attn_kernel, kv_axis=3)

    isz = proj.dtype.itemsize
    bytes_accessed = (2 * m * inner * isz                      # q + gates (once)
                      + 2 * nqb * m * inner * isz              # k + v re-streamed
                      + m * inner * jnp.dtype(out_dtype).itemsize)

    return pl.pallas_call(
        kern,
        out_shape=jax.ShapeDtypeStruct((m, inner), out_dtype),
        grid=grid,
        in_specs=[
            # q  (column blocks 0 .. heads-1)
            pl.BlockSpec((tq, dh),
                         lambda bb, hh, qi, ki: (bb * nqb + qi, hh)),
            # k  (column blocks heads .. 2*heads-1)
            pl.BlockSpec((tkv, dh),
                         lambda bb, hh, qi, ki: (bb * nkb + ki, num_heads + hh)),
            # v  (column blocks 2*heads .. 3*heads-1)
            pl.BlockSpec((tkv, dh),
                         lambda bb, hh, qi, ki: (bb * nkb + ki, 2 * num_heads + hh)),
            # gates (column blocks 3*heads .. 4*heads-1); constant over ki -> fetched once
            pl.BlockSpec((tq, dh),
                         lambda bb, hh, qi, ki: (bb * nqb + qi, 3 * num_heads + hh)),
        ],
        out_specs=pl.BlockSpec((tq, dh),
                               lambda bb, hh, qi, ki: (bb * nqb + qi, hh)),
        scratch_shapes=[
            pltpu.VMEM((tq, 1), jnp.float32),    # running max
            pltpu.VMEM((tq, 1), jnp.float32),    # running denom
            pltpu.VMEM((tq, dh), jnp.float32),   # running numerator
        ],
        compiler_params=pltpu.CompilerParams(
            dimension_semantics=("parallel", "parallel", "parallel", "arbitrary"),
            vmem_limit_bytes=_VMEM_LIMIT),
        cost_estimate=pl.CostEstimate(
            flops=4 * batch * num_heads * seq * seq * dh,
            transcendentals=batch * num_heads * seq * seq,
            bytes_accessed=int(bytes_accessed)),
    )(proj, proj, proj, proj)


def pallas_attention_heads(qh, kh, vh, gh, out_dtype, *, tq_cap=512, tkv_cap=512):
    """Fallback for dim_head not a multiple of 128: head-split (B*H, S, Dh)
    layout so the lane dim equals the full array dim (satisfies the (8,128)
    BlockSpec rule).  Same kernel body via squeezed leading block dim."""
    BH, S, Dh = qh.shape
    tq = _pick_tile(S, tq_cap, 8)
    tkv = _pick_tile(S, tkv_cap, 8)
    grid = (BH, S // tq, S // tkv)
    kern = functools.partial(_flash_attn_kernel, kv_axis=2)
    return pl.pallas_call(
        kern,
        out_shape=jax.ShapeDtypeStruct((BH, S, Dh), out_dtype),
        grid=grid,
        in_specs=[
            pl.BlockSpec((pl.Squeezed(), tq, Dh), lambda bh, qi, ki: (bh, qi, 0)),
            pl.BlockSpec((pl.Squeezed(), tkv, Dh), lambda bh, qi, ki: (bh, ki, 0)),
            pl.BlockSpec((pl.Squeezed(), tkv, Dh), lambda bh, qi, ki: (bh, ki, 0)),
            pl.BlockSpec((pl.Squeezed(), tq, Dh), lambda bh, qi, ki: (bh, qi, 0)),
        ],
        out_specs=pl.BlockSpec((pl.Squeezed(), tq, Dh), lambda bh, qi, ki: (bh, qi, 0)),
        scratch_shapes=[
            pltpu.VMEM((tq, 1), jnp.float32),
            pltpu.VMEM((tq, 1), jnp.float32),
            pltpu.VMEM((tq, Dh), jnp.float32),
        ],
        compiler_params=pltpu.CompilerParams(
            dimension_semantics=("parallel", "parallel", "arbitrary"),
            vmem_limit_bytes=_VMEM_LIMIT),
    )(qh, kh, vh, gh)


# --------------------------------------------------------------------------- #
# Module
# --------------------------------------------------------------------------- #
class Attention:
    """Pallas port of the PyTorch Attention module (self-attention path)."""

    def __init__(self, dim, seq_len=None, heads=8, dim_head=64, dropout=0.0,
                 gating=True, key=None):
        del gating  # the PyTorch module always builds the gating Linear
        inner_dim = dim_head * heads
        self.dim = dim
        self.seq_len = seq_len
        self.heads = heads
        self.dim_head = dim_head
        self.scale = dim_head ** -0.5
        self.dropout = dropout  # TODO(synk): dropout>0 not implemented (test uses 0.0)

        if key is None:
            key = jax.random.PRNGKey(0)
        kq, kkv = jax.random.split(key)
        lim = 1.0 / math.sqrt(dim)  # nn.Linear default init for to_q / to_kv
        self.w_q = jax.random.uniform(kq, (inner_dim, dim), jnp.float32, -lim, lim)
        self.w_kv = jax.random.uniform(kkv, (2 * inner_dim, dim), jnp.float32, -lim, lim)
        # module-prescribed inits: gating (w=0, b=1), zero-initialized to_out
        self.w_gating = jnp.zeros((inner_dim, dim), jnp.float32)
        self.b_gating = jnp.ones((inner_dim,), jnp.float32)
        self.w_out = jnp.zeros((dim, inner_dim), jnp.float32)
        self.b_out = jnp.zeros((dim,), jnp.float32)
        self.refresh_weights()

    def refresh_weights(self):
        """Pack fused kernel weight buffers (call after modifying parameters)."""
        inner = self.heads * self.dim_head
        w_q_scaled = self.w_q * self.scale            # fold softmax scale into Wq
        w_k = self.w_kv[:inner]
        w_v = self.w_kv[inner:]
        w_cat = jnp.concatenate([w_q_scaled, w_k, w_v, self.w_gating], axis=0)
        self._w_cat_t = w_cat.T.astype(jnp.bfloat16)                    # (dim, 4*inner)
        self._b_cat = jnp.concatenate(
            [jnp.zeros((3 * inner,), jnp.float32),
             self.b_gating.astype(jnp.float32)]).reshape(1, -1)         # (1, 4*inner)
        self._w_out_t = self.w_out.T.astype(jnp.bfloat16)               # (inner, dim)
        self._b_out = self.b_out.astype(jnp.float32).reshape(1, -1)     # (1, dim)

    def __call__(self, x, mask=None, attn_bias=None, context=None,
                 context_mask=None, tie_dim=None):
        # TODO(synk): mask / attn_bias / context / context_mask / tie_dim branches
        assert mask is None and attn_bias is None and context is None
        assert context_mask is None and tie_dim is None

        b, n, dim = x.shape
        h, dh = self.heads, self.dim_head
        inner = h * dh
        m = b * n
        x2d = x.reshape(m, dim)

        # ---- fused input projections: [q*scale | k | v | gates], one MXU pass --
        proj = pallas_linear(x2d, self._w_cat_t, self._b_cat,
                             out_dtype=jnp.bfloat16)                 # (m, 4*inner)

        # ---- flash attention + fused sigmoid gating --------------------------
        if dh % 128 == 0 and n % 8 == 0:
            # heads are indexed straight out of `proj` by the BlockSpecs;
            # no XLA-side head split/merge transposes.
            out2d = pallas_attention_fused(proj, b, n, h, dh,
                                           out_dtype=jnp.bfloat16)   # (m, inner)
        else:
            # fallback for non-lane-aligned dim_head (e.g. default 64)
            def to_heads(t):  # (m, inner) -> (b*h, n, dh)
                return t.reshape(b, n, h, dh).transpose(0, 2, 1, 3).reshape(b * h, n, dh)
            q = proj[:, :inner]
            k = proj[:, inner:2 * inner]
            v = proj[:, 2 * inner:3 * inner]
            g = proj[:, 3 * inner:]
            oh = pallas_attention_heads(to_heads(q), to_heads(k), to_heads(v),
                                        to_heads(g), out_dtype=jnp.bfloat16)
            out2d = oh.reshape(b, h, n, dh).transpose(0, 2, 1, 3).reshape(m, inner)

        # ---- output projection: (gated out) @ Wout^T + bout -------------------
        out = pallas_linear(out2d, self._w_out_t, self._b_out, out_dtype=x.dtype)
        return out.reshape(b, n, dim)


# --------------------------------------------------------------------------- #
# Pure-numpy reference (reproduces the PyTorch forward with mask/bias=None)
# --------------------------------------------------------------------------- #
def _reference(x, w_q, w_kv, w_g, b_g, w_o, b_o, heads, dim_head, scale):
    b, n, _ = x.shape
    inner = heads * dim_head
    q = x @ w_q.T
    kv = x @ w_kv.T
    k, v = kv[..., :inner], kv[..., inner:]

    def split_heads(t):
        return t.reshape(b, n, heads, dim_head).transpose(0, 2, 1, 3)

    q, k, v = map(split_heads, (q, k, v))
    dots = np.einsum('bhid,bhjd->bhij', q * scale, k)
    dots = dots - dots.max(axis=-1, keepdims=True)
    attn = np.exp(dots)
    attn = attn / attn.sum(axis=-1, keepdims=True)
    out = np.einsum('bhij,bhjd->bhid', attn, v)
    out = out.transpose(0, 2, 1, 3).reshape(b, n, inner)
    gates = x @ w_g.T + b_g
    out = out * (1.0 / (1.0 + np.exp(-gates)))
    return out @ w_o.T + b_o


if __name__ == "__main__":
    key = jax.random.PRNGKey(0)
    batch, seq, dim = 2, 128, 128
    heads, dim_head = 2, 128          # lane-dense per-head width (multiple of 128)
    inner = heads * dim_head

    k_x, k_mod, k_w = jax.random.split(key, 3)
    x = jax.random.normal(k_x, (batch, seq, dim), dtype=jnp.float32)

    attn = Attention(dim, heads=heads, dim_head=dim_head, key=k_mod)

    # 1) Faithful default init: to_out is zero-initialized -> output must be 0.
    out0 = jax.block_until_ready(attn(x))
    assert out0.shape == (batch, seq, dim) and out0.dtype == jnp.float32
    np.testing.assert_allclose(np.asarray(out0), 0.0, atol=1e-6)

    # 2) Load non-trivial gating / output weights (as if trained) and compare the
    #    full forward against the numpy reference.
    kg_w, kg_b, ko_w, ko_b = jax.random.split(k_w, 4)
    attn.w_gating = 0.05 * jax.random.normal(kg_w, (inner, dim), jnp.float32)
    attn.b_gating = 0.05 * jax.random.normal(kg_b, (inner,), jnp.float32)
    attn.w_out = 0.05 * jax.random.normal(ko_w, (dim, inner), jnp.float32)
    attn.b_out = 0.05 * jax.random.normal(ko_b, (dim,), jnp.float32)
    attn.refresh_weights()   # re-pack fused weight buffers after editing params

    out = jax.block_until_ready(attn(x))
    ref = _reference(np.asarray(x),
                     np.asarray(attn.w_q), np.asarray(attn.w_kv),
                     np.asarray(attn.w_gating), np.asarray(attn.b_gating),
                     np.asarray(attn.w_out), np.asarray(attn.b_out),
                     heads, dim_head, attn.scale)
    # Tolerance allows for bf16 MXU operands (f32 accumulation) on TPU.
    np.testing.assert_allclose(np.asarray(out), ref, rtol=2e-2, atol=2e-2)

    print("KERNEL_OK")
</pallas_src>

<mosaic_0001>
module attributes {stable_mosaic.version = 11 : i64} {
  func.func @_matmul_bias_kernel(%arg0: i32, %arg1: i32, %arg2: i32, %arg3: memref<256x128xf32, #tpu.memory_space<vmem>>, %arg4: memref<128x1024xbf16, #tpu.memory_space<vmem>>, %arg5: memref<1x1024xf32, #tpu.memory_space<vmem>>, %arg6: memref<256x1024xbf16, #tpu.memory_space<vmem>>, %arg7: memref<256x1024xf32, #tpu.memory_space<vmem>>) attributes {dimension_semantics = [#tpu.dimension_semantics<parallel>, #tpu.dimension_semantics<parallel>, #tpu.dimension_semantics<arbitrary>], iteration_bounds = array<i64: 1, 1, 1>, scalar_prefetch = 0 : i64, scratch_operands = 1 : i64, tpu.core_type = #tpu.core_type<tc>, window_params = [{transform_indices = @transform_0, window_bounds = array<i64: 256, 128>}, {transform_indices = @transform_1, window_bounds = array<i64: 128, 1024>}, {transform_indices = @transform_2, window_bounds = array<i64: 1, 1024>}, {transform_indices = @transform_3, window_bounds = array<i64: 256, 1024>}]} {
    %c0_i32 = arith.constant 0 : i32
    %0 = arith.cmpi eq, %arg2, %c0_i32 : i32
    %1 = arith.extui %0 : i1 to i32
    %c0_i32_0 = arith.constant 0 : i32
    %2 = arith.cmpi ne, %1, %c0_i32_0 : i32
    scf.if %2 {
      %cst_10 = arith.constant 0.000000e+00 : f32
      %13 = vector.broadcast %cst_10 : f32 to vector<256x1024xf32>
      %c0_11 = arith.constant 0 : index
      %c0_12 = arith.constant 0 : index
      %14 = vector.load %arg7[%c0_11, %c0_12] : memref<256x1024xf32, #tpu.memory_space<vmem>>, vector<256x1024xf32>
      tpu.vector_store %arg7[%c0_11, %c0_12], %13 {strides = array<i32>} : memref<256x1024xf32, #tpu.memory_space<vmem>>, vector<256x1024xf32>,
    } else {
    }
    %c0 = arith.constant 0 : index
    %c0_1 = arith.constant 0 : index
    %3 = vector.load %arg7[%c0, %c0_1] : memref<256x1024xf32, #tpu.memory_space<vmem>>, vector<256x1024xf32>
    %c0_2 = arith.constant 0 : index
    %c0_3 = arith.constant 0 : index
    %4 = vector.load %arg3[%c0_2, %c0_3] : memref<256x128xf32, #tpu.memory_space<vmem>>, vector<256x128xf32>
    %5 = arith.truncf %4 : vector<256x128xf32> to vector<256x128xbf16>
    %c0_4 = arith.constant 0 : index
    %c0_5 = arith.constant 0 : index
    %6 = vector.load %arg4[%c0_4, %c0_5] : memref<128x1024xbf16, #tpu.memory_space<vmem>>, vector<128x1024xbf16>
    %cst = arith.constant dense<0.000000e+00> : vector<256x1024xf32>
    %7 = tpu.matmul %5, %6, %cst {dimension_numbers = #tpu.dot_dimension_numbers<[1], [0], [0], [1], [0, 0, 1, 1], [], []>} : vector<256x128xbf16>, vector<128x1024xbf16>, vector<256x1024xf32> -> vector<256x1024xf32>
    %8 = arith.addf %3, %7 : vector<256x1024xf32>
    %c0_6 = arith.constant 0 : index
    %c0_7 = arith.constant 0 : index
    %9 = vector.load %arg7[%c0_6, %c0_7] : memref<256x1024xf32, #tpu.memory_space<vmem>>, vector<256x1024xf32>
    tpu.vector_store %arg7[%c0_6, %c0_7], %8 {strides = array<i32>} : memref<256x1024xf32, #tpu.memory_space<vmem>>, vector<256x1024xf32>,
    %c0_i32_8 = arith.constant 0 : i32
    %10 = arith.cmpi eq, %arg2, %c0_i32_8 : i32
    %11 = arith.extui %10 : i1 to i32
    %c0_i32_9 = arith.constant 0 : i32
    %12 = arith.cmpi ne, %11, %c0_i32_9 : i32
    scf.if %12 {
      %c0_10 = arith.constant 0 : index
      %c0_11 = arith.constant 0 : index
      %13 = vector.load %arg7[%c0_10, %c0_11] : memref<256x1024xf32, #tpu.memory_space<vmem>>, vector<256x1024xf32>
      %c0_12 = arith.constant 0 : index
      %c0_13 = arith.constant 0 : index
      %14 = vector.load %arg5[%c0_12, %c0_13] : memref<1x1024xf32, #tpu.memory_space<vmem>>, vector<1x1024xf32>
      %15 = vector.broadcast %14 : vector<1x1024xf32> to vector<256x1024xf32>
      %16 = arith.addf %13, %15 : vector<256x1024xf32>
      %17 = arith.truncf %16 : vector<256x1024xf32> to vector<256x1024xbf16>
      %c0_14 = arith.constant 0 : index
      %c0_15 = arith.constant 0 : index
      %18 = vector.load %arg6[%c0_14, %c0_15] : memref<256x1024xbf16, #tpu.memory_space<vmem>>, vector<256x1024xbf16>
      tpu.vector_store %arg6[%c0_14, %c0_15], %17 {strides = array<i32>} : memref<256x1024xbf16, #tpu.memory_space<vmem>>, vector<256x1024xbf16>,
    } else {
    }
    return
  }
  func.func @transform_0(%arg0: i32, %arg1: i32, %arg2: i32) -> (i32, i32) {
    %c0_i32 = arith.constant 0 : i32
    return %arg0, %arg2 : i32, i32
  }
  func.func @transform_1(%arg0: i32, %arg1: i32, %arg2: i32) -> (i32, i32) {
    %c0_i32 = arith.constant 0 : i32
    return %arg2, %arg1 : i32, i32
  }
  func.func @transform_2(%arg0: i32, %arg1: i32, %arg2: i32) -> (i32, i32) {
    %c0_i32 = arith.constant 0 : i32
    %c0_i32_0 = arith.constant 0 : i32
    return %c0_i32, %arg1 : i32, i32
  }
  func.func @transform_3(%arg0: i32, %arg1: i32, %arg2: i32) -> (i32, i32) {
    %c0_i32 = arith.constant 0 : i32
    return %arg0, %arg1 : i32, i32
  }
}

</mosaic_0001>

<llo_original>
// kernel: tpu_custom_call.1
$region0: #{tpu_custom_call.1}
  #allocation0 [shape = 'u32[]', space=smem, size = 0x4, offset = 0x4, fixed_abs, tag = 'smem constant byte address 0x4 - core index']
  #allocation1 [shape = 'u32[72,128]{1,0:T(1,128)}', space=vmem, size = 0x9000, scoped, tag = 'internal scratch']
  #allocation2 [shape = 'f32[256,1024]{1,0:T(8,128)}', space=vmem, size = 0x100000, scoped, tag = 'scratch operand']
  %s0 = inlined_call_operand.hbm [shape: f32[256,128], index: 0, kind: input, shape index: {}]
  %s1 = inlined_call_operand.hbm [shape: bf16[128,1024], index: 1, kind: input, shape index: {}]
  %s2 = inlined_call_operand.hbm [shape: f32[1,1024], index: 2, kind: input, shape index: {}]
  %s3 = inlined_call_operand.hbm [shape: bf16[256,1024], index: 3, kind: output, shape index: {}]
  %s4 = sld [smem:[#allocation0]]
  $region42: #{tpu_custom_call.1} parent=0
    _
  %s6 = ssub.s32 1, %s4
  %s7 = scalar_select 0, %s6, %s4
  $region1: #{tpu_custom_call.1} parent=0
    #allocation3 [shape = 'u8[131072]{0}', space=vmem, size = 0x20000, scoped, tag = 'input window, operand 0, single buffered']
    #allocation4 [shape = 's32[1]{0}', space=sflag, size = 0x4, scoped, tag = 'scoped memory for tpu_custom_call.1']
    #allocation5 [shape = 's32[1]{0}', space=sflag, size = 0x4, scoped, tag = 'scoped memory for tpu_custom_call.1']
    #allocation6 [shape = 'u8[262144]{0}', space=vmem, size = 0x40000, scoped, tag = 'input window, operand 1, single buffered']
    #allocation7 [shape = 's32[1]{0}', space=sflag, size = 0x4, scoped, tag = 'scoped memory for tpu_custom_call.1']
    #allocation8 [shape = 'u8[4096]{0}', space=vmem, size = 0x1000, scoped, tag = 'input window, operand 2, single buffered']
    #allocation9 [shape = 'u8[524288]{0}', space=vmem, size = 0x80000, scoped, tag = 'output window, operand 0, single buffered']
    %8 = vsyncpa [#allocation4], 0
    %9 = vsyncpa [#allocation7], 0
    %10 = vsyncpa [#allocation5], 0
    // Predicated region
    $region2: #{tpu_custom_call.1} parent=1 // pred_check
      _
    $region3: #{tpu_custom_call.1} parent=1 // pred_check_branch
      %12 = sbr.rel (0) target = $region5
    $region4: #{tpu_custom_call.1} parent=1 // pred_region
      %14 = vsyncadd [#allocation4], 0
      %s15 = sshll.u32 %s0, 4
      %s16 = int_to_ptr.hbm [resolvable:$true] %s15
      %s17 = sshll.u32 [#allocation3], 4
      %s18 = int_to_ptr.vmem [resolvable:$true] %s17
      %23 = dma.hbm_to_vmem [thread:$0]  %s16, 4096, %s18, [#allocation4], 128, 128, 8
    $region5: #{tpu_custom_call.1} parent=1 // pred_fallthru
      _
    // Predicated region
    $region6: #{tpu_custom_call.1} parent=1 // pred_check
      _
    $region7: #{tpu_custom_call.1} parent=1 // pred_check_branch
      %25 = sbr.rel (0) target = $region9
    $region8: #{tpu_custom_call.1} parent=1 // pred_region
      %27 = vsyncadd [#allocation7], 0
      %s28 = sshll.u32 %s1, 4
      %s29 = int_to_ptr.hbm [resolvable:$true] %s28
      %s30 = sshll.u32 [#allocation6], 4
      %s31 = int_to_ptr.vmem [resolvable:$true] %s30
      %36 = dma.hbm_to_vmem [thread:$0]  %s29, 8192, %s31, [#allocation7], 512, 512, 32
    $region9: #{tpu_custom_call.1} parent=1 // pred_fallthru
      _
    // Predicated region
    $region10: #{tpu_custom_call.1} parent=1 // pred_check
      _
    $region11: #{tpu_custom_call.1} parent=1 // pred_check_branch
      %38 = sbr.rel (0) target = $region13
    $region12: #{tpu_custom_call.1} parent=1 // pred_region
      %40 = vsyncadd [#allocation7], 0
      %s42 = sshll.u32 %s2, 4
      %s43 = int_to_ptr.hbm [resolvable:$true] %s42
      %s44 = sshll.u32 [#allocation8], 4
      %s45 = int_to_ptr.vmem [resolvable:$true] %s44
      %47 = dma.hbm_to_vmem [thread:$0]  %s43, 128, %s45, [#allocation7]
    $region13: #{tpu_custom_call.1} parent=1 // pred_fallthru
      _
    // Predicated region
    $region14: #{tpu_custom_call.1} parent=1 // pred_check
      _
    $region15: #{tpu_custom_call.1} parent=1 // pred_check_branch
      %49 = sbr.rel (0) target = $region17
    $region16: #{tpu_custom_call.1} parent=1 // pred_region
      %51 = dma.done [#allocation4], 4096
    $region17: #{tpu_custom_call.1} parent=1 // pred_fallthru
      _
    // Predicated region
    $region18: #{tpu_custom_call.1} parent=1 // pred_check
      _
    $region19: #{tpu_custom_call.1} parent=1 // pred_check_branch
      %53 = sbr.rel (0) target = $region21
    $region20: #{tpu_custom_call.1} parent=1 // pred_region
      %55 = dma.done [#allocation7], 8192
    $region21: #{tpu_custom_call.1} parent=1 // pred_fallthru
      _
    // Predicated region
    $region22: #{tpu_custom_call.1} parent=1 // pred_check
      _
    $region23: #{tpu_custom_call.1} parent=1 // pred_check_branch
      %57 = sbr.rel (0) target = $region25
    $region24: #{tpu_custom_call.1} parent=1 // pred_region
      %59 = dma.done [#allocation7], 128
    $region25: #{tpu_custom_call.1} parent=1 // pred_fallthru
      _
    %p60 = scmp.eq.s32.totalorder 0, 0
    // Predicated region
    $region26: #{tpu_custom_call.1} parent=1 // pred_check
      %p61 = pneg %p60
    $region27: #{tpu_custom_call.1} parent=1 // pred_check_branch
      %63 = sbr.rel (%p61) target = $region29
    $region28: #{tpu_custom_call.1} parent=1 // pred_region
      %64 = vst [vmem:[#allocation2] sm:$0xff] 0.0
      %65 = vst [vmem:[#allocation2 + $0x8] sm:$0xff] 0.0
      %66 = vst [vmem:[#allocation2 + $0x10] sm:$0xff] 0.0
      %67 = vst [vmem:[#allocation2 + $0x18] sm:$0xff] 0.0
      %68 = vst [vmem:[#allocation2 + $0x20] sm:$0xff] 0.0
      %69 = vst [vmem:[#allocation2 + $0x28] sm:$0xff] 0.0
      %70 = vst [vmem:[#allocation2 + $0x30] sm:$0xff] 0.0
      %71 = vst [vmem:[#allocation2 + $0x38] sm:$0xff] 0.0
      %72 = vst [vmem:[#allocation2 + $0x40] sm:$0xff] 0.0
      %73 = vst [vmem:[#allocation2 + $0x48] sm:$0xff] 0.0
      %74 = vst [vmem:[#allocation2 + $0x50] sm:$0xff] 0.0
      %75 = vst [vmem:[#allocation2 + $0x58] sm:$0xff] 0.0
      %76 = vst [vmem:[#allocation2 + $0x60] sm:$0xff] 0.0
      %77 = vst [vmem:[#allocation2 + $0x68] sm:$0xff] 0.0
      %78 = vst [vmem:[#allocation2 + $0x70] sm:$0xff] 0.0
      %79 = vst [vmem:[#allocation2 + $0x78] sm:$0xff] 0.0
      %80 = vst [vmem:[#allocation2 + $0x80] sm:$0xff] 0.0
      %81 = vst [vmem:[#allocation2 + $0x88] sm:$0xff] 0.0
      %82 = vst [vmem:[#allocation2 + $0x90] sm:$0xff] 0.0
      %83 = vst [vmem:[#allocation2 + $0x98] sm:$0xff] 0.0
      %84 = vst [vmem:[#allocation2 + $0xa0] sm:$0xff] 0.0
      %85 = vst [vmem:[#allocation2 + $0xa8] sm:$0xff] 0.0
      %86 = vst [vmem:[#allocation2 + $0xb0] sm:$0xff] 0.0
      %87 = vst [vmem:[#allocation2 + $0xb8] sm:$0xff] 0.0
      %88 = vst [vmem:[#allocation2 + $0xc0] sm:$0xff] 0.0
      %89 = vst [vmem:[#allocation2 + $0xc8] sm:$0xff] 0.0
      %90 = vst [vmem:[#allocation2 + $0xd0] sm:$0xff] 0.0
      %91 = vst [vmem:[#allocation2 + $0xd8] sm:$0xff] 0.0
      %92 = vst [vmem:[#allocation2 + $0xe0] sm:$0xff] 0.0
      %93 = vst [vmem:[#allocation2 + $0xe8] sm:$0xff] 0.0
      %94 = vst [vmem:[#allocation2 + $0xf0] sm:$0xff] 0.0
      %95 = vst [vmem:[#allocation2 + $0xf8] sm:$0xff] 0.0
      %96 = vst [vmem:[#allocation2 + $0x100] sm:$0xff] 0.0
      %97 = vst [vmem:[#allocation2 + $0x108] sm:$0xff] 0.0
      %98 = vst [vmem:[#allocation2 + $0x110] sm:$0xff] 0.0
      %99 = vst [vmem:[#allocation2 + $0x118] sm:$0xff] 0.0
      %100 = vst [vmem:[#allocation2 + $0x120] sm:$0xff] 0.0
      %101 = vst [vmem:[#allocation2 + $0x128] sm:$0xff] 0.0
      %102 = vst [vmem:[#allocation2 + $0x130] sm:$0xff] 0.0
      %103 = vst [vmem:[#allocation2 + $0x138] sm:$0xff] 0.0
      %104 = vst [vmem:[#allocation2 + $0x140] sm:$0xff] 0.0
      %105 = vst [vmem:[#allocation2 + $0x148] sm:$0xff] 0.0
      %106 = vst [vmem:[#allocation2 + $0x150] sm:$0xff] 0.0
      %107 = vst [vmem:[#allocation2 + $0x158] sm:$0xff] 0.0
      %108 = vst [vmem:[#allocation2 + $0x160] sm:$0xff] 0.0
      %109 = vst [vmem:[#allocation2 + $0x168] sm:$0xff] 0.0
      %110 = vst [vmem:[#allocation2 + $0x170] sm:$0xff] 0.0
      %111 = vst [vmem:[#allocation2 + $0x178] sm:$0xff] 0.0
      %112 = vst [vmem:[#allocation2 + $0x180] sm:$0xff] 0.0
      %113 = vst [vmem:[#allocation2 + $0x188] sm:$0xff] 0.0
      %114 = vst [vmem:[#allocation2 + $0x190] sm:$0xff] 0.0
      %115 = vst [vmem:[#allocation2 + $0x198] sm:$0xff] 0.0
      %116 = vst [vmem:[#allocation2 + $0x1a0] sm:$0xff] 0.0
      %117 = vst [vmem:[#allocation2 + $0x1a8] sm:$0xff] 0.0
      %118 = vst [vmem:[#allocation2 + $0x1b0] sm:$0xff] 0.0
      %119 = vst [vmem:[#allocation2 + $0x1b8] sm:$0xff] 0.0
      %120 = vst [vmem:[#allocation2 + $0x1c0] sm:$0xff] 0.0
      %121 = vst [vmem:[#allocation2 + $0x1c8] sm:$0xff] 0.0
      %122 = vst [vmem:[#allocation2 + $0x1d0] sm:$0xff] 0.0
      %123 = vst [vmem:[#allocation2 + $0x1d8] sm:$0xff] 0.0
      %124 = vst [vmem:[#allocation2 + $0x1e0] sm:$0xff] 0.0
      %125 = vst [vmem:[#allocation2 + $0x1e8] sm:$0xff] 0.0
      %126 = vst [vmem:[#allocation2 + $0x1f0] sm:$0xff] 0.0
      %127 = vst [vmem:[#allocation2 + $0x1f8] sm:$0xff] 0.0
      %128 = vst [vmem:[#allocation2 + $0x200] sm:$0xff] 0.0
      %129 = vst [vmem:[#allocation2 + $0x208] sm:$0xff] 0.0
      %130 = vst [vmem:[#allocation2 + $0x210] sm:$0xff] 0.0
      %131 = vst [vmem:[#allocation2 + $0x218] sm:$0xff] 0.0
      %132 = vst [vmem:[#allocation2 + $0x220] sm:$0xff] 0.0
      %133 = vst [vmem:[#allocation2 + $0x228] sm:$0xff] 0.0
      %134 = vst [vmem:[#allocation2 + $0x230] sm:$0xff] 0.0
      %135 = vst [vmem:[#allocation2 + $0x238] sm:$0xff] 0.0
      %136 = vst [vmem:[#allocation2 + $0x240] sm:$0xff] 0.0
      %137 = vst [vmem:[#allocation2 + $0x248] sm:$0xff] 0.0
      %138 = vst [vmem:[#allocation2 + $0x250] sm:$0xff] 0.0
      %139 = vst [vmem:[#allocation2 + $0x258] sm:$0xff] 0.0
      %140 = vst [vmem:[#allocation2 + $0x260] sm:$0xff] 0.0
      %141 = vst [vmem:[#allocation2 + $0x268] sm:$0xff] 0.0
      %142 = vst [vmem:[#allocation2 + $0x270] sm:$0xff] 0.0
      %143 = vst [vmem:[#allocation2 + $0x278] sm:$0xff] 0.0
      %144 = vst [vmem:[#allocation2 + $0x280] sm:$0xff] 0.0
      %145 = vst [vmem:[#allocation2 + $0x288] sm:$0xff] 0.0
      %146 = vst [vmem:[#allocation2 + $0x290] sm:$0xff] 0.0
      %147 = vst [vmem:[#allocation2 + $0x298] sm:$0xff] 0.0
      %148 = vst [vmem:[#allocation2 + $0x2a0] sm:$0xff] 0.0
      %149 = vst [vmem:[#allocation2 + $0x2a8] sm:$0xff] 0.0
      %150 = vst [vmem:[#allocation2 + $0x2b0] sm:$0xff] 0.0
      %151 = vst [vmem:[#allocation2 + $0x2b8] sm:$0xff] 0.0
      %152 = vst [vmem:[#allocation2 + $0x2c0] sm:$0xff] 0.0
      %153 = vst [vmem:[#allocation2 + $0x2c8] sm:$0xff] 0.0
      %154 = vst [vmem:[#allocation2 + $0x2d0] sm:$0xff] 0.0
      %155 = vst [vmem:[#allocation2 + $0x2d8] sm:$0xff] 0.0
      %156 = vst [vmem:[#allocation2 + $0x2e0] sm:$0xff] 0.0
      %157 = vst [vmem:[#allocation2 + $0x2e8] sm:$0xff] 0.0
      %158 = vst [vmem:[#allocation2 + $0x2f0] sm:$0xff] 0.0
      %159 = vst [vmem:[#allocation2 + $0x2f8] sm:$0xff] 0.0
      %160 = vst [vmem:[#allocation2 + $0x300] sm:$0xff] 0.0
      %161 = vst [vmem:[#allocation2 + $0x308] sm:$0xff] 0.0
      %162 = vst [vmem:[#allocation2 + $0x310] sm:$0xff] 0.0
      %163 = vst [vmem:[#allocation2 + $0x318] sm:$0xff] 0.0
      %164 = vst [vmem:[#allocation2 + $0x320] sm:$0xff] 0.0
      %165 = vst [vmem:[#allocation2 + $0x328] sm:$0xff] 0.0
      %166 = vst [vmem:[#allocation2 + $0x330] sm:$0xff] 0.0
      %167 = vst [vmem:[#allocation2 + $0x338] sm:$0xff] 0.0
      %168 = vst [vmem:[#allocation2 + $0x340] sm:$0xff] 0.0
      %169 = vst [vmem:[#allocation2 + $0x348] sm:$0xff] 0.0
      %170 = vst [vmem:[#allocation2 + $0x350] sm:$0xff] 0.0
      %171 = vst [vmem:[#allocation2 + $0x358] sm:$0xff] 0.0
      %172 = vst [vmem:[#allocation2 + $0x360] sm:$0xff] 0.0
      %173 = vst [vmem:[#allocation2 + $0x368] sm:$0xff] 0.0
      %174 = vst [vmem:[#allocation2 + $0x370] sm:$0xff] 0.0
      %175 = vst [vmem:[#allocation2 + $0x378] sm:$0xff] 0.0
      %176 = vst [vmem:[#allocation2 + $0x380] sm:$0xff] 0.0
      %177 = vst [vmem:[#allocation2 + $0x388] sm:$0xff] 0.0
      %178 = vst [vmem:[#allocation2 + $0x390] sm:$0xff] 0.0
      %179 = vst [vmem:[#allocation2 + $0x398] sm:$0xff] 0.0
      %180 = vst [vmem:[#allocation2 + $0x3a0] sm:$0xff] 0.0
      %181 = vst [vmem:[#allocation2 + $0x3a8] sm:$0xff] 0.0
      %182 = vst [vmem:[#allocation2 + $0x3b0] sm:$0xff] 0.0
      %183 = vst [vmem:[#allocation2 + $0x3b8] sm:$0xff] 0.0
      %184 = vst [vmem:[#allocation2 + $0x3c0] sm:$0xff] 0.0
      %185 = vst [vmem:[#allocation2 + $0x3c8] sm:$0xff] 0.0
      %186 = vst [vmem:[#allocation2 + $0x3d0] sm:$0xff] 0.0
      %187 = vst [vmem:[#allocation2 + $0x3d8] sm:$0xff] 0.0
      %188 = vst [vmem:[#allocation2 + $0x3e0] sm:$0xff] 0.0
      %189 = vst [vmem:[#allocation2 + $0x3e8] sm:$0xff] 0.0
      %190 = vst [vmem:[#allocation2 + $0x3f0] sm:$0xff] 0.0
      %191 = vst [vmem:[#allocation2 + $0x3f8] sm:$0xff] 0.0
      %192 = vst [vmem:[#allocation2 + $0x400] sm:$0xff] 0.0
      %193 = vst [vmem:[#allocation2 + $0x408] sm:$0xff] 0.0
      %194 = vst [vmem:[#allocation2 + $0x410] sm:$0xff] 0.0
      %195 = vst [vmem:[#allocation2 + $0x418] sm:$0xff] 0.0
      %196 = vst [vmem:[#allocation2 + $0x420] sm:$0xff] 0.0
      %197 = vst [vmem:[#allocation2 + $0x428] sm:$0xff] 0.0
      %198 = vst [vmem:[#allocation2 + $0x430] sm:$0xff] 0.0
      %199 = vst [vmem:[#allocation2 + $0x438] sm:$0xff] 0.0
      %200 = vst [vmem:[#allocation2 + $0x440] sm:$0xff] 0.0
      %201 = vst [vmem:[#allocation2 + $0x448] sm:$0xff] 0.0
      %202 = vst [vmem:[#allocation2 + $0x450] sm:$0xff] 0.0
      %203 = vst [vmem:[#allocation2 + $0x458] sm:$0xff] 0.0
      %204 = vst [vmem:[#allocation2 + $0x460] sm:$0xff] 0.0
      %205 = vst [vmem:[#allocation2 + $0x468] sm:$0xff] 0.0
      %206 = vst [vmem:[#allocation2 + $0x470] sm:$0xff] 0.0
      %207 = vst [vmem:[#allocation2 + $0x478] sm:$0xff] 0.0
      %208 = vst [vmem:[#allocation2 + $0x480] sm:$0xff] 0.0
      %209 = vst [vmem:[#allocation2 + $0x488] sm:$0xff] 0.0
      %210 = vst [vmem:[#allocation2 + $0x490] sm:$0xff] 0.0
      %211 = vst [vmem:[#allocation2 + $0x498] sm:$0xff] 0.0
      %212 = vst [vmem:[#allocation2 + $0x4a0] sm:$0xff] 0.0
      %213 = vst [vmem:[#allocation2 + $0x4a8] sm:$0xff] 0.0
      %214 = vst [vmem:[#allocation2 + $0x4b0] sm:$0xff] 0.0
      %215 = vst [vmem:[#allocation2 + $0x4b8] sm:$0xff] 0.0
      %216 = vst [vmem:[#allocation2 + $0x4c0] sm:$0xff] 0.0
      %217 = vst [vmem:[#allocation2 + $0x4c8] sm:$0xff] 0.0
      %218 = vst [vmem:[#allocation2 + $0x4d0] sm:$0xff] 0.0
      %219 = vst [vmem:[#allocation2 + $0x4d8] sm:$0xff] 0.0
      %220 = vst [vmem:[#allocation2 + $0x4e0] sm:$0xff] 0.0
      %221 = vst [vmem:[#allocation2 + $0x4e8] sm:$0xff] 0.0
      %222 = vst [vmem:[#allocation2 + $0x4f0] sm:$0xff] 0.0
      %223 = vst [vmem:[#allocation2 + $0x4f8] sm:$0xff] 0.0
      %224 = vst [vmem:[#allocation2 + $0x500] sm:$0xff] 0.0
      %225 = vst [vmem:[#allocation2 + $0x508] sm:$0xff] 0.0
      %226 = vst [vmem:[#allocation2 + $0x510] sm:$0xff] 0.0
      %227 = vst [vmem:[#allocation2 + $0x518] sm:$0xff] 0.0
      %228 = vst [vmem:[#allocation2 + $0x520] sm:$0xff] 0.0
      %229 = vst [vmem:[#allocation2 + $0x528] sm:$0xff] 0.0
      %230 = vst [vmem:[#allocation2 + $0x530] sm:$0xff] 0.0
      %231 = vst [vmem:[#allocation2 + $0x538] sm:$0xff] 0.0
      %232 = vst [vmem:[#allocation2 + $0x540] sm:$0xff] 0.0
      %233 = vst [vmem:[#allocation2 + $0x548] sm:$0xff] 0.0
      %234 = vst [vmem:[#allocation2 + $0x550] sm:$0xff] 0.0
      %235 = vst [vmem:[#allocation2 + $0x558] sm:$0xff] 0.0
      %236 = vst [vmem:[#allocation2 + $0x560] sm:$0xff] 0.0
      %237 = vst [vmem:[#allocation2 + $0x568] sm:$0xff] 0.0
      %238 = vst [vmem:[#allocation2 + $0x570] sm:$0xff] 0.0
      %239 = vst [vmem:[#allocation2 + $0x578] sm:$0xff] 0.0
      %240 = vst [vmem:[#allocation2 + $0x580] sm:$0xff] 0.0
      %241 = vst [vmem:[#allocation2 + $0x588] sm:$0xff] 0.0
      %242 = vst [vmem:[#allocation2 + $0x590] sm:$0xff] 0.0
      %243 = vst [vmem:[#allocation2 + $0x598] sm:$0xff] 0.0
      %244 = vst [vmem:[#allocation2 + $0x5a0] sm:$0xff] 0.0
      %245 = vst [vmem:[#allocation2 + $0x5a8] sm:$0xff] 0.0
      %246 = vst [vmem:[#allocation2 + $0x5b0] sm:$0xff] 0.0
      %247 = vst [vmem:[#allocation2 + $0x5b8] sm:$0xff] 0.0
      %248 = vst [vmem:[#allocation2 + $0x5c0] sm:$0xff] 0.0
      %249 = vst [vmem:[#allocation2 + $0x5c8] sm:$0xff] 0.0
      %250 = vst [vmem:[#allocation2 + $0x5d0] sm:$0xff] 0.0
      %251 = vst [vmem:[#allocation2 + $0x5d8] sm:$0xff] 0.0
      %252 = vst [vmem:[#allocation2 + $0x5e0] sm:$0xff] 0.0
      %253 = vst [vmem:[#allocation2 + $0x5e8] sm:$0xff] 0.0
      %254 = vst [vmem:[#allocation2 + $0x5f0] sm:$0xff] 0.0
      %255 = vst [vmem:[#allocation2 + $0x5f8] sm:$0xff] 0.0
      %256 = vst [vmem:[#allocation2 + $0x600] sm:$0xff] 0.0
      %257 = vst [vmem:[#allocation2 + $0x608] sm:$0xff] 0.0
      %258 = vst [vmem:[#allocation2 + $0x610] sm:$0xff] 0.0
      %259 = vst [vmem:[#allocation2 + $0x618] sm:$0xff] 0.0
      %260 = vst [vmem:[#allocation2 + $0x620] sm:$0xff] 0.0
      %261 = vst [vmem:[#allocation2 + $0x628] sm:$0xff] 0.0
      %262 = vst [vmem:[#allocation2 + $0x630] sm:$0xff] 0.0
      %263 = vst [vmem:[#allocation2 + $0x638] sm:$0xff] 0.0
      %264 = vst [vmem:[#allocation2 + $0x640] sm:$0xff] 0.0
      %265 = vst [vmem:[#allocation2 + $0x648] sm:$0xff] 0.0
      %266 = vst [vmem:[#allocation2 + $0x650] sm:$0xff] 0.0
      %267 = vst [vmem:[#allocation2 + $0x658] sm:$0xff] 0.0
      %268 = vst [vmem:[#allocation2 + $0x660] sm:$0xff] 0.0
      %269 = vst [vmem:[#allocation2 + $0x668] sm:$0xff] 0.0
      %270 = vst [vmem:[#allocation2 + $0x670] sm:$0xff] 0.0
      %271 = vst [vmem:[#allocation2 + $0x678] sm:$0xff] 0.0
      %272 = vst [vmem:[#allocation2 + $0x680] sm:$0xff] 0.0
      %273 = vst [vmem:[#allocation2 + $0x688] sm:$0xff] 0.0
      %274 = vst [vmem:[#allocation2 + $0x690] sm:$0xff] 0.0
      %275 = vst [vmem:[#allocation2 + $0x698] sm:$0xff] 0.0
      %276 = vst [vmem:[#allocation2 + $0x6a0] sm:$0xff] 0.0
      %277 = vst [vmem:[#allocation2 + $0x6a8] sm:$0xff] 0.0
      %278 = vst [vmem:[#allocation2 + $0x6b0] sm:$0xff] 0.0
      %279 = vst [vmem:[#allocation2 + $0x6b8] sm:$0xff] 0.0
      %280 = vst [vmem:[#allocation2 + $0x6c0] sm:$0xff] 0.0
      %281 = vst [vmem:[#allocation2 + $0x6c8] sm:$0xff] 0.0
      %282 = vst [vmem:[#allocation2 + $0x6d0] sm:$0xff] 0.0
      %283 = vst [vmem:[#allocation2 + $0x6d8] sm:$0xff] 0.0
      %284 = vst [vmem:[#allocation2 + $0x6e0] sm:$0xff] 0.0
      %285 = vst [vmem:[#allocation2 + $0x6e8] sm:$0xff] 0.0
      %286 = vst [vmem:[#allocation2 + $0x6f0] sm:$0xff] 0.0
      %287 = vst [vmem:[#allocation2 + $0x6f8] sm:$0xff] 0.0
      %288 = vst [vmem:[#allocation2 + $0x700] sm:$0xff] 0.0
      %289 = vst [vmem:[#allocation2 + $0x708] sm:$0xff] 0.0
      %290 = vst [vmem:[#allocation2 + $0x710] sm:$0xff] 0.0
      %291 = vst [vmem:[#allocation2 + $0x718] sm:$0xff] 0.0
      %292 = vst [vmem:[#allocation2 + $0x720] sm:$0xff] 0.0
      %293 = vst [vmem:[#allocation2 + $0x728] sm:$0xff] 0.0
      %294 = vst [vmem:[#allocation2 + $0x730] sm:$0xff] 0.0
      %295 = vst [vmem:[#allocation2 + $0x738] sm:$0xff] 0.0
      %296 = vst [vmem:[#allocation2 + $0x740] sm:$0xff] 0.0
      %297 = vst [vmem:[#allocation2 + $0x748] sm:$0xff] 0.0
      %298 = vst [vmem:[#allocation2 + $0x750] sm:$0xff] 0.0
      %299 = vst [vmem:[#allocation2 + $0x758] sm:$0xff] 0.0
      %300 = vst [vmem:[#allocation2 + $0x760] sm:$0xff] 0.0
      %301 = vst [vmem:[#allocation2 + $0x768] sm:$0xff] 0.0
      %302 = vst [vmem:[#allocation2 + $0x770] sm:$0xff] 0.0
      %303 = vst [vmem:[#allocation2 + $0x778] sm:$0xff] 0.0
      %304 = vst [vmem:[#allocation2 + $0x780] sm:$0xff] 0.0
      %305 = vst [vmem:[#allocation2 + $0x788] sm:$0xff] 0.0
      %306 = vst [vmem:[#allocation2 + $0x790] sm:$0xff] 0.0
      %307 = vst [vmem:[#allocation2 + $0x798] sm:$0xff] 0.0
      %308 = vst [vmem:[#allocation2 + $0x7a0] sm:$0xff] 0.0
      %309 = vst [vmem:[#allocation2 + $0x7a8] sm:$0xff] 0.0
      %310 = vst [vmem:[#allocation2 + $0x7b0] sm:$0xff] 0.0
      %311 = vst [vmem:[#allocation2 + $0x7b8] sm:$0xff] 0.0
      %312 = vst [vmem:[#allocation2 + $0x7c0] sm:$0xff] 0.0
      %313 = vst [vmem:[#allocation2 + $0x7c8] sm:$0xff] 0.0
      %314 = vst [vmem:[#allocation2 + $0x7d0] sm:$0xff] 0.0
      %315 = vst [vmem:[#allocation2 + $0x7d8] sm:$0xff] 0.0
      %316 = vst [vmem:[#allocation2 + $0x7e0] sm:$0xff] 0.0
      %317 = vst [vmem:[#allocation2 + $0x7e8] sm:$0xff] 0.0
      %318 = vst [vmem:[#allocation2 + $0x7f0] sm:$0xff] 0.0
      %319 = vst [vmem:[#allocation2 + $0x7f8] sm:$0xff] 0.0
    $region29: #{tpu_custom_call.1} parent=1 // pred_fallthru
      _
    %v320 = vld [vmem:[#allocation2] sm:$0xff]
    %v321 = vld [vmem:[#allocation2 + $0x8] sm:$0xff]
    %v322 = vld [vmem:[#allocation2 + $0x10] sm:$0xff]
    %v323 = vld [vmem:[#allocation2 + $0x18] sm:$0xff]
    %v324 = vld [vmem:[#allocation2 + $0x20] sm:$0xff]
    %v325 = vld [vmem:[#allocation2 + $0x28] sm:$0xff]
    %v326 = vld [vmem:[#allocation2 + $0x30] sm:$0xff]
    %v327 = vld [vmem:[#allocation2 + $0x38] sm:$0xff]
    %v328 = vld [vmem:[#allocation2 + $0x40] sm:$0xff]
    %v329 = vld [vmem:[#allocation2 + $0x48] sm:$0xff]
    %v330 = vld [vmem:[#allocation2 + $0x50] sm:$0xff]
    %v331 = vld [vmem:[#allocation2 + $0x58] sm:$0xff]
    %v332 = vld [vmem:[#allocation2 + $0x60] sm:$0xff]
    %v333 = vld [vmem:[#allocation2 + $0x68] sm:$0xff]
    %v334 = vld [vmem:[#allocation2 + $0x70] sm:$0xff]
    %v335 = vld [vmem:[#allocation2 + $0x78] sm:$0xff]
    %v336 = vld [vmem:[#allocation2 + $0x80] sm:$0xff]
    %v337 = vld [vmem:[#allocation2 + $0x88] sm:$0xff]
    %v338 = vld [vmem:[#allocation2 + $0x90] sm:$0xff]
    %v339 = vld [vmem:[#allocation2 + $0x98] sm:$0xff]
    %v340 = vld [vmem:[#allocation2 + $0xa0] sm:$0xff]
    %v341 = vld [vmem:[#allocation2 + $0xa8] sm:$0xff]
    %v342 = vld [vmem:[#allocation2 + $0xb0] sm:$0xff]
    %v343 = vld [vmem:[#allocation2 + $0xb8] sm:$0xff]
    %v344 = vld [vmem:[#allocation2 + $0xc0] sm:$0xff]
    %v345 = vld [vmem:[#allocation2 + $0xc8] sm:$0xff]
    %v346 = vld [vmem:[#allocation2 + $0xd0] sm:$0xff]
    %v347 = vld [vmem:[#allocation2 + $0xd8] sm:$0xff]
    %v348 = vld [vmem:[#allocation2 + $0xe0] sm:$0xff]
    %v349 = vld [vmem:[#allocation2 + $0xe8] sm:$0xff]
    %v350 = vld [vmem:[#allocation2 + $0xf0] sm:$0xff]
    %v351 = vld [vmem:[#allocation2 + $0xf8] sm:$0xff]
    %v352 = vld [vmem:[#allocation2 + $0x100] sm:$0xff]
    %v353 = vld [vmem:[#allocation2 + $0x108] sm:$0xff]
    %v354 = vld [vmem:[#allocation2 + $0x110] sm:$0xff]
    %v355 = vld [vmem:[#allocation2 + $0x118] sm:$0xff]
    %v356 = vld [vmem:[#allocation2 + $0x120] sm:$0xff]
    %v357 = vld [vmem:[#allocation2 + $0x128] sm:$0xff]
    %v358 = vld [vmem:[#allocation2 + $0x130] sm:$0xff]
    %v359 = vld [vmem:[#allocation2 + $0x138] sm:$0xff]
    %v360 = vld [vmem:[#allocation2 + $0x140] sm:$0xff]
    %v361 = vld [vmem:[#allocation2 + $0x148] sm:$0xff]
    %v362 = vld [vmem:[#allocation2 + $0x150] sm:$0xff]
    %v363 = vld [vmem:[#allocation2 + $0x158] sm:$0xff]
    %v364 = vld [vmem:[#allocation2 + $0x160] sm:$0xff]
    %v365 = vld [vmem:[#allocation2 + $0x168] sm:$0xff]
    %v366 = vld [vmem:[#allocation2 + $0x170] sm:$0xff]
    %v367 = vld [vmem:[#allocation2 + $0x178] sm:$0xff]
    %v368 = vld [vmem:[#allocation2 + $0x180] sm:$0xff]
    %v369 = vld [vmem:[#allocation2 + $0x188] sm:$0xff]
    %v370 = vld [vmem:[#allocation2 + $0x190] sm:$0xff]
    %v371 = vld [vmem:[#allocation2 + $0x198] sm:$0xff]
    %v372 = vld [vmem:[#allocation2 + $0x1a0] sm:$0xff]
    %v373 = vld [vmem:[#allocation2 + $0x1a8] sm:$0xff]
    %v374 = vld [vmem:[#allocation2 + $0x1b0] sm:$0xff]
    %v375 = vld [vmem:[#allocation2 + $0x1b8] sm:$0xff]
    %v376 = vld [vmem:[#allocation2 + $0x1c0] sm:$0xff]
    %v377 = vld [vmem:[#allocation2 + $0x1c8] sm:$0xff]
    %v378 = vld [vmem:[#allocation2 + $0x1d0] sm:$0xff]
    %v379 = vld [vmem:[#allocation2 + $0x1d8] sm:$0xff]
    %v380 = vld [vmem:[#allocation2 + $0x1e0] sm:$0xff]
    %v381 = vld [vmem:[#allocation2 + $0x1e8] sm:$0xff]
    %v382 = vld [vmem:[#allocation2 + $0x1f0] sm:$0xff]
    %v383 = vld [vmem:[#allocation2 + $0x1f8] sm:$0xff]
    %v384 = vld [vmem:[#allocation2 + $0x200] sm:$0xff]
    %v385 = vld [vmem:[#allocation2 + $0x208] sm:$0xff]
    %v386 = vld [vmem:[#allocation2 + $0x210] sm:$0xff]
    %v387 = vld [vmem:[#allocation2 + $0x218] sm:$0xff]
    %v388 = vld [vmem:[#allocation2 + $0x220] sm:$0xff]
    %v389 = vld [vmem:[#allocation2 + $0x228] sm:$0xff]
    %v390 = vld [vmem:[#allocation2 + $0x230] sm:$0xff]
    %v391 = vld [vmem:[#allocation2 + $0x238] sm:$0xff]
    %v392 = vld [vmem:[#allocation2 + $0x240] sm:$0xff]
    %v393 = vld [vmem:[#allocation2 + $0x248] sm:$0xff]
    %v394 = vld [vmem:[#allocation2 + $0x250] sm:$0xff]
    %v395 = vld [vmem:[#allocation2 + $0x258] sm:$0xff]
    %v396 = vld [vmem:[#allocation2 + $0x260] sm:$0xff]
    %v397 = vld [vmem:[#allocation2 + $0x268] sm:$0xff]
    %v398 = vld [vmem:[#allocation2 + $0x270] sm:$0xff]
    %v399 = vld [vmem:[#allocation2 + $0x278] sm:$0xff]
    %v400 = vld [vmem:[#allocation2 + $0x280] sm:$0xff]
    %v401 = vld [vmem:[#allocation2 + $0x288] sm:$0xff]
    %v402 = vld [vmem:[#allocation2 + $0x290] sm:$0xff]
    %v403 = vld [vmem:[#allocation2 + $0x298] sm:$0xff]
    %v404 = vld [vmem:[#allocation2 + $0x2a0] sm:$0xff]
    %v405 = vld [vmem:[#allocation2 + $0x2a8] sm:$0xff]
    %v406 = vld [vmem:[#allocation2 + $0x2b0] sm:$0xff]
    %v407 = vld [vmem:[#allocation2 + $0x2b8] sm:$0xff]
    %v408 = vld [vmem:[#allocation2 + $0x2c0] sm:$0xff]
    %v409 = vld [vmem:[#allocation2 + $0x2c8] sm:$0xff]
    %v410 = vld [vmem:[#allocation2 + $0x2d0] sm:$0xff]
    %v411 = vld [vmem:[#allocation2 + $0x2d8] sm:$0xff]
    %v412 = vld [vmem:[#allocation2 + $0x2e0] sm:$0xff]
    %v413 = vld [vmem:[#allocation2 + $0x2e8] sm:$0xff]
    %v414 = vld [vmem:[#allocation2 + $0x2f0] sm:$0xff]
    %v415 = vld [vmem:[#allocation2 + $0x2f8] sm:$0xff]
    %v416 = vld [vmem:[#allocation2 + $0x300] sm:$0xff]
    %v417 = vld [vmem:[#allocation2 + $0x308] sm:$0xff]
    %v418 = vld [vmem:[#allocation2 + $0x310] sm:$0xff]
    %v419 = vld [vmem:[#allocation2 + $0x318] sm:$0xff]
    %v420 = vld [vmem:[#allocation2 + $0x320] sm:$0xff]
    %v421 = vld [vmem:[#allocation2 + $0x328] sm:$0xff]
    %v422 = vld [vmem:[#allocation2 + $0x330] sm:$0xff]
    %v423 = vld [vmem:[#allocation2 + $0x338] sm:$0xff]
    %v424 = vld [vmem:[#allocation2 + $0x340] sm:$0xff]
    %v425 = vld [vmem:[#allocation2 + $0x348] sm:$0xff]
    %v426 = vld [vmem:[#allocation2 + $0x350] sm:$0xff]
    %v427 = vld [vmem:[#allocation2 + $0x358] sm:$0xff]
    %v428 = vld [vmem:[#allocation2 + $0x360] sm:$0xff]
    %v429 = vld [vmem:[#allocation2 + $0x368] sm:$0xff]
    %v430 = vld [vmem:[#allocation2 + $0x370] sm:$0xff]
    %v431 = vld [vmem:[#allocation2 + $0x378] sm:$0xff]
    %v432 = vld [vmem:[#allocation2 + $0x380] sm:$0xff]
    %v433 = vld [vmem:[#allocation2 + $0x388] sm:$0xff]
    %v434 = vld [vmem:[#allocation2 + $0x390] sm:$0xff]
    %v435 = vld [vmem:[#allocation2 + $0x398] sm:$0xff]
    %v436 = vld [vmem:[#allocation2 + $0x3a0] sm:$0xff]
    %v437 = vld [vmem:[#allocation2 + $0x3a8] sm:$0xff]
    %v438 = vld [vmem:[#allocation2 + $0x3b0] sm:$0xff]
    %v439 = vld [vmem:[#allocation2 + $0x3b8] sm:$0xff]
    %v440 = vld [vmem:[#allocation2 + $0x3c0] sm:$0xff]
    %v441 = vld [vmem:[#allocation2 + $0x3c8] sm:$0xff]
    %v442 = vld [vmem:[#allocation2 + $0x3d0] sm:$0xff]
    %v443 = vld [vmem:[#allocation2 + $0x3d8] sm:$0xff]
    %v444 = vld [vmem:[#allocation2 + $0x3e0] sm:$0xff]
    %v445 = vld [vmem:[#allocation2 + $0x3e8] sm:$0xff]
    %v446 = vld [vmem:[#allocation2 + $0x3f0] sm:$0xff]
    %v447 = vld [vmem:[#allocation2 + $0x3f8] sm:$0xff]
    %v448 = vld [vmem:[#allocation2 + $0x400] sm:$0xff]
    %v449 = vld [vmem:[#allocation2 + $0x408] sm:$0xff]
    %v450 = vld [vmem:[#allocation2 + $0x410] sm:$0xff]
    %v451 = vld [vmem:[#allocation2 + $0x418] sm:$0xff]
    %v452 = vld [vmem:[#allocation2 + $0x420] sm:$0xff]
    %v453 = vld [vmem:[#allocation2 + $0x428] sm:$0xff]
    %v454 = vld [vmem:[#allocation2 + $0x430] sm:$0xff]
    %v455 = vld [vmem:[#allocation2 + $0x438] sm:$0xff]
    %v456 = vld [vmem:[#allocation2 + $0x440] sm:$0xff]
    %v457 = vld [vmem:[#allocation2 + $0x448] sm:$0xff]
    %v458 = vld [vmem:[#allocation2 + $0x450] sm:$0xff]
    %v459 = vld [vmem:[#allocation2 + $0x458] sm:$0xff]
    %v460 = vld [vmem:[#allocation2 + $0x460] sm:$0xff]
    %v461 = vld [vmem:[#allocation2 + $0x468] sm:$0xff]
    %v462 = vld [vmem:[#allocation2 + $0x470] sm:$0xff]
    %v463 = vld [vmem:[#allocation2 + $0x478] sm:$0xff]
    %v464 = vld [vmem:[#allocation2 + $0x480] sm:$0xff]
    %v465 = vld [vmem:[#allocation2 + $0x488] sm:$0xff]
    %v466 = vld [vmem:[#allocation2 + $0x490] sm:$0xff]
    %v467 = vld [vmem:[#allocation2 + $0x498] sm:$0xff]
    %v468 = vld [vmem:[#allocation2 + $0x4a0] sm:$0xff]
    %v469 = vld [vmem:[#allocation2 + $0x4a8] sm:$0xff]
    %v470 = vld [vmem:[#allocation2 + $0x4b0] sm:$0xff]
    %v471 = vld [vmem:[#allocation2 + $0x4b8] sm:$0xff]
    %v472 = vld [vmem:[#allocation2 + $0x4c0] sm:$0xff]
    %v473 = vld [vmem:[#allocation2 + $0x4c8] sm:$0xff]
    %v474 = vld [vmem:[#allocation2 + $0x4d0] sm:$0xff]
    %v475 = vld [vmem:[#allocation2 + $0x4d8] sm:$0xff]
    %v476 = vld [vmem:[#allocation2 + $0x4e0] sm:$0xff]
    %v477 = vld [vmem:[#allocation2 + $0x4e8] sm:$0xff]
    %v478 = vld [vmem:[#allocation2 + $0x4f0] sm:$0xff]
    %v479 = vld [vmem:[#allocation2 + $0x4f8] sm:$0xff]
    %v480 = vld [vmem:[#allocation2 + $0x500] sm:$0xff]
    %v481 = vld [vmem:[#allocation2 + $0x508] sm:$0xff]
    %v482 = vld [vmem:[#allocation2 + $0x510] sm:$0xff]
    %v483 = vld [vmem:[#allocation2 + $0x518] sm:$0xff]
    %v484 = vld [vmem:[#allocation2 + $0x520] sm:$0xff]
    %v485 = vld [vmem:[#allocation2 + $0x528] sm:$0xff]
    %v486 = vld [vmem:[#allocation2 + $0x530] sm:$0xff]
    %v487 = vld [vmem:[#allocation2 + $0x538] sm:$0xff]
    %v488 = vld [vmem:[#allocation2 + $0x540] sm:$0xff]
    %v489 = vld [vmem:[#allocation2 + $0x548] sm:$0xff]
    %v490 = vld [vmem:[#allocation2 + $0x550] sm:$0xff]
    %v491 = vld [vmem:[#allocation2 + $0x558] sm:$0xff]
    %v492 = vld [vmem:[#allocation2 + $0x560] sm:$0xff]
    %v493 = vld [vmem:[#allocation2 + $0x568] sm:$0xff]
    %v494 = vld [vmem:[#allocation2 + $0x570] sm:$0xff]
    %v495 = vld [vmem:[#allocation2 + $0x578] sm:$0xff]
    %v496 = vld [vmem:[#allocation2 + $0x580] sm:$0xff]
    %v497 = vld [vmem:[#allocation2 + $0x588] sm:$0xff]
    %v498 = vld [vmem:[#allocation2 + $0x590] sm:$0xff]
    %v499 = vld [vmem:[#allocation2 + $0x598] sm:$0xff]
    %v500 = vld [vmem:[#allocation2 + $0x5a0] sm:$0xff]
    %v501 = vld [vmem:[#allocation2 + $0x5a8] sm:$0xff]
    %v502 = vld [vmem:[#allocation2 + $0x5b0] sm:$0xff]
    %v503 = vld [vmem:[#allocation2 + $0x5b8] sm:$0xff]
    %v504 = vld [vmem:[#allocation2 + $0x5c0] sm:$0xff]
    %v505 = vld [vmem:[#allocation2 + $0x5c8] sm:$0xff]
    %v506 = vld [vmem:[#allocation2 + $0x5d0] sm:$0xff]
    %v507 = vld [vmem:[#allocation2 + $0x5d8] sm:$0xff]
    %v508 = vld [vmem:[#allocation2 + $0x5e0] sm:$0xff]
    %v509 = vld [vmem:[#allocation2 + $0x5e8] sm:$0xff]
    %v510 = vld [vmem:[#allocation2 + $0x5f0] sm:$0xff]
    %v511 = vld [vmem:[#allocation2 + $0x5f8] sm:$0xff]
    %v512 = vld [vmem:[#allocation2 + $0x600] sm:$0xff]
    %v513 = vld [vmem:[#allocation2 + $0x608] sm:$0xff]
    %v514 = vld [vmem:[#allocation2 + $0x610] sm:$0xff]
    %v515 = vld [vmem:[#allocation2 + $0x618] sm:$0xff]
    %v516 = vld [vmem:[#allocation2 + $0x620] sm:$0xff]
    %v517 = vld [vmem:[#allocation2 + $0x628] sm:$0xff]
    %v518 = vld [vmem:[#allocation2 + $0x630] sm:$0xff]
    %v519 = vld [vmem:[#allocation2 + $0x638] sm:$0xff]
    %v520 = vld [vmem:[#allocation2 + $0x640] sm:$0xff]
    %v521 = vld [vmem:[#allocation2 + $0x648] sm:$0xff]
    %v522 = vld [vmem:[#allocation2 + $0x650] sm:$0xff]
    %v523 = vld [vmem:[#allocation2 + $0x658] sm:$0xff]
    %v524 = vld [vmem:[#allocation2 + $0x660] sm:$0xff]
    %v525 = vld [vmem:[#allocation2 + $0x668] sm:$0xff]
    %v526 = vld [vmem:[#allocation2 + $0x670] sm:$0xff]
    %v527 = vld [vmem:[#allocation2 + $0x678] sm:$0xff]
    %v528 = vld [vmem:[#allocation2 + $0x680] sm:$0xff]
    %v529 = vld [vmem:[#allocation2 + $0x688] sm:$0xff]
    %v530 = vld [vmem:[#allocation2 + $0x690] sm:$0xff]
    %v531 = vld [vmem:[#allocation2 + $0x698] sm:$0xff]
    %v532 = vld [vmem:[#allocation2 + $0x6a0] sm:$0xff]
    %v533 = vld [vmem:[#allocation2 + $0x6a8] sm:$0xff]
    %v534 = vld [vmem:[#allocation2 + $0x6b0] sm:$0xff]
    %v535 = vld [vmem:[#allocation2 + $0x6b8] sm:$0xff]
    %v536 = vld [vmem:[#allocation2 + $0x6c0] sm:$0xff]
    %v537 = vld [vmem:[#allocation2 + $0x6c8] sm:$0xff]
    %v538 = vld [vmem:[#allocation2 + $0x6d0] sm:$0xff]
    %v539 = vld [vmem:[#allocation2 + $0x6d8] sm:$0xff]
    %v540 = vld [vmem:[#allocation2 + $0x6e0] sm:$0xff]
    %v541 = vld [vmem:[#allocation2 + $0x6e8] sm:$0xff]
    %v542 = vld [vmem:[#allocation2 + $0x6f0] sm:$0xff]
    %v543 = vld [vmem:[#allocation2 + $0x6f8] sm:$0xff]
    %v544 = vld [vmem:[#allocation2 + $0x700] sm:$0xff]
    %v545 = vld [vmem:[#allocation2 + $0x708] sm:$0xff]
    %v546 = vld [vmem:[#allocation2 + $0x710] sm:$0xff]
    %v547 = vld [vmem:[#allocation2 + $0x718] sm:$0xff]
    %v548 = vld [vmem:[#allocation2 + $0x720] sm:$0xff]
    %v549 = vld [vmem:[#allocation2 + $0x728] sm:$0xff]
    %v550 = vld [vmem:[#allocation2 + $0x730] sm:$0xff]
    %v551 = vld [vmem:[#allocation2 + $0x738] sm:$0xff]
    %v552 = vld [vmem:[#allocation2 + $0x740] sm:$0xff]
    %v553 = vld [vmem:[#allocation2 + $0x748] sm:$0xff]
    %v554 = vld [vmem:[#allocation2 + $0x750] sm:$0xff]
    %v555 = vld [vmem:[#allocation2 + $0x758] sm:$0xff]
    %v556 = vld [vmem:[#allocation2 + $0x760] sm:$0xff]
    %v557 = vld [vmem:[#allocation2 + $0x768] sm:$0xff]
    %v558 = vld [vmem:[#allocation2 + $0x770] sm:$0xff]
    %v559 = vld [vmem:[#allocation2 + $0x778] sm:$0xff]
    %v560 = vld [vmem:[#allocation2 + $0x780] sm:$0xff]
    %v561 = vld [vmem:[#allocation2 + $0x788] sm:$0xff]
    %v562 = vld [vmem:[#allocation2 + $0x790] sm:$0xff]
    %v563 = vld [vmem:[#allocation2 + $0x798] sm:$0xff]
    %v564 = vld [vmem:[#allocation2 + $0x7a0] sm:$0xff]
    %v565 = vld [vmem:[#allocation2 + $0x7a8] sm:$0xff]
    %v566 = vld [vmem:[#allocation2 + $0x7b0] sm:$0xff]
    %v567 = vld [vmem:[#allocation2 + $0x7b8] sm:$0xff]
    %v568 = vld [vmem:[#allocation2 + $0x7c0] sm:$0xff]
    %v569 = vld [vmem:[#allocation2 + $0x7c8] sm:$0xff]
    %v570 = vld [vmem:[#allocation2 + $0x7d0] sm:$0xff]
    %v571 = vld [vmem:[#allocation2 + $0x7d8] sm:$0xff]
    %v572 = vld [vmem:[#allocation2 + $0x7e0] sm:$0xff]
    %v573 = vld [vmem:[#allocation2 + $0x7e8] sm:$0xff]
    %v574 = vld [vmem:[#allocation2 + $0x7f0] sm:$0xff]
    %v575 = vld [vmem:[#allocation2 + $0x7f8] sm:$0xff]
    %v576 = vld [vmem:[#allocation3] sm:$0xff]
    %v577 = vld [vmem:[#allocation3 + $0x8] sm:$0xff]
    %v578 = vld [vmem:[#allocation3 + $0x10] sm:$0xff]
    %v579 = vld [vmem:[#allocation3 + $0x18] sm:$0xff]
    %v580 = vld [vmem:[#allocation3 + $0x20] sm:$0xff]
    %v581 = vld [vmem:[#allocation3 + $0x28] sm:$0xff]
    %v582 = vld [vmem:[#allocation3 + $0x30] sm:$0xff]
    %v583 = vld [vmem:[#allocation3 + $0x38] sm:$0xff]
    %v584 = vld [vmem:[#allocation3 + $0x40] sm:$0xff]
    %v585 = vld [vmem:[#allocation3 + $0x48] sm:$0xff]
    %v586 = vld [vmem:[#allocation3 + $0x50] sm:$0xff]
    %v587 = vld [vmem:[#allocation3 + $0x58] sm:$0xff]
    %v588 = vld [vmem:[#allocation3 + $0x60] sm:$0xff]
    %v589 = vld [vmem:[#allocation3 + $0x68] sm:$0xff]
    %v590 = vld [vmem:[#allocation3 + $0x70] sm:$0xff]
    %v591 = vld [vmem:[#allocation3 + $0x78] sm:$0xff]
    %v592 = vld [vmem:[#allocation3 + $0x80] sm:$0xff]
    %v593 = vld [vmem:[#allocation3 + $0x88] sm:$0xff]
    %v594 = vld [vmem:[#allocation3 + $0x90] sm:$0xff]
    %v595 = vld [vmem:[#allocation3 + $0x98] sm:$0xff]
    %v596 = vld [vmem:[#allocation3 + $0xa0] sm:$0xff]
    %v597 = vld [vmem:[#allocation3 + $0xa8] sm:$0xff]
    %v598 = vld [vmem:[#allocation3 + $0xb0] sm:$0xff]
    %v599 = vld [vmem:[#allocation3 + $0xb8] sm:$0xff]
    %v600 = vld [vmem:[#allocation3 + $0xc0] sm:$0xff]
    %v601 = vld [vmem:[#allocation3 + $0xc8] sm:$0xff]
    %v602 = vld [vmem:[#allocation3 + $0xd0] sm:$0xff]
    %v603 = vld [vmem:[#allocation3 + $0xd8] sm:$0xff]
    %v604 = vld [vmem:[#allocation3 + $0xe0] sm:$0xff]
    %v605 = vld [vmem:[#allocation3 + $0xe8] sm:$0xff]
    %v606 = vld [vmem:[#allocation3 + $0xf0] sm:$0xff]
    %v607 = vld [vmem:[#allocation3 + $0xf8] sm:$0xff]
    %v608 = vpack.c.bf16 %v577, %v576
    %v609 = vpack.c.bf16 %v579, %v578
    %v610 = vpack.c.bf16 %v581, %v580
    %v611 = vpack.c.bf16 %v583, %v582
    %v612 = vpack.c.bf16 %v585, %v584
    %v613 = vpack.c.bf16 %v587, %v586
    %v614 = vpack.c.bf16 %v589, %v588
    %v615 = vpack.c.bf16 %v591, %v590
    %v616 = vpack.c.bf16 %v593, %v592
    %v617 = vpack.c.bf16 %v595, %v594
    %v618 = vpack.c.bf16 %v597, %v596
    %v619 = vpack.c.bf16 %v599, %v598
    %v620 = vpack.c.bf16 %v601, %v600
    %v621 = vpack.c.bf16 %v603, %v602
    %v622 = vpack.c.bf16 %v605, %v604
    %v623 = vpack.c.bf16 %v607, %v606
    %v624 = vld [vmem:[#allocation6] sm:$0xff]
    %v625 = vld [vmem:[#allocation6 + $0x8] sm:$0xff]
    %v626 = vld [vmem:[#allocation6 + $0x10] sm:$0xff]
    %v627 = vld [vmem:[#allocation6 + $0x18] sm:$0xff]
    %v628 = vld [vmem:[#allocation6 + $0x20] sm:$0xff]
    %v629 = vld [vmem:[#allocation6 + $0x28] sm:$0xff]
    %v630 = vld [vmem:[#allocation6 + $0x30] sm:$0xff]
    %v631 = vld [vmem:[#allocation6 + $0x38] sm:$0xff]
    %v632 = vld [vmem:[#allocation6 + $0x40] sm:$0xff]
    %v633 = vld [vmem:[#allocation6 + $0x48] sm:$0xff]
    %v634 = vld [vmem:[#allocation6 + $0x50] sm:$0xff]
    %v635 = vld [vmem:[#allocation6 + $0x58] sm:$0xff]
    %v636 = vld [vmem:[#allocation6 + $0x60] sm:$0xff]
    %v637 = vld [vmem:[#allocation6 + $0x68] sm:$0xff]
    %v638 = vld [vmem:[#allocation6 + $0x70] sm:$0xff]
    %v639 = vld [vmem:[#allocation6 + $0x78] sm:$0xff]
    %v640 = vld [vmem:[#allocation6 + $0x80] sm:$0xff]
    %v641 = vld [vmem:[#allocation6 + $0x88] sm:$0xff]
    %v642 = vld [vmem:[#allocation6 + $0x90] sm:$0xff]
    %v643 = vld [vmem:[#allocation6 + $0x98] sm:$0xff]
    %v644 = vld [vmem:[#allocation6 + $0xa0] sm:$0xff]
    %v645 = vld [vmem:[#allocation6 + $0xa8] sm:$0xff]
    %v646 = vld [vmem:[#allocation6 + $0xb0] sm:$0xff]
    %v647 = vld [vmem:[#allocation6 + $0xb8] sm:$0xff]
    %v648 = vld [vmem:[#allocation6 + $0xc0] sm:$0xff]
    %v649 = vld [vmem:[#allocation6 + $0xc8] sm:$0xff]
    %v650 = vld [vmem:[#allocation6 + $0xd0] sm:$0xff]
    %v651 = vld [vmem:[#allocation6 + $0xd8] sm:$0xff]
    %v652 = vld [vmem:[#allocation6 + $0xe0] sm:$0xff]
    %v653 = vld [vmem:[#allocation6 + $0xe8] sm:$0xff]
    %v654 = vld [vmem:[#allocation6 + $0xf0] sm:$0xff]
    %v655 = vld [vmem:[#allocation6 + $0xf8] sm:$0xff]
    %v656 = vld [vmem:[#allocation6 + $0x100] sm:$0xff]
    %v657 = vld [vmem:[#allocation6 + $0x108] sm:$0xff]
    %v658 = vld [vmem:[#allocation6 + $0x110] sm:$0xff]
    %v659 = vld [vmem:[#allocation6 + $0x118] sm:$0xff]
    %v660 = vld [vmem:[#allocation6 + $0x120] sm:$0xff]
    %v661 = vld [vmem:[#allocation6 + $0x128] sm:$0xff]
    %v662 = vld [vmem:[#allocation6 + $0x130] sm:$0xff]
    %v663 = vld [vmem:[#allocation6 + $0x138] sm:$0xff]
    %v664 = vld [vmem:[#allocation6 + $0x140] sm:$0xff]
    %v665 = vld [vmem:[#allocation6 + $0x148] sm:$0xff]
    %v666 = vld [vmem:[#allocation6 + $0x150] sm:$0xff]
    %v667 = vld [vmem:[#allocation6 + $0x158] sm:$0xff]
    %v668 = vld [vmem:[#allocation6 + $0x160] sm:$0xff]
    %v669 = vld [vmem:[#allocation6 + $0x168] sm:$0xff]
    %v670 = vld [vmem:[#allocation6 + $0x170] sm:$0xff]
    %v671 = vld [vmem:[#allocation6 + $0x178] sm:$0xff]
    %v672 = vld [vmem:[#allocation6 + $0x180] sm:$0xff]
    %v673 = vld [vmem:[#allocation6 + $0x188] sm:$0xff]
    %v674 = vld [vmem:[#allocation6 + $0x190] sm:$0xff]
    %v675 = vld [vmem:[#allocation6 + $0x198] sm:$0xff]
    %v676 = vld [vmem:[#allocation6 + $0x1a0] sm:$0xff]
    %v677 = vld [vmem:[#allocation6 + $0x1a8] sm:$0xff]
    %v678 = vld [vmem:[#allocation6 + $0x1b0] sm:$0xff]
    %v679 = vld [vmem:[#allocation6 + $0x1b8] sm:$0xff]
    %v680 = vld [vmem:[#allocation6 + $0x1c0] sm:$0xff]
    %v681 = vld [vmem:[#allocation6 + $0x1c8] sm:$0xff]
    %v682 = vld [vmem:[#allocation6 + $0x1d0] sm:$0xff]
    %v683 = vld [vmem:[#allocation6 + $0x1d8] sm:$0xff]
    %v684 = vld [vmem:[#allocation6 + $0x1e0] sm:$0xff]
    %v685 = vld [vmem:[#allocation6 + $0x1e8] sm:$0xff]
    %v686 = vld [vmem:[#allocation6 + $0x1f0] sm:$0xff]
    %v687 = vld [vmem:[#allocation6 + $0x1f8] sm:$0xff]
    %v752 = vunpack.c.l.b16 %v624
    %v753 = vunpack.c.h.b16 %v624
    %v754 = vunpack.c.l.b16 %v625
    %v755 = vunpack.c.h.b16 %v625
    %v756 = vunpack.c.l.b16 %v626
    %v757 = vunpack.c.h.b16 %v626
    %v758 = vunpack.c.l.b16 %v627
    %v759 = vunpack.c.h.b16 %v627
    %v760 = vunpack.c.l.b16 %v628
    %v761 = vunpack.c.h.b16 %v628
    %v762 = vunpack.c.l.b16 %v629
    %v763 = vunpack.c.h.b16 %v629
    %v764 = vunpack.c.l.b16 %v630
    %v765 = vunpack.c.h.b16 %v630
    %v766 = vunpack.c.l.b16 %v631
    %v767 = vunpack.c.h.b16 %v631
    %v768 = vunpack.c.l.b16 %v632
    %v769 = vunpack.c.h.b16 %v632
    %v770 = vunpack.c.l.b16 %v633
    %v771 = vunpack.c.h.b16 %v633
    %v772 = vunpack.c.l.b16 %v634
    %v773 = vunpack.c.h.b16 %v634
    %v774 = vunpack.c.l.b16 %v635
    %v775 = vunpack.c.h.b16 %v635
    %v776 = vunpack.c.l.b16 %v636
    %v777 = vunpack.c.h.b16 %v636
    %v778 = vunpack.c.l.b16 %v637
    %v779 = vunpack.c.h.b16 %v637
    %v780 = vunpack.c.l.b16 %v638
    %v781 = vunpack.c.h.b16 %v638
    %v782 = vunpack.c.l.b16 %v639
    %v783 = vunpack.c.h.b16 %v639
    %v784 = vunpack.c.l.b16 %v640
    %v785 = vunpack.c.h.b16 %v640
    %v786 = vunpack.c.l.b16 %v641
    %v787 = vunpack.c.h.b16 %v641
    %v788 = vunpack.c.l.b16 %v642
    %v789 = vunpack.c.h.b16 %v642
    %v790 = vunpack.c.l.b16 %v643
    %v791 = vunpack.c.h.b16 %v643
    %v792 = vunpack.c.l.b16 %v644
    %v793 = vunpack.c.h.b16 %v644
    %v794 = vunpack.c.l.b16 %v645
    %v795 = vunpack.c.h.b16 %v645
    %v796 = vunpack.c.l.b16 %v646
    %v797 = vunpack.c.h.b16 %v646
    %v798 = vunpack.c.l.b16 %v647
    %v799 = vunpack.c.h.b16 %v647
    %v800 = vunpack.c.l.b16 %v648
    %v801 = vunpack.c.h.b16 %v648
    %v802 = vunpack.c.l.b16 %v649
    %v803 = vunpack.c.h.b16 %v649
    %v804 = vunpack.c.l.b16 %v650
    %v805 = vunpack.c.h.b16 %v650
    %v806 = vunpack.c.l.b16 %v651
    %v807 = vunpack.c.h.b16 %v651
    %v808 = vunpack.c.l.b16 %v652
    %v809 = vunpack.c.h.b16 %v652
    %v810 = vunpack.c.l.b16 %v653
    %v811 = vunpack.c.h.b16 %v653
    %v812 = vunpack.c.l.b16 %v654
    %v813 = vunpack.c.h.b16 %v654
    %v814 = vunpack.c.l.b16 %v655
    %v815 = vunpack.c.h.b16 %v655
    %v816 = vunpack.c.l.b16 %v656
    %v817 = vunpack.c.h.b16 %v656
    %v818 = vunpack.c.l.b16 %v657
    %v819 = vunpack.c.h.b16 %v657
    %v820 = vunpack.c.l.b16 %v658
    %v821 = vunpack.c.h.b16 %v658
    %v822 = vunpack.c.l.b16 %v659
    %v823 = vunpack.c.h.b16 %v659
    %v824 = vunpack.c.l.b16 %v660
    %v825 = vunpack.c.h.b16 %v660
    %v826 = vunpack.c.l.b16 %v661
    %v827 = vunpack.c.h.b16 %v661
    %v828 = vunpack.c.l.b16 %v662
    %v829 = vunpack.c.h.b16 %v662
    %v830 = vunpack.c.l.b16 %v663
    %v831 = vunpack.c.h.b16 %v663
    %v832 = vunpack.c.l.b16 %v664
    %v833 = vunpack.c.h.b16 %v664
    %v834 = vunpack.c.l.b16 %v665
    %v835 = vunpack.c.h.b16 %v665
    %v836 = vunpack.c.l.b16 %v666
    %v837 = vunpack.c.h.b16 %v666
    %v838 = vunpack.c.l.b16 %v667
    %v839 = vunpack.c.h.b16 %v667
    %v840 = vunpack.c.l.b16 %v668
    %v841 = vunpack.c.h.b16 %v668
    %v842 = vunpack.c.l.b16 %v669
    %v843 = vunpack.c.h.b16 %v669
    %v844 = vunpack.c.l.b16 %v670
    %v845 = vunpack.c.h.b16 %v670
    %v846 = vunpack.c.l.b16 %v671
    %v847 = vunpack.c.h.b16 %v671
    %v848 = vunpack.c.l.b16 %v672
    %v849 = vunpack.c.h.b16 %v672
    %v850 = vunpack.c.l.b16 %v673
    %v851 = vunpack.c.h.b16 %v673
    %v852 = vunpack.c.l.b16 %v674
    %v853 = vunpack.c.h.b16 %v674
    %v854 = vunpack.c.l.b16 %v675
    %v855 = vunpack.c.h.b16 %v675
    %v856 = vunpack.c.l.b16 %v676
    %v857 = vunpack.c.h.b16 %v676
    %v858 = vunpack.c.l.b16 %v677
    %v859 = vunpack.c.h.b16 %v677
    %v860 = vunpack.c.l.b16 %v678
    %v861 = vunpack.c.h.b16 %v678
    %v862 = vunpack.c.l.b16 %v679
    %v863 = vunpack.c.h.b16 %v679
    %v864 = vunpack.c.l.b16 %v680
    %v865 = vunpack.c.h.b16 %v680
    %v866 = vunpack.c.l.b16 %v681
    %v867 = vunpack.c.h.b16 %v681
    %v868 = vunpack.c.l.b16 %v682
    %v869 = vunpack.c.h.b16 %v682
    %v870 = vunpack.c.l.b16 %v683
    %v871 = vunpack.c.h.b16 %v683
    %v872 = vunpack.c.l.b16 %v684
    %v873 = vunpack.c.h.b16 %v684
    %v874 = vunpack.c.l.b16 %v685
    %v875 = vunpack.c.h.b16 %v685
    %v876 = vunpack.c.l.b16 %v686
    %v877 = vunpack.c.h.b16 %v686
    %v878 = vunpack.c.l.b16 %v687
    %v879 = vunpack.c.h.b16 %v687
    %v880 = vpack.c.b16 %v760, %v752
    %v881 = vpack.c.b16 %v761, %v753
    %v882 = vpack.c.b16 %v762, %v754
    %v883 = vpack.c.b16 %v763, %v755
    %v884 = vpack.c.b16 %v764, %v756
    %v885 = vpack.c.b16 %v765, %v757
    %v886 = vpack.c.b16 %v766, %v758
    %v887 = vpack.c.b16 %v767, %v759
    %v888 = vpack.c.b16 %v776, %v768
    %v889 = vpack.c.b16 %v777, %v769
    %v890 = vpack.c.b16 %v778, %v770
    %v891 = vpack.c.b16 %v779, %v771
    %v892 = vpack.c.b16 %v780, %v772
    %v893 = vpack.c.b16 %v781, %v773
    %v894 = vpack.c.b16 %v782, %v774
    %v895 = vpack.c.b16 %v783, %v775
    %v896 = vpack.c.b16 %v792, %v784
    %v897 = vpack.c.b16 %v793, %v785
    %v898 = vpack.c.b16 %v794, %v786
    %v899 = vpack.c.b16 %v795, %v787
    %v900 = vpack.c.b16 %v796, %v788
    %v901 = vpack.c.b16 %v797, %v789
    %v902 = vpack.c.b16 %v798, %v790
    %v903 = vpack.c.b16 %v799, %v791
    %v904 = vpack.c.b16 %v808, %v800
    %v905 = vpack.c.b16 %v809, %v801
    %v906 = vpack.c.b16 %v810, %v802
    %v907 = vpack.c.b16 %v811, %v803
    %v908 = vpack.c.b16 %v812, %v804
    %v909 = vpack.c.b16 %v813, %v805
    %v910 = vpack.c.b16 %v814, %v806
    %v911 = vpack.c.b16 %v815, %v807
    %v912 = vpack.c.b16 %v824, %v816
    %v913 = vpack.c.b16 %v825, %v817
    %v914 = vpack.c.b16 %v826, %v818
    %v915 = vpack.c.b16 %v827, %v819
    %v916 = vpack.c.b16 %v828, %v820
    %v917 = vpack.c.b16 %v829, %v821
    %v918 = vpack.c.b16 %v830, %v822
    %v919 = vpack.c.b16 %v831, %v823
    %v920 = vpack.c.b16 %v840, %v832
    %v921 = vpack.c.b16 %v841, %v833
    %v922 = vpack.c.b16 %v842, %v834
    %v923 = vpack.c.b16 %v843, %v835
    %v924 = vpack.c.b16 %v844, %v836
    %v925 = vpack.c.b16 %v845, %v837
    %v926 = vpack.c.b16 %v846, %v838
    %v927 = vpack.c.b16 %v847, %v839
    %v928 = vpack.c.b16 %v856, %v848
    %v929 = vpack.c.b16 %v857, %v849
    %v930 = vpack.c.b16 %v858, %v850
    %v931 = vpack.c.b16 %v859, %v851
    %v932 = vpack.c.b16 %v860, %v852
    %v933 = vpack.c.b16 %v861, %v853
    %v934 = vpack.c.b16 %v862, %v854
    %v935 = vpack.c.b16 %v863, %v855
    %v936 = vpack.c.b16 %v872, %v864
    %v937 = vpack.c.b16 %v873, %v865
    %v938 = vpack.c.b16 %v874, %v866
    %v939 = vpack.c.b16 %v875, %v867
    %v940 = vpack.c.b16 %v876, %v868
    %v941 = vpack.c.b16 %v877, %v869
    %v942 = vpack.c.b16 %v878, %v870
    %v943 = vpack.c.b16 %v879, %v871
    %1008 = vmatpush.bf16.msra.mxu0 %v936
    %1009 = vmatpush.bf16.msra.mxu0 %v928
    %1010 = vmatpush.bf16.msra.mxu0 %v920
    %1011 = vmatpush.bf16.msra.mxu0 %v912
    %1012 = vmatpush.bf16.msra.mxu0 %v904
    %1013 = vmatpush.bf16.msra.mxu0 %v896
    %1014 = vmatpush.bf16.msra.mxu0 %v888
    %1015 = vmatpush.bf16.msra.mxu0 %v880
    %1016 = vmatmul.bf16.gmra.mxu0 %v608
    %v1017 = vpop.f32.mrf.mxu0
    %v1018 = vadd.f32 0.0, %v1017
    %v1019 = vpop.f32.mrf.mxu0
    %v1020 = vadd.f32 0.0, %v1019
    %1021 = vmatmul.bf16.gmra.mxu0 %v609
    %v1022 = vpop.f32.mrf.mxu0
    %v1023 = vadd.f32 0.0, %v1022
    %v1024 = vpop.f32.mrf.mxu0
    %v1025 = vadd.f32 0.0, %v1024
    %1026 = vmatmul.bf16.gmra.mxu0 %v610
    %v1027 = vpop.f32.mrf.mxu0
    %v1028 = vadd.f32 0.0, %v1027
    %v1029 = vpop.f32.mrf.mxu0
    %v1030 = vadd.f32 0.0, %v1029
    %1031 = vmatmul.bf16.gmra.mxu0 %v611
    %v1032 = vpop.f32.mrf.mxu0
    %v1033 = vadd.f32 0.0, %v1032
    %v1034 = vpop.f32.mrf.mxu0
    %v1035 = vadd.f32 0.0, %v1034
    %1036 = vmatmul.bf16.gmra.mxu0 %v612
    %v1037 = vpop.f32.mrf.mxu0
    %v1038 = vadd.f32 0.0, %v1037
    %v1039 = vpop.f32.mrf.mxu0
    %v1040 = vadd.f32 0.0, %v1039
    %1041 = vmatmul.bf16.gmra.mxu0 %v613
    %v1042 = vpop.f32.mrf.mxu0
    %v1043 = vadd.f32 0.0, %v1042
    %v1044 = vpop.f32.mrf.mxu0
    %v1045 = vadd.f32 0.0, %v1044
    %1046 = vmatmul.bf16.gmra.mxu0 %v614
    %v1047 = vpop.f32.mrf.mxu0
    %v1048 = vadd.f32 0.0, %v1047
    %v1049 = vpop.f32.mrf.mxu0
    %v1050 = vadd.f32 0.0, %v1049
    %1051 = vmatmul.bf16.gmra.mxu0 %v615
    %v1052 = vpop.f32.mrf.mxu0
    %v1053 = vadd.f32 0.0, %v1052
    %v1054 = vpop.f32.mrf.mxu0
    %v1055 = vadd.f32 0.0, %v1054
    %1056 = vmatmul.bf16.gmra.mxu0 %v616
    %v1057 = vpop.f32.mrf.mxu0
    %v1058 = vadd.f32 0.0, %v1057
    %v1059 = vpop.f32.mrf.mxu0
    %v1060 = vadd.f32 0.0, %v1059
    %1061 = vmatmul.bf16.gmra.mxu0 %v617
    %v1062 = vpop.f32.mrf.mxu0
    %v1063 = vadd.f32 0.0, %v1062
    %v1064 = vpop.f32.mrf.mxu0
    %v1065 = vadd.f32 0.0, %v1064
    %1066 = vmatmul.bf16.gmra.mxu0 %v618
    %v1067 = vpop.f32.mrf.mxu0
    %v1068 = vadd.f32 0.0, %v1067
    %v1069 = vpop.f32.mrf.mxu0
    %v1070 = vadd.f32 0.0, %v1069
    %1071 = vmatmul.bf16.gmra.mxu0 %v619
    %v1072 = vpop.f32.mrf.mxu0
    %v1073 = vadd.f32 0.0, %v1072
    %v1074 = vpop.f32.mrf.mxu0
    %v1075 = vadd.f32 0.0, %v1074
    %1076 = vmatmul.bf16.gmra.mxu0 %v620
    %v1077 = vpop.f32.mrf.mxu0
    %v1078 = vadd.f32 0.0, %v1077
    %v1079 = vpop.f32.mrf.mxu0
    %v1080 = vadd.f32 0.0, %v1079
    %1081 = vmatmul.bf16.gmra.mxu0 %v621
    %v1082 = vpop.f32.mrf.mxu0
    %v1083 = vadd.f32 0.0, %v1082
    %v1084 = vpop.f32.mrf.mxu0
    %v1085 = vadd.f32 0.0, %v1084
    %1086 = vmatmul.bf16.gmra.mxu0 %v622
    %v1087 = vpop.f32.mrf.mxu0
    %v1088 = vadd.f32 0.0, %v1087
    %v1089 = vpop.f32.mrf.mxu0
    %v1090 = vadd.f32 0.0, %v1089
    %1091 = vmatmul.bf16.gmra.mxu0 %v623
    %v1092 = vpop.f32.mrf.mxu0
    %v1093 = vadd.f32 0.0, %v1092
    %v1094 = vpop.f32.mrf.mxu0
    %v1095 = vadd.f32 0.0, %v1094
    %1096 = vdwg.mxu0
    %1097 = vmatpush.bf16.msra.mxu0 %v937
    %1098 = vmatpush.bf16.msra.mxu0 %v929
    %1099 = vmatpush.bf16.msra.mxu0 %v921
    %1100 = vmatpush.bf16.msra.mxu0 %v913
    %1101 = vmatpush.bf16.msra.mxu0 %v905
    %1102 = vmatpush.bf16.msra.mxu0 %v897
    %1103 = vmatpush.bf16.msra.mxu0 %v889
    %1104 = vmatpush.bf16.msra.mxu0 %v881
    %1105 = vmatmul.bf16.gmra.mxu0 %v608
    %v1106 = vpop.f32.mrf.mxu0
    %v1107 = vadd.f32 0.0, %v1106
    %v1108 = vpop.f32.mrf.mxu0
    %v1109 = vadd.f32 0.0, %v1108
    %1110 = vmatmul.bf16.gmra.mxu0 %v609
    %v1111 = vpop.f32.mrf.mxu0
    %v1112 = vadd.f32 0.0, %v1111
    %v1113 = vpop.f32.mrf.mxu0
    %v1114 = vadd.f32 0.0, %v1113
    %1115 = vmatmul.bf16.gmra.mxu0 %v610
    %v1116 = vpop.f32.mrf.mxu0
    %v1117 = vadd.f32 0.0, %v1116
    %v1118 = vpop.f32.mrf.mxu0
    %v1119 = vadd.f32 0.0, %v1118
    %1120 = vmatmul.bf16.gmra.mxu0 %v611
    %v1121 = vpop.f32.mrf.mxu0
    %v1122 = vadd.f32 0.0, %v1121
    %v1123 = vpop.f32.mrf.mxu0
    %v1124 = vadd.f32 0.0, %v1123
    %1125 = vmatmul.bf16.gmra.mxu0 %v612
    %v1126 = vpop.f32.mrf.mxu0
    %v1127 = vadd.f32 0.0, %v1126
    %v1128 = vpop.f32.mrf.mxu0
    %v1129 = vadd.f32 0.0, %v1128
    %1130 = vmatmul.bf16.gmra.mxu0 %v613
    %v1131 = vpop.f32.mrf.mxu0
    %v1132 = vadd.f32 0.0, %v1131
    %v1133 = vpop.f32.mrf.mxu0
    %v1134 = vadd.f32 0.0, %v1133
    %1135 = vmatmul.bf16.gmra.mxu0 %v614
    %v1136 = vpop.f32.mrf.mxu0
    %v1137 = vadd.f32 0.0, %v1136
    %v1138 = vpop.f32.mrf.mxu0
    %v1139 = vadd.f32 0.0, %v1138
    %1140 = vmatmul.bf16.gmra.mxu0 %v615
    %v1141 = vpop.f32.mrf.mxu0
    %v1142 = vadd.f32 0.0, %v1141
    %v1143 = vpop.f32.mrf.mxu0
    %v1144 = vadd.f32 0.0, %v1143
    %1145 = vmatmul.bf16.gmra.mxu0 %v616
    %v1146 = vpop.f32.mrf.mxu0
    %v1147 = vadd.f32 0.0, %v1146
    %v1148 = vpop.f32.mrf.mxu0
    %v1149 = vadd.f32 0.0, %v1148
    %1150 = vmatmul.bf16.gmra.mxu0 %v617
    %v1151 = vpop.f32.mrf.mxu0
    %v1152 = vadd.f32 0.0, %v1151
    %v1153 = vpop.f32.mrf.mxu0
    %v1154 = vadd.f32 0.0, %v1153
    %1155 = vmatmul.bf16.gmra.mxu0 %v618
    %v1156 = vpop.f32.mrf.mxu0
    %v1157 = vadd.f32 0.0, %v1156
    %v1158 = vpop.f32.mrf.mxu0
    %v1159 = vadd.f32 0.0, %v1158
    %1160 = vmatmul.bf16.gmra.mxu0 %v619
    %v1161 = vpop.f32.mrf.mxu0
    %v1162 = vadd.f32 0.0, %v1161
    %v1163 = vpop.f32.mrf.mxu0
    %v1164 = vadd.f32 0.0, %v1163
    %1165 = vmatmul.bf16.gmra.mxu0 %v620
    %v1166 = vpop.f32.mrf.mxu0
    %v1167 = vadd.f32 0.0, %v1166
    %v1168 = vpop.f32.mrf.mxu0
    %v1169 = vadd.f32 0.0, %v1168
    %1170 = vmatmul.bf16.gmra.mxu0 %v621
    %v1171 = vpop.f32.mrf.mxu0
    %v1172 = vadd.f32 0.0, %v1171
    %v1173 = vpop.f32.mrf.mxu0
    %v1174 = vadd.f32 0.0, %v1173
    %1175 = vmatmul.bf16.gmra.mxu0 %v622
    %v1176 = vpop.f32.mrf.mxu0
    %v1177 = vadd.f32 0.0, %v1176
    %v1178 = vpop.f32.mrf.mxu0
    %v1179 = vadd.f32 0.0, %v1178
    %1180 = vmatmul.bf16.gmra.mxu0 %v623
    %v1181 = vpop.f32.mrf.mxu0
    %v1182 = vadd.f32 0.0, %v1181
    %v1183 = vpop.f32.mrf.mxu0
    %v1184 = vadd.f32 0.0, %v1183
    %1185 = vdwg.mxu0
    %1186 = vmatpush.bf16.msra.mxu0 %v938
    %1187 = vmatpush.bf16.msra.mxu0 %v930
    %1188 = vmatpush.bf16.msra.mxu0 %v922
    %1189 = vmatpush.bf16.msra.mxu0 %v914
    %1190 = vmatpush.bf16.msra.mxu0 %v906
    %1191 = vmatpush.bf16.msra.mxu0 %v898
    %1192 = vmatpush.bf16.msra.mxu0 %v890
    %1193 = vmatpush.bf16.msra.mxu0 %v882
    %1194 = vmatmul.bf16.gmra.mxu0 %v608
    %v1195 = vpop.f32.mrf.mxu0
    %v1196 = vadd.f32 0.0, %v1195
    %v1197 = vpop.f32.mrf.mxu0
    %v1198 = vadd.f32 0.0, %v1197
    %1199 = vmatmul.bf16.gmra.mxu0 %v609
    %v1200 = vpop.f32.mrf.mxu0
    %v1201 = vadd.f32 0.0, %v1200
    %v1202 = vpop.f32.mrf.mxu0
    %v1203 = vadd.f32 0.0, %v1202
    %1204 = vmatmul.bf16.gmra.mxu0 %v610
    %v1205 = vpop.f32.mrf.mxu0
    %v1206 = vadd.f32 0.0, %v1205
    %v1207 = vpop.f32.mrf.mxu0
    %v1208 = vadd.f32 0.0, %v1207
    %1209 = vmatmul.bf16.gmra.mxu0 %v611
    %v1210 = vpop.f32.mrf.mxu0
    %v1211 = vadd.f32 0.0, %v1210
    %v1212 = vpop.f32.mrf.mxu0
    %v1213 = vadd.f32 0.0, %v1212
    %1214 = vmatmul.bf16.gmra.mxu0 %v612
    %v1215 = vpop.f32.mrf.mxu0
    %v1216 = vadd.f32 0.0, %v1215
    %v1217 = vpop.f32.mrf.mxu0
    %v1218 = vadd.f32 0.0, %v1217
    %1219 = vmatmul.bf16.gmra.mxu0 %v613
    %v1220 = vpop.f32.mrf.mxu0
    %v1221 = vadd.f32 0.0, %v1220
    %v1222 = vpop.f32.mrf.mxu0
    %v1223 = vadd.f32 0.0, %v1222
    %1224 = vmatmul.bf16.gmra.mxu0 %v614
    %v1225 = vpop.f32.mrf.mxu0
    %v1226 = vadd.f32 0.0, %v1225
    %v1227 = vpop.f32.mrf.mxu0
    %v1228 = vadd.f32 0.0, %v1227
    %1229 = vmatmul.bf16.gmra.mxu0 %v615
    %v1230 = vpop.f32.mrf.mxu0
    %v1231 = vadd.f32 0.0, %v1230
    %v1232 = vpop.f32.mrf.mxu0
    %v1233 = vadd.f32 0.0, %v1232
    %1234 = vmatmul.bf16.gmra.mxu0 %v616
    %v1235 = vpop.f32.mrf.mxu0
    %v1236 = vadd.f32 0.0, %v1235
    %v1237 = vpop.f32.mrf.mxu0
    %v1238 = vadd.f32 0.0, %v1237
    %1239 = vmatmul.bf16.gmra.mxu0 %v617
    %v1240 = vpop.f32.mrf.mxu0
    %v1241 = vadd.f32 0.0, %v1240
    %v1242 = vpop.f32.mrf.mxu0
    %v1243 = vadd.f32 0.0, %v1242
    %1244 = vmatmul.bf16.gmra.mxu0 %v618
    %v1245 = vpop.f32.mrf.mxu0
    %v1246 = vadd.f32 0.0, %v1245
    %v1247 = vpop.f32.mrf.mxu0
    %v1248 = vadd.f32 0.0, %v1247
    %1249 = vmatmul.bf16.gmra.mxu0 %v619
    %v1250 = vpop.f32.mrf.mxu0
    %v1251 = vadd.f32 0.0, %v1250
    %v1252 = vpop.f32.mrf.mxu0
    %v1253 = vadd.f32 0.0, %v1252
    %1254 = vmatmul.bf16.gmra.mxu0 %v620
    %v1255 = vpop.f32.mrf.mxu0
    %v1256 = vadd.f32 0.0, %v1255
    %v1257 = vpop.f32.mrf.mxu0
    %v1258 = vadd.f32 0.0, %v1257
    %1259 = vmatmul.bf16.gmra.mxu0 %v621
    %v1260 = vpop.f32.mrf.mxu0
    %v1261 = vadd.f32 0.0, %v1260
    %v1262 = vpop.f32.mrf.mxu0
    %v1263 = vadd.f32 0.0, %v1262
    %1264 = vmatmul.bf16.gmra.mxu0 %v622
    %v1265 = vpop.f32.mrf.mxu0
    %v1266 = vadd.f32 0.0, %v1265
    %v1267 = vpop.f32.mrf.mxu0
    %v1268 = vadd.f32 0.0, %v1267
    %1269 = vmatmul.bf16.gmra.mxu0 %v623
    %v1270 = vpop.f32.mrf.mxu0
    %v1271 = vadd.f32 0.0, %v1270
    %v1272 = vpop.f32.mrf.mxu0
    %v1273 = vadd.f32 0.0, %v1272
    %1274 = vdwg.mxu0
    %1275 = vmatpush.bf16.msra.mxu0 %v939
    %1276 = vmatpush.bf16.msra.mxu0 %v931
    %1277 = vmatpush.bf16.msra.mxu0 %v923
    %1278 = vmatpush.bf16.msra.mxu0 %v915
    %1279 = vmatpush.bf16.msra.mxu0 %v907
    %1280 = vmatpush.bf16.msra.mxu0 %v899
    %1281 = vmatpush.bf16.msra.mxu0 %v891
    %1282 = vmatpush.bf16.msra.mxu0 %v883
    %1283 = vmatmul.bf16.gmra.mxu0 %v608
    %v1284 = vpop.f32.mrf.mxu0
    %v1285 = vadd.f32 0.0, %v1284
    %v1286 = vpop.f32.mrf.mxu0
    %v1287 = vadd.f32 0.0, %v1286
    %1288 = vmatmul.bf16.gmra.mxu0 %v609
    %v1289 = vpop.f32.mrf.mxu0
    %v1290 = vadd.f32 0.0, %v1289
    %v1291 = vpop.f32.mrf.mxu0
    %v1292 = vadd.f32 0.0, %v1291
    %1293 = vmatmul.bf16.gmra.mxu0 %v610
    %v1294 = vpop.f32.mrf.mxu0
    %v1295 = vadd.f32 0.0, %v1294
    %v1296 = vpop.f32.mrf.mxu0
    %v1297 = vadd.f32 0.0, %v1296
    %1298 = vmatmul.bf16.gmra.mxu0 %v611
    %v1299 = vpop.f32.mrf.mxu0
    %v1300 = vadd.f32 0.0, %v1299
    %v1301 = vpop.f32.mrf.mxu0
    %v1302 = vadd.f32 0.0, %v1301
    %1303 = vmatmul.bf16.gmra.mxu0 %v612
    %v1304 = vpop.f32.mrf.mxu0
    %v1305 = vadd.f32 0.0, %v1304
    %v1306 = vpop.f32.mrf.mxu0
    %v1307 = vadd.f32 0.0, %v1306
    %1308 = vmatmul.bf16.gmra.mxu0 %v613
    %v1309 = vpop.f32.mrf.mxu0
    %v1310 = vadd.f32 0.0, %v1309
    %v1311 = vpop.f32.mrf.mxu0
    %v1312 = vadd.f32 0.0, %v1311
    %1313 = vmatmul.bf16.gmra.mxu0 %v614
    %v1314 = vpop.f32.mrf.mxu0
    %v1315 = vadd.f32 0.0, %v1314
    %v1316 = vpop.f32.mrf.mxu0
    %v1317 = vadd.f32 0.0, %v1316
    %1318 = vmatmul.bf16.gmra.mxu0 %v615
    %v1319 = vpop.f32.mrf.mxu0
    %v1320 = vadd.f32 0.0, %v1319
    %v1321 = vpop.f32.mrf.mxu0
    %v1322 = vadd.f32 0.0, %v1321
    %1323 = vmatmul.bf16.gmra.mxu0 %v616
    %v1324 = vpop.f32.mrf.mxu0
    %v1325 = vadd.f32 0.0, %v1324
    %v1326 = vpop.f32.mrf.mxu0
    %v1327 = vadd.f32 0.0, %v1326
    %1328 = vmatmul.bf16.gmra.mxu0 %v617
    %v1329 = vpop.f32.mrf.mxu0
    %v1330 = vadd.f32 0.0, %v1329
    %v1331 = vpop.f32.mrf.mxu0
    %v1332 = vadd.f32 0.0, %v1331
    %1333 = vmatmul.bf16.gmra.mxu0 %v618
    %v1334 = vpop.f32.mrf.mxu0
    %v1335 = vadd.f32 0.0, %v1334
    %v1336 = vpop.f32.mrf.mxu0
    %v1337 = vadd.f32 0.0, %v1336
    %1338 = vmatmul.bf16.gmra.mxu0 %v619
    %v1339 = vpop.f32.mrf.mxu0
    %v1340 = vadd.f32 0.0, %v1339
    %v1341 = vpop.f32.mrf.mxu0
    %v1342 = vadd.f32 0.0, %v1341
    %1343 = vmatmul.bf16.gmra.mxu0 %v620
    %v1344 = vpop.f32.mrf.mxu0
    %v1345 = vadd.f32 0.0, %v1344
    %v1346 = vpop.f32.mrf.mxu0
    %v1347 = vadd.f32 0.0, %v1346
    %1348 = vmatmul.bf16.gmra.mxu0 %v621
    %v1349 = vpop.f32.mrf.mxu0
    %v1350 = vadd.f32 0.0, %v1349
    %v1351 = vpop.f32.mrf.mxu0
    %v1352 = vadd.f32 0.0, %v1351
    %1353 = vmatmul.bf16.gmra.mxu0 %v622
    %v1354 = vpop.f32.mrf.mxu0
    %v1355 = vadd.f32 0.0, %v1354
    %v1356 = vpop.f32.mrf.mxu0
    %v1357 = vadd.f32 0.0, %v1356
    %1358 = vmatmul.bf16.gmra.mxu0 %v623
    %v1359 = vpop.f32.mrf.mxu0
    %v1360 = vadd.f32 0.0, %v1359
    %v1361 = vpop.f32.mrf.mxu0
    %v1362 = vadd.f32 0.0, %v1361
    %1363 = vdwg.mxu0
    %1364 = vmatpush.bf16.msra.mxu0 %v940
    %1365 = vmatpush.bf16.msra.mxu0 %v932
    %1366 = vmatpush.bf16.msra.mxu0 %v924
    %1367 = vmatpush.bf16.msra.mxu0 %v916
    %1368 = vmatpush.bf16.msra.mxu0 %v908
    %1369 = vmatpush.bf16.msra.mxu0 %v900
    %1370 = vmatpush.bf16.msra.mxu0 %v892
    %1371 = vmatpush.bf16.msra.mxu0 %v884
    %1372 = vmatmul.bf16.gmra.mxu0 %v608
    %v1373 = vpop.f32.mrf.mxu0
    %v1374 = vadd.f32 0.0, %v1373
    %v1375 = vpop.f32.mrf.mxu0
    %v1376 = vadd.f32 0.0, %v1375
    %1377 = vmatmul.bf16.gmra.mxu0 %v609
    %v1378 = vpop.f32.mrf.mxu0
    %v1379 = vadd.f32 0.0, %v1378
    %v1380 = vpop.f32.mrf.mxu0
    %v1381 = vadd.f32 0.0, %v1380
    %1382 = vmatmul.bf16.gmra.mxu0 %v610
    %v1383 = vpop.f32.mrf.mxu0
    %v1384 = vadd.f32 0.0, %v1383
    %v1385 = vpop.f32.mrf.mxu0
    %v1386 = vadd.f32 0.0, %v1385
    %1387 = vmatmul.bf16.gmra.mxu0 %v611
    %v1388 = vpop.f32.mrf.mxu0
    %v1389 = vadd.f32 0.0, %v1388
    %v1390 = vpop.f32.mrf.mxu0
    %v1391 = vadd.f32 0.0, %v1390
    %1392 = vmatmul.bf16.gmra.mxu0 %v612
    %v1393 = vpop.f32.mrf.mxu0
    %v1394 = vadd.f32 0.0, %v1393
    %v1395 = vpop.f32.mrf.mxu0
    %v1396 = vadd.f32 0.0, %v1395
    %1397 = vmatmul.bf16.gmra.mxu0 %v613
    %v1398 = vpop.f32.mrf.mxu0
    %v1399 = vadd.f32 0.0, %v1398
    %v1400 = vpop.f32.mrf.mxu0
    %v1401 = vadd.f32 0.0, %v1400
    %1402 = vmatmul.bf16.gmra.mxu0 %v614
    %v1403 = vpop.f32.mrf.mxu0
    %v1404 = vadd.f32 0.0, %v1403
    %v1405 = vpop.f32.mrf.mxu0
    %v1406 = vadd.f32 0.0, %v1405
    %1407 = vmatmul.bf16.gmra.mxu0 %v615
    %v1408 = vpop.f32.mrf.mxu0
    %v1409 = vadd.f32 0.0, %v1408
    %v1410 = vpop.f32.mrf.mxu0
    %v1411 = vadd.f32 0.0, %v1410
    %1412 = vmatmul.bf16.gmra.mxu0 %v616
    %v1413 = vpop.f32.mrf.mxu0
    %v1414 = vadd.f32 0.0, %v1413
    %v1415 = vpop.f32.mrf.mxu0
    %v1416 = vadd.f32 0.0, %v1415
    %1417 = vmatmul.bf16.gmra.mxu0 %v617
    %v1418 = vpop.f32.mrf.mxu0
    %v1419 = vadd.f32 0.0, %v1418
    %v1420 = vpop.f32.mrf.mxu0
    %v1421 = vadd.f32 0.0, %v1420
    %1422 = vmatmul.bf16.gmra.mxu0 %v618
    %v1423 = vpop.f32.mrf.mxu0
    %v1424 = vadd.f32 0.0, %v1423
    %v1425 = vpop.f32.mrf.mxu0
    %v1426 = vadd.f32 0.0, %v1425
    %1427 = vmatmul.bf16.gmra.mxu0 %v619
    %v1428 = vpop.f32.mrf.mxu0
    %v1429 = vadd.f32 0.0, %v1428
    %v1430 = vpop.f32.mrf.mxu0
    %v1431 = vadd.f32 0.0, %v1430
    %1432 = vmatmul.bf16.gmra.mxu0 %v620
    %v1433 = vpop.f32.mrf.mxu0
    %v1434 = vadd.f32 0.0, %v1433
    %v1435 = vpop.f32.mrf.mxu0
    %v1436 = vadd.f32 0.0, %v1435
    %1437 = vmatmul.bf16.gmra.mxu0 %v621
    %v1438 = vpop.f32.mrf.mxu0
    %v1439 = vadd.f32 0.0, %v1438
    %v1440 = vpop.f32.mrf.mxu0
    %v1441 = vadd.f32 0.0, %v1440
    %1442 = vmatmul.bf16.gmra.mxu0 %v622
    %v1443 = vpop.f32.mrf.mxu0
    %v1444 = vadd.f32 0.0, %v1443
    %v1445 = vpop.f32.mrf.mxu0
    %v1446 = vadd.f32 0.0, %v1445
    %1447 = vmatmul.bf16.gmra.mxu0 %v623
    %v1448 = vpop.f32.mrf.mxu0
    %v1449 = vadd.f32 0.0, %v1448
    %v1450 = vpop.f32.mrf.mxu0
    %v1451 = vadd.f32 0.0, %v1450
    %1452 = vdwg.mxu0
    %1453 = vmatpush.bf16.msra.mxu0 %v941
    %1454 = vmatpush.bf16.msra.mxu0 %v933
    %1455 = vmatpush.bf16.msra.mxu0 %v925
    %1456 = vmatpush.bf16.msra.mxu0 %v917
    %1457 = vmatpush.bf16.msra.mxu0 %v909
    %1458 = vmatpush.bf16.msra.mxu0 %v901
    %1459 = vmatpush.bf16.msra.mxu0 %v893
    %1460 = vmatpush.bf16.msra.mxu0 %v885
    %1461 = vmatmul.bf16.gmra.mxu0 %v608
    %v1462 = vpop.f32.mrf.mxu0
    %v1463 = vadd.f32 0.0, %v1462
    %v1464 = vpop.f32.mrf.mxu0
    %v1465 = vadd.f32 0.0, %v1464
    %1466 = vmatmul.bf16.gmra.mxu0 %v609
    %v1467 = vpop.f32.mrf.mxu0
    %v1468 = vadd.f32 0.0, %v1467
    %v1469 = vpop.f32.mrf.mxu0
    %v1470 = vadd.f32 0.0, %v1469
    %1471 = vmatmul.bf16.gmra.mxu0 %v610
    %v1472 = vpop.f32.mrf.mxu0
    %v1473 = vadd.f32 0.0, %v1472
    %v1474 = vpop.f32.mrf.mxu0
    %v1475 = vadd.f32 0.0, %v1474
    %1476 = vmatmul.bf16.gmra.mxu0 %v611
    %v1477 = vpop.f32.mrf.mxu0
    %v1478 = vadd.f32 0.0, %v1477
    %v1479 = vpop.f32.mrf.mxu0
    %v1480 = vadd.f32 0.0, %v1479
    %1481 = vmatmul.bf16.gmra.mxu0 %v612
    %v1482 = vpop.f32.mrf.mxu0
    %v1483 = vadd.f32 0.0, %v1482
    %v1484 = vpop.f32.mrf.mxu0
    %v1485 = vadd.f32 0.0, %v1484
    %1486 = vmatmul.bf16.gmra.mxu0 %v613
    %v1487 = vpop.f32.mrf.mxu0
    %v1488 = vadd.f32 0.0, %v1487
    %v1489 = vpop.f32.mrf.mxu0
    %v1490 = vadd.f32 0.0, %v1489
    %1491 = vmatmul.bf16.gmra.mxu0 %v614
    %v1492 = vpop.f32.mrf.mxu0
    %v1493 = vadd.f32 0.0, %v1492
    %v1494 = vpop.f32.mrf.mxu0
    %v1495 = vadd.f32 0.0, %v1494
    %1496 = vmatmul.bf16.gmra.mxu0 %v615
    %v1497 = vpop.f32.mrf.mxu0
    %v1498 = vadd.f32 0.0, %v1497
    %v1499 = vpop.f32.mrf.mxu0
    %v1500 = vadd.f32 0.0, %v1499
    %1501 = vmatmul.bf16.gmra.mxu0 %v616
    %v1502 = vpop.f32.mrf.mxu0
    %v1503 = vadd.f32 0.0, %v1502
    %v1504 = vpop.f32.mrf.mxu0
    %v1505 = vadd.f32 0.0, %v1504
    %1506 = vmatmul.bf16.gmra.mxu0 %v617
    %v1507 = vpop.f32.mrf.mxu0
    %v1508 = vadd.f32 0.0, %v1507
    %v1509 = vpop.f32.mrf.mxu0
    %v1510 = vadd.f32 0.0, %v1509
    %1511 = vmatmul.bf16.gmra.mxu0 %v618
    %v1512 = vpop.f32.mrf.mxu0
    %v1513 = vadd.f32 0.0, %v1512
    %v1514 = vpop.f32.mrf.mxu0
    %v1515 = vadd.f32 0.0, %v1514
    %1516 = vmatmul.bf16.gmra.mxu0 %v619
    %v1517 = vpop.f32.mrf.mxu0
    %v1518 = vadd.f32 0.0, %v1517
    %v1519 = vpop.f32.mrf.mxu0
    %v1520 = vadd.f32 0.0, %v1519
    %1521 = vmatmul.bf16.gmra.mxu0 %v620
    %v1522 = vpop.f32.mrf.mxu0
    %v1523 = vadd.f32 0.0, %v1522
    %v1524 = vpop.f32.mrf.mxu0
    %v1525 = vadd.f32 0.0, %v1524
    %1526 = vmatmul.bf16.gmra.mxu0 %v621
    %v1527 = vpop.f32.mrf.mxu0
    %v1528 = vadd.f32 0.0, %v1527
    %v1529 = vpop.f32.mrf.mxu0
    %v1530 = vadd.f32 0.0, %v1529
    %1531 = vmatmul.bf16.gmra.mxu0 %v622
    %v1532 = vpop.f32.mrf.mxu0
    %v1533 = vadd.f32 0.0, %v1532
    %v1534 = vpop.f32.mrf.mxu0
    %v1535 = vadd.f32 0.0, %v1534
    %1536 = vmatmul.bf16.gmra.mxu0 %v623
    %v1537 = vpop.f32.mrf.mxu0
    %v1538 = vadd.f32 0.0, %v1537
    %v1539 = vpop.f32.mrf.mxu0
    %v1540 = vadd.f32 0.0, %v1539
    %1541 = vdwg.mxu0
    %1542 = vmatpush.bf16.msra.mxu0 %v942
    %1543 = vmatpush.bf16.msra.mxu0 %v934
    %1544 = vmatpush.bf16.msra.mxu0 %v926
    %1545 = vmatpush.bf16.msra.mxu0 %v918
    %1546 = vmatpush.bf16.msra.mxu0 %v910
    %1547 = vmatpush.bf16.msra.mxu0 %v902
    %1548 = vmatpush.bf16.msra.mxu0 %v894
    %1549 = vmatpush.bf16.msra.mxu0 %v886
    %1550 = vmatmul.bf16.gmra.mxu0 %v608
    %v1551 = vpop.f32.mrf.mxu0
    %v1552 = vadd.f32 0.0, %v1551
    %v1553 = vpop.f32.mrf.mxu0
    %v1554 = vadd.f32 0.0, %v1553
    %1555 = vmatmul.bf16.gmra.mxu0 %v609
    %v1556 = vpop.f32.mrf.mxu0
    %v1557 = vadd.f32 0.0, %v1556
    %v1558 = vpop.f32.mrf.mxu0
    %v1559 = vadd.f32 0.0, %v1558
    %1560 = vmatmul.bf16.gmra.mxu0 %v610
    %v1561 = vpop.f32.mrf.mxu0
    %v1562 = vadd.f32 0.0, %v1561
    %v1563 = vpop.f32.mrf.mxu0
    %v1564 = vadd.f32 0.0, %v1563
    %1565 = vmatmul.bf16.gmra.mxu0 %v611
    %v1566 = vpop.f32.mrf.mxu0
    %v1567 = vadd.f32 0.0, %v1566
    %v1568 = vpop.f32.mrf.mxu0
    %v1569 = vadd.f32 0.0, %v1568
    %1570 = vmatmul.bf16.gmra.mxu0 %v612
    %v1571 = vpop.f32.mrf.mxu0
    %v1572 = vadd.f32 0.0, %v1571
    %v1573 = vpop.f32.mrf.mxu0
    %v1574 = vadd.f32 0.0, %v1573
    %1575 = vmatmul.bf16.gmra.mxu0 %v613
    %v1576 = vpop.f32.mrf.mxu0
    %v1577 = vadd.f32 0.0, %v1576
    %v1578 = vpop.f32.mrf.mxu0
    %v1579 = vadd.f32 0.0, %v1578
    %1580 = vmatmul.bf16.gmra.mxu0 %v614
    %v1581 = vpop.f32.mrf.mxu0
    %v1582 = vadd.f32 0.0, %v1581
    %v1583 = vpop.f32.mrf.mxu0
    %v1584 = vadd.f32 0.0, %v1583
    %1585 = vmatmul.bf16.gmra.mxu0 %v615
    %v1586 = vpop.f32.mrf.mxu0
    %v1587 = vadd.f32 0.0, %v1586
    %v1588 = vpop.f32.mrf.mxu0
    %v1589 = vadd.f32 0.0, %v1588
    %1590 = vmatmul.bf16.gmra.mxu0 %v616
    %v1591 = vpop.f32.mrf.mxu0
    %v1592 = vadd.f32 0.0, %v1591
    %v1593 = vpop.f32.mrf.mxu0
    %v1594 = vadd.f32 0.0, %v1593
    %1595 = vmatmul.bf16.gmra.mxu0 %v617
    %v1596 = vpop.f32.mrf.mxu0
    %v1597 = vadd.f32 0.0, %v1596
    %v1598 = vpop.f32.mrf.mxu0
    %v1599 = vadd.f32 0.0, %v1598
    %1600 = vmatmul.bf16.gmra.mxu0 %v618
    %v1601 = vpop.f32.mrf.mxu0
    %v1602 = vadd.f32 0.0, %v1601
    %v1603 = vpop.f32.mrf.mxu0
    %v1604 = vadd.f32 0.0, %v1603
    %1605 = vmatmul.bf16.gmra.mxu0 %v619
    %v1606 = vpop.f32.mrf.mxu0
    %v1607 = vadd.f32 0.0, %v1606
    %v1608 = vpop.f32.mrf.mxu0
    %v1609 = vadd.f32 0.0, %v1608
    %1610 = vmatmul.bf16.gmra.mxu0 %v620
    %v1611 = vpop.f32.mrf.mxu0
    %v1612 = vadd.f32 0.0, %v1611
    %v1613 = vpop.f32.mrf.mxu0
    %v1614 = vadd.f32 0.0, %v1613
    %1615 = vmatmul.bf16.gmra.mxu0 %v621
    %v1616 = vpop.f32.mrf.mxu0
    %v1617 = vadd.f32 0.0, %v1616
    %v1618 = vpop.f32.mrf.mxu0
    %v1619 = vadd.f32 0.0, %v1618
    %1620 = vmatmul.bf16.gmra.mxu0 %v622
    %v1621 = vpop.f32.mrf.mxu0
    %v1622 = vadd.f32 0.0, %v1621
    %v1623 = vpop.f32.mrf.mxu0
    %v1624 = vadd.f32 0.0, %v1623
    %1625 = vmatmul.bf16.gmra.mxu0 %v623
    %v1626 = vpop.f32.mrf.mxu0
    %v1627 = vadd.f32 0.0, %v1626
    %v1628 = vpop.f32.mrf.mxu0
    %v1629 = vadd.f32 0.0, %v1628
    %1630 = vdwg.mxu0
    %1631 = vmatpush.bf16.msra.mxu0 %v943
    %1632 = vmatpush.bf16.msra.mxu0 %v935
    %1633 = vmatpush.bf16.msra.mxu0 %v927
    %1634 = vmatpush.bf16.msra.mxu0 %v919
    %1635 = vmatpush.bf16.msra.mxu0 %v911
    %1636 = vmatpush.bf16.msra.mxu0 %v903
    %1637 = vmatpush.bf16.msra.mxu0 %v895
    %1638 = vmatpush.bf16.msra.mxu0 %v887
    %1639 = vmatmul.bf16.gmra.mxu0 %v608
    %v1640 = vpop.f32.mrf.mxu0
    %v1641 = vadd.f32 0.0, %v1640
    %v1642 = vpop.f32.mrf.mxu0
    %v1643 = vadd.f32 0.0, %v1642
    %1644 = vmatmul.bf16.gmra.mxu0 %v609
    %v1645 = vpop.f32.mrf.mxu0
    %v1646 = vadd.f32 0.0, %v1645
    %v1647 = vpop.f32.mrf.mxu0
    %v1648 = vadd.f32 0.0, %v1647
    %1649 = vmatmul.bf16.gmra.mxu0 %v610
    %v1650 = vpop.f32.mrf.mxu0
    %v1651 = vadd.f32 0.0, %v1650
    %v1652 = vpop.f32.mrf.mxu0
    %v1653 = vadd.f32 0.0, %v1652
    %1654 = vmatmul.bf16.gmra.mxu0 %v611
    %v1655 = vpop.f32.mrf.mxu0
    %v1656 = vadd.f32 0.0, %v1655
    %v1657 = vpop.f32.mrf.mxu0
    %v1658 = vadd.f32 0.0, %v1657
    %1659 = vmatmul.bf16.gmra.mxu0 %v612
    %v1660 = vpop.f32.mrf.mxu0
    %v1661 = vadd.f32 0.0, %v1660
    %v1662 = vpop.f32.mrf.mxu0
    %v1663 = vadd.f32 0.0, %v1662
    %1664 = vmatmul.bf16.gmra.mxu0 %v613
    %v1665 = vpop.f32.mrf.mxu0
    %v1666 = vadd.f32 0.0, %v1665
    %v1667 = vpop.f32.mrf.mxu0
    %v1668 = vadd.f32 0.0, %v1667
    %1669 = vmatmul.bf16.gmra.mxu0 %v614
    %v1670 = vpop.f32.mrf.mxu0
    %v1671 = vadd.f32 0.0, %v1670
    %v1672 = vpop.f32.mrf.mxu0
    %v1673 = vadd.f32 0.0, %v1672
    %1674 = vmatmul.bf16.gmra.mxu0 %v615
    %v1675 = vpop.f32.mrf.mxu0
    %v1676 = vadd.f32 0.0, %v1675
    %v1677 = vpop.f32.mrf.mxu0
    %v1678 = vadd.f32 0.0, %v1677
    %1679 = vmatmul.bf16.gmra.mxu0 %v616
    %v1680 = vpop.f32.mrf.mxu0
    %v1681 = vadd.f32 0.0, %v1680
    %v1682 = vpop.f32.mrf.mxu0
    %v1683 = vadd.f32 0.0, %v1682
    %1684 = vmatmul.bf16.gmra.mxu0 %v617
    %v1685 = vpop.f32.mrf.mxu0
    %v1686 = vadd.f32 0.0, %v1685
    %v1687 = vpop.f32.mrf.mxu0
    %v1688 = vadd.f32 0.0, %v1687
    %1689 = vmatmul.bf16.gmra.mxu0 %v618
    %v1690 = vpop.f32.mrf.mxu0
    %v1691 = vadd.f32 0.0, %v1690
    %v1692 = vpop.f32.mrf.mxu0
    %v1693 = vadd.f32 0.0, %v1692
    %1694 = vmatmul.bf16.gmra.mxu0 %v619
    %v1695 = vpop.f32.mrf.mxu0
    %v1696 = vadd.f32 0.0, %v1695
    %v1697 = vpop.f32.mrf.mxu0
    %v1698 = vadd.f32 0.0, %v1697
    %1699 = vmatmul.bf16.gmra.mxu0 %v620
    %v1700 = vpop.f32.mrf.mxu0
    %v1701 = vadd.f32 0.0, %v1700
    %v1702 = vpop.f32.mrf.mxu0
    %v1703 = vadd.f32 0.0, %v1702
    %1704 = vmatmul.bf16.gmra.mxu0 %v621
    %v1705 = vpop.f32.mrf.mxu0
    %v1706 = vadd.f32 0.0, %v1705
    %v1707 = vpop.f32.mrf.mxu0
    %v1708 = vadd.f32 0.0, %v1707
    %1709 = vmatmul.bf16.gmra.mxu0 %v622
    %v1710 = vpop.f32.mrf.mxu0
    %v1711 = vadd.f32 0.0, %v1710
    %v1712 = vpop.f32.mrf.mxu0
    %v1713 = vadd.f32 0.0, %v1712
    %1714 = vmatmul.bf16.gmra.mxu0 %v623
    %v1715 = vpop.f32.mrf.mxu0
    %v1716 = vadd.f32 0.0, %v1715
    %v1717 = vpop.f32.mrf.mxu0
    %v1718 = vadd.f32 0.0, %v1717
    %1719 = vdwg.mxu0
    %v1720 = vadd.f32 %v320, %v1018
    %v1721 = vadd.f32 %v321, %v1107
    %v1722 = vadd.f32 %v322, %v1196
    %v1723 = vadd.f32 %v323, %v1285
    %v1724 = vadd.f32 %v324, %v1374
    %v1725 = vadd.f32 %v325, %v1463
    %v1726 = vadd.f32 %v326, %v1552
    %v1727 = vadd.f32 %v327, %v1641
    %v1728 = vadd.f32 %v328, %v1020
    %v1729 = vadd.f32 %v329, %v1109
    %v1730 = vadd.f32 %v330, %v1198
    %v1731 = vadd.f32 %v331, %v1287
    %v1732 = vadd.f32 %v332, %v1376
    %v1733 = vadd.f32 %v333, %v1465
    %v1734 = vadd.f32 %v334, %v1554
    %v1735 = vadd.f32 %v335, %v1643
    %v1736 = vadd.f32 %v336, %v1023
    %v1737 = vadd.f32 %v337, %v1112
    %v1738 = vadd.f32 %v338, %v1201
    %v1739 = vadd.f32 %v339, %v1290
    %v1740 = vadd.f32 %v340, %v1379
    %v1741 = vadd.f32 %v341, %v1468
    %v1742 = vadd.f32 %v342, %v1557
    %v1743 = vadd.f32 %v343, %v1646
    %v1744 = vadd.f32 %v344, %v1025
    %v1745 = vadd.f32 %v345, %v1114
    %v1746 = vadd.f32 %v346, %v1203
    %v1747 = vadd.f32 %v347, %v1292
    %v1748 = vadd.f32 %v348, %v1381
    %v1749 = vadd.f32 %v349, %v1470
    %v1750 = vadd.f32 %v350, %v1559
    %v1751 = vadd.f32 %v351, %v1648
    %v1752 = vadd.f32 %v352, %v1028
    %v1753 = vadd.f32 %v353, %v1117
    %v1754 = vadd.f32 %v354, %v1206
    %v1755 = vadd.f32 %v355, %v1295
    %v1756 = vadd.f32 %v356, %v1384
    %v1757 = vadd.f32 %v357, %v1473
    %v1758 = vadd.f32 %v358, %v1562
    %v1759 = vadd.f32 %v359, %v1651
    %v1760 = vadd.f32 %v360, %v1030
    %v1761 = vadd.f32 %v361, %v1119
    %v1762 = vadd.f32 %v362, %v1208
    %v1763 = vadd.f32 %v363, %v1297
    %v1764 = vadd.f32 %v364, %v1386
    %v1765 = vadd.f32 %v365, %v1475
    %v1766 = vadd.f32 %v366, %v1564
    %v1767 = vadd.f32 %v367, %v1653
    %v1768 = vadd.f32 %v368, %v1033
    %v1769 = vadd.f32 %v369, %v1122
    %v1770 = vadd.f32 %v370, %v1211
    %v1771 = vadd.f32 %v371, %v1300
    %v1772 = vadd.f32 %v372, %v1389
    %v1773 = vadd.f32 %v373, %v1478
    %v1774 = vadd.f32 %v374, %v1567
    %v1775 = vadd.f32 %v375, %v1656
    %v1776 = vadd.f32 %v376, %v1035
    %v1777 = vadd.f32 %v377, %v1124
    %v1778 = vadd.f32 %v378, %v1213
    %v1779 = vadd.f32 %v379, %v1302
    %v1780 = vadd.f32 %v380, %v1391
    %v1781 = vadd.f32 %v381, %v1480
    %v1782 = vadd.f32 %v382, %v1569
    %v1783 = vadd.f32 %v383, %v1658
    %v1784 = vadd.f32 %v384, %v1038
    %v1785 = vadd.f32 %v385, %v1127
    %v1786 = vadd.f32 %v386, %v1216
    %v1787 = vadd.f32 %v387, %v1305
    %v1788 = vadd.f32 %v388, %v1394
    %v1789 = vadd.f32 %v389, %v1483
    %v1790 = vadd.f32 %v390, %v1572
    %v1791 = vadd.f32 %v391, %v1661
    %v1792 = vadd.f32 %v392, %v1040
    %v1793 = vadd.f32 %v393, %v1129
    %v1794 = vadd.f32 %v394, %v1218
    %v1795 = vadd.f32 %v395, %v1307
    %v1796 = vadd.f32 %v396, %v1396
    %v1797 = vadd.f32 %v397, %v1485
    %v1798 = vadd.f32 %v398, %v1574
    %v1799 = vadd.f32 %v399, %v1663
    %v1800 = vadd.f32 %v400, %v1043
    %v1801 = vadd.f32 %v401, %v1132
    %v1802 = vadd.f32 %v402, %v1221
    %v1803 = vadd.f32 %v403, %v1310
    %v1804 = vadd.f32 %v404, %v1399
    %v1805 = vadd.f32 %v405, %v1488
    %v1806 = vadd.f32 %v406, %v1577
    %v1807 = vadd.f32 %v407, %v1666
    %v1808 = vadd.f32 %v408, %v1045
    %v1809 = vadd.f32 %v409, %v1134
    %v1810 = vadd.f32 %v410, %v1223
    %v1811 = vadd.f32 %v411, %v1312
    %v1812 = vadd.f32 %v412, %v1401
    %v1813 = vadd.f32 %v413, %v1490
    %v1814 = vadd.f32 %v414, %v1579
    %v1815 = vadd.f32 %v415, %v1668
    %v1816 = vadd.f32 %v416, %v1048
    %v1817 = vadd.f32 %v417, %v1137
    %v1818 = vadd.f32 %v418, %v1226
    %v1819 = vadd.f32 %v419, %v1315
    %v1820 = vadd.f32 %v420, %v1404
    %v1821 = vadd.f32 %v421, %v1493
    %v1822 = vadd.f32 %v422, %v1582
    %v1823 = vadd.f32 %v423, %v1671
    %v1824 = vadd.f32 %v424, %v1050
    %v1825 = vadd.f32 %v425, %v1139
    %v1826 = vadd.f32 %v426, %v1228
    %v1827 = vadd.f32 %v427, %v1317
    %v1828 = vadd.f32 %v428, %v1406
    %v1829 = vadd.f32 %v429, %v1495
    %v1830 = vadd.f32 %v430, %v1584
    %v1831 = vadd.f32 %v431, %v1673
    %v1832 = vadd.f32 %v432, %v1053
    %v1833 = vadd.f32 %v433, %v1142
    %v1834 = vadd.f32 %v434, %v1231
    %v1835 = vadd.f32 %v435, %v1320
    %v1836 = vadd.f32 %v436, %v1409
    %v1837 = vadd.f32 %v437, %v1498
    %v1838 = vadd.f32 %v438, %v1587
    %v1839 = vadd.f32 %v439, %v1676
    %v1840 = vadd.f32 %v440, %v1055
    %v1841 = vadd.f32 %v441, %v1144
    %v1842 = vadd.f32 %v442, %v1233
    %v1843 = vadd.f32 %v443, %v1322
    %v1844 = vadd.f32 %v444, %v1411
    %v1845 = vadd.f32 %v445, %v1500
    %v1846 = vadd.f32 %v446, %v1589
    %v1847 = vadd.f32 %v447, %v1678
    %v1848 = vadd.f32 %v448, %v1058
    %v1849 = vadd.f32 %v449, %v1147
    %v1850 = vadd.f32 %v450, %v1236
    %v1851 = vadd.f32 %v451, %v1325
    %v1852 = vadd.f32 %v452, %v1414
    %v1853 = vadd.f32 %v453, %v1503
    %v1854 = vadd.f32 %v454, %v1592
    %v1855 = vadd.f32 %v455, %v1681
    %v1856 = vadd.f32 %v456, %v1060
    %v1857 = vadd.f32 %v457, %v1149
    %v1858 = vadd.f32 %v458, %v1238
    %v1859 = vadd.f32 %v459, %v1327
    %v1860 = vadd.f32 %v460, %v1416
    %v1861 = vadd.f32 %v461, %v1505
    %v1862 = vadd.f32 %v462, %v1594
    %v1863 = vadd.f32 %v463, %v1683
    %v1864 = vadd.f32 %v464, %v1063
    %v1865 = vadd.f32 %v465, %v1152
    %v1866 = vadd.f32 %v466, %v1241
    %v1867 = vadd.f32 %v467, %v1330
    %v1868 = vadd.f32 %v468, %v1419
    %v1869 = vadd.f32 %v469, %v1508
    %v1870 = vadd.f32 %v470, %v1597
    %v1871 = vadd.f32 %v471, %v1686
    %v1872 = vadd.f32 %v472, %v1065
    %v1873 = vadd.f32 %v473, %v1154
    %v1874 = vadd.f32 %v474, %v1243
    %v1875 = vadd.f32 %v475, %v1332
    %v1876 = vadd.f32 %v476, %v1421
    %v1877 = vadd.f32 %v477, %v1510
    %v1878 = vadd.f32 %v478, %v1599
    %v1879 = vadd.f32 %v479, %v1688
    %v1880 = vadd.f32 %v480, %v1068
    %v1881 = vadd.f32 %v481, %v1157
    %v1882 = vadd.f32 %v482, %v1246
    %v1883 = vadd.f32 %v483, %v1335
    %v1884 = vadd.f32 %v484, %v1424
    %v1885 = vadd.f32 %v485, %v1513
    %v1886 = vadd.f32 %v486, %v1602
    %v1887 = vadd.f32 %v487, %v1691
    %v1888 = vadd.f32 %v488, %v1070
    %v1889 = vadd.f32 %v489, %v1159
    %v1890 = vadd.f32 %v490, %v1248
    %v1891 = vadd.f32 %v491, %v1337
    %v1892 = vadd.f32 %v492, %v1426
    %v1893 = vadd.f32 %v493, %v1515
    %v1894 = vadd.f32 %v494, %v1604
    %v1895 = vadd.f32 %v495, %v1693
    %v1896 = vadd.f32 %v496, %v1073
    %v1897 = vadd.f32 %v497, %v1162
    %v1898 = vadd.f32 %v498, %v1251
    %v1899 = vadd.f32 %v499, %v1340
    %v1900 = vadd.f32 %v500, %v1429
    %v1901 = vadd.f32 %v501, %v1518
    %v1902 = vadd.f32 %v502, %v1607
    %v1903 = vadd.f32 %v503, %v1696
    %v1904 = vadd.f32 %v504, %v1075
    %v1905 = vadd.f32 %v505, %v1164
    %v1906 = vadd.f32 %v506, %v1253
    %v1907 = vadd.f32 %v507, %v1342
    %v1908 = vadd.f32 %v508, %v1431
    %v1909 = vadd.f32 %v509, %v1520
    %v1910 = vadd.f32 %v510, %v1609
    %v1911 = vadd.f32 %v511, %v1698
    %v1912 = vadd.f32 %v512, %v1078
    %v1913 = vadd.f32 %v513, %v1167
    %v1914 = vadd.f32 %v514, %v1256
    %v1915 = vadd.f32 %v515, %v1345
    %v1916 = vadd.f32 %v516, %v1434
    %v1917 = vadd.f32 %v517, %v1523
    %v1918 = vadd.f32 %v518, %v1612
    %v1919 = vadd.f32 %v519, %v1701
    %v1920 = vadd.f32 %v520, %v1080
    %v1921 = vadd.f32 %v521, %v1169
    %v1922 = vadd.f32 %v522, %v1258
    %v1923 = vadd.f32 %v523, %v1347
    %v1924 = vadd.f32 %v524, %v1436
    %v1925 = vadd.f32 %v525, %v1525
    %v1926 = vadd.f32 %v526, %v1614
    %v1927 = vadd.f32 %v527, %v1703
    %v1928 = vadd.f32 %v528, %v1083
    %v1929 = vadd.f32 %v529, %v1172
    %v1930 = vadd.f32 %v530, %v1261
    %v1931 = vadd.f32 %v531, %v1350
    %v1932 = vadd.f32 %v532, %v1439
    %v1933 = vadd.f32 %v533, %v1528
    %v1934 = vadd.f32 %v534, %v1617
    %v1935 = vadd.f32 %v535, %v1706
    %v1936 = vadd.f32 %v536, %v1085
    %v1937 = vadd.f32 %v537, %v1174
    %v1938 = vadd.f32 %v538, %v1263
    %v1939 = vadd.f32 %v539, %v1352
    %v1940 = vadd.f32 %v540, %v1441
    %v1941 = vadd.f32 %v541, %v1530
    %v1942 = vadd.f32 %v542, %v1619
    %v1943 = vadd.f32 %v543, %v1708
    %v1944 = vadd.f32 %v544, %v1088
    %v1945 = vadd.f32 %v545, %v1177
    %v1946 = vadd.f32 %v546, %v1266
    %v1947 = vadd.f32 %v547, %v1355
    %v1948 = vadd.f32 %v548, %v1444
    %v1949 = vadd.f32 %v549, %v1533
    %v1950 = vadd.f32 %v550, %v1622
    %v1951 = vadd.f32 %v551, %v1711
    %v1952 = vadd.f32 %v552, %v1090
    %v1953 = vadd.f32 %v553, %v1179
    %v1954 = vadd.f32 %v554, %v1268
    %v1955 = vadd.f32 %v555, %v1357
    %v1956 = vadd.f32 %v556, %v1446
    %v1957 = vadd.f32 %v557, %v1535
    %v1958 = vadd.f32 %v558, %v1624
    %v1959 = vadd.f32 %v559, %v1713
    %v1960 = vadd.f32 %v560, %v1093
    %v1961 = vadd.f32 %v561, %v1182
    %v1962 = vadd.f32 %v562, %v1271
    %v1963 = vadd.f32 %v563, %v1360
    %v1964 = vadd.f32 %v564, %v1449
    %v1965 = vadd.f32 %v565, %v1538
    %v1966 = vadd.f32 %v566, %v1627
    %v1967 = vadd.f32 %v567, %v1716
    %v1968 = vadd.f32 %v568, %v1095
    %v1969 = vadd.f32 %v569, %v1184
    %v1970 = vadd.f32 %v570, %v1273
    %v1971 = vadd.f32 %v571, %v1362
    %v1972 = vadd.f32 %v572, %v1451
    %v1973 = vadd.f32 %v573, %v1540
    %v1974 = vadd.f32 %v574, %v1629
    %v1975 = vadd.f32 %v575, %v1718
    %1976 = vst [vmem:[#allocation2] sm:$0xff] %v1720
    %1977 = vst [vmem:[#allocation2 + $0x8] sm:$0xff] %v1721
    %1978 = vst [vmem:[#allocation2 + $0x10] sm:$0xff] %v1722
    %1979 = vst [vmem:[#allocation2 + $0x18] sm:$0xff] %v1723
    %1980 = vst [vmem:[#allocation2 + $0x20] sm:$0xff] %v1724
    %1981 = vst [vmem:[#allocation2 + $0x28] sm:$0xff] %v1725
    %1982 = vst [vmem:[#allocation2 + $0x30] sm:$0xff] %v1726
    %1983 = vst [vmem:[#allocation2 + $0x38] sm:$0xff] %v1727
    %1984 = vst [vmem:[#allocation2 + $0x40] sm:$0xff] %v1728
    %1985 = vst [vmem:[#allocation2 + $0x48] sm:$0xff] %v1729
    %1986 = vst [vmem:[#allocation2 + $0x50] sm:$0xff] %v1730
    %1987 = vst [vmem:[#allocation2 + $0x58] sm:$0xff] %v1731
    %1988 = vst [vmem:[#allocation2 + $0x60] sm:$0xff] %v1732
    %1989 = vst [vmem:[#allocation2 + $0x68] sm:$0xff] %v1733
    %1990 = vst [vmem:[#allocation2 + $0x70] sm:$0xff] %v1734
    %1991 = vst [vmem:[#allocation2 + $0x78] sm:$0xff] %v1735
    %1992 = vst [vmem:[#allocation2 + $0x80] sm:$0xff] %v1736
    %1993 = vst [vmem:[#allocation2 + $0x88] sm:$0xff] %v1737
    %1994 = vst [vmem:[#allocation2 + $0x90] sm:$0xff] %v1738
    %1995 = vst [vmem:[#allocation2 + $0x98] sm:$0xff] %v1739
    %1996 = vst [vmem:[#allocation2 + $0xa0] sm:$0xff] %v1740
    %1997 = vst [vmem:[#allocation2 + $0xa8] sm:$0xff] %v1741
    %1998 = vst [vmem:[#allocation2 + $0xb0] sm:$0xff] %v1742
    %1999 = vst [vmem:[#allocation2 + $0xb8] sm:$0xff] %v1743
    %2000 = vst [vmem:[#allocation2 + $0xc0] sm:$0xff] %v1744
    %2001 = vst [vmem:[#allocation2 + $0xc8] sm:$0xff] %v1745
    %2002 = vst [vmem:[#allocation2 + $0xd0] sm:$0xff] %v1746
    %2003 = vst [vmem:[#allocation2 + $0xd8] sm:$0xff] %v1747
    %2004 = vst [vmem:[#allocation2 + $0xe0] sm:$0xff] %v1748
    %2005 = vst [vmem:[#allocation2 + $0xe8] sm:$0xff] %v1749
    %2006 = vst [vmem:[#allocation2 + $0xf0] sm:$0xff] %v1750
    %2007 = vst [vmem:[#allocation2 + $0xf8] sm:$0xff] %v1751
    %2008 = vst [vmem:[#allocation2 + $0x100] sm:$0xff] %v1752
    %2009 = vst [vmem:[#allocation2 + $0x108] sm:$0xff] %v1753
    %2010 = vst [vmem:[#allocation2 + $0x110] sm:$0xff] %v1754
    %2011 = vst [vmem:[#allocation2 + $0x118] sm:$0xff] %v1755
    %2012 = vst [vmem:[#allocation2 + $0x120] sm:$0xff] %v1756
    %2013 = vst [vmem:[#allocation2 + $0x128] sm:$0xff] %v1757
    %2014 = vst [vmem:[#allocation2 + $0x130] sm:$0xff] %v1758
    %2015 = vst [vmem:[#allocation2 + $0x138] sm:$0xff] %v1759
    %2016 = vst [vmem:[#allocation2 + $0x140] sm:$0xff] %v1760
    %2017 = vst [vmem:[#allocation2 + $0x148] sm:$0xff] %v1761
    %2018 = vst [vmem:[#allocation2 + $0x150] sm:$0xff] %v1762
    %2019 = vst [vmem:[#allocation2 + $0x158] sm:$0xff] %v1763
    %2020 = vst [vmem:[#allocation2 + $0x160] sm:$0xff] %v1764
    %2021 = vst [vmem:[#allocation2 + $0x168] sm:$0xff] %v1765
    %2022 = vst [vmem:[#allocation2 + $0x170] sm:$0xff] %v1766
    %2023 = vst [vmem:[#allocation2 + $0x178] sm:$0xff] %v1767
    %2024 = vst [vmem:[#allocation2 + $0x180] sm:$0xff] %v1768
    %2025 = vst [vmem:[#allocation2 + $0x188] sm:$0xff] %v1769
    %2026 = vst [vmem:[#allocation2 + $0x190] sm:$0xff] %v1770
    %2027 = vst [vmem:[#allocation2 + $0x198] sm:$0xff] %v1771
    %2028 = vst [vmem:[#allocation2 + $0x1a0] sm:$0xff] %v1772
    %2029 = vst [vmem:[#allocation2 + $0x1a8] sm:$0xff] %v1773
    %2030 = vst [vmem:[#allocation2 + $0x1b0] sm:$0xff] %v1774
    %2031 = vst [vmem:[#allocation2 + $0x1b8] sm:$0xff] %v1775
    %2032 = vst [vmem:[#allocation2 + $0x1c0] sm:$0xff] %v1776
    %2033 = vst [vmem:[#allocation2 + $0x1c8] sm:$0xff] %v1777
    %2034 = vst [vmem:[#allocation2 + $0x1d0] sm:$0xff] %v1778
    %2035 = vst [vmem:[#allocation2 + $0x1d8] sm:$0xff] %v1779
    %2036 = vst [vmem:[#allocation2 + $0x1e0] sm:$0xff] %v1780
    %2037 = vst [vmem:[#allocation2 + $0x1e8] sm:$0xff] %v1781
    %2038 = vst [vmem:[#allocation2 + $0x1f0] sm:$0xff] %v1782
    %2039 = vst [vmem:[#allocation2 + $0x1f8] sm:$0xff] %v1783
    %2040 = vst [vmem:[#allocation2 + $0x200] sm:$0xff] %v1784
    %2041 = vst [vmem:[#allocation2 + $0x208] sm:$0xff] %v1785
    %2042 = vst [vmem:[#allocation2 + $0x210] sm:$0xff] %v1786
    %2043 = vst [vmem:[#allocation2 + $0x218] sm:$0xff] %v1787
    %2044 = vst [vmem:[#allocation2 + $0x220] sm:$0xff] %v1788
    %2045 = vst [vmem:[#allocation2 + $0x228] sm:$0xff] %v1789
    %2046 = vst [vmem:[#allocation2 + $0x230] sm:$0xff] %v1790
    %2047 = vst [vmem:[#allocation2 + $0x238] sm:$0xff] %v1791
    %2048 = vst [vmem:[#allocation2 + $0x240] sm:$0xff] %v1792
    %2049 = vst [vmem:[#allocation2 + $0x248] sm:$0xff] %v1793
    %2050 = vst [vmem:[#allocation2 + $0x250] sm:$0xff] %v1794
    %2051 = vst [vmem:[#allocation2 + $0x258] sm:$0xff] %v1795
    %2052 = vst [vmem:[#allocation2 + $0x260] sm:$0xff] %v1796
    %2053 = vst [vmem:[#allocation2 + $0x268] sm:$0xff] %v1797
    %2054 = vst [vmem:[#allocation2 + $0x270] sm:$0xff] %v1798
    %2055 = vst [vmem:[#allocation2 + $0x278] sm:$0xff] %v1799
    %2056 = vst [vmem:[#allocation2 + $0x280] sm:$0xff] %v1800
    %2057 = vst [vmem:[#allocation2 + $0x288] sm:$0xff] %v1801
    %2058 = vst [vmem:[#allocation2 + $0x290] sm:$0xff] %v1802
    %2059 = vst [vmem:[#allocation2 + $0x298] sm:$0xff] %v1803
    %2060 = vst [vmem:[#allocation2 + $0x2a0] sm:$0xff] %v1804
    %2061 = vst [vmem:[#allocation2 + $0x2a8] sm:$0xff] %v1805
    %2062 = vst [vmem:[#allocation2 + $0x2b0] sm:$0xff] %v1806
    %2063 = vst [vmem:[#allocation2 + $0x2b8] sm:$0xff] %v1807
    %2064 = vst [vmem:[#allocation2 + $0x2c0] sm:$0xff] %v1808
    %2065 = vst [vmem:[#allocation2 + $0x2c8] sm:$0xff] %v1809
    %2066 = vst [vmem:[#allocation2 + $0x2d0] sm:$0xff] %v1810
    %2067 = vst [vmem:[#allocation2 + $0x2d8] sm:$0xff] %v1811
    %2068 = vst [vmem:[#allocation2 + $0x2e0] sm:$0xff] %v1812
    %2069 = vst [vmem:[#allocation2 + $0x2e8] sm:$0xff] %v1813
    %2070 = vst [vmem:[#allocation2 + $0x2f0] sm:$0xff] %v1814
    %2071 = vst [vmem:[#allocation2 + $0x2f8] sm:$0xff] %v1815
    %2072 = vst [vmem:[#allocation2 + $0x300] sm:$0xff] %v1816
    %2073 = vst [vmem:[#allocation2 + $0x308] sm:$0xff] %v1817
    %2074 = vst [vmem:[#allocation2 + $0x310] sm:$0xff] %v1818
    %2075 = vst [vmem:[#allocation2 + $0x318] sm:$0xff] %v1819
    %2076 = vst [vmem:[#allocation2 + $0x320] sm:$0xff] %v1820
    %2077 = vst [vmem:[#allocation2 + $0x328] sm:$0xff] %v1821
    %2078 = vst [vmem:[#allocation2 + $0x330] sm:$0xff] %v1822
    %2079 = vst [vmem:[#allocation2 + $0x338] sm:$0xff] %v1823
    %2080 = vst [vmem:[#allocation2 + $0x340] sm:$0xff] %v1824
    %2081 = vst [vmem:[#allocation2 + $0x348] sm:$0xff] %v1825
    %2082 = vst [vmem:[#allocation2 + $0x350] sm:$0xff] %v1826
    %2083 = vst [vmem:[#allocation2 + $0x358] sm:$0xff] %v1827
    %2084 = vst [vmem:[#allocation2 + $0x360] sm:$0xff] %v1828
    %2085 = vst [vmem:[#allocation2 + $0x368] sm:$0xff] %v1829
    %2086 = vst [vmem:[#allocation2 + $0x370] sm:$0xff] %v1830
    %2087 = vst [vmem:[#allocation2 + $0x378] sm:$0xff] %v1831
    %2088 = vst [vmem:[#allocation2 + $0x380] sm:$0xff] %v1832
    %2089 = vst [vmem:[#allocation2 + $0x388] sm:$0xff] %v1833
    %2090 = vst [vmem:[#allocation2 + $0x390] sm:$0xff] %v1834
    %2091 = vst [vmem:[#allocation2 + $0x398] sm:$0xff] %v1835
    %2092 = vst [vmem:[#allocation2 + $0x3a0] sm:$0xff] %v1836
    %2093 = vst [vmem:[#allocation2 + $0x3a8] sm:$0xff] %v1837
    %2094 = vst [vmem:[#allocation2 + $0x3b0] sm:$0xff] %v1838
    %2095 = vst [vmem:[#allocation2 + $0x3b8] sm:$0xff] %v1839
    %2096 = vst [vmem:[#allocation2 + $0x3c0] sm:$0xff] %v1840
    %2097 = vst [vmem:[#allocation2 + $0x3c8] sm:$0xff] %v1841
    %2098 = vst [vmem:[#allocation2 + $0x3d0] sm:$0xff] %v1842
    %2099 = vst [vmem:[#allocation2 + $0x3d8] sm:$0xff] %v1843
    %2100 = vst [vmem:[#allocation2 + $0x3e0] sm:$0xff] %v1844
    %2101 = vst [vmem:[#allocation2 + $0x3e8] sm:$0xff] %v1845
    %2102 = vst [vmem:[#allocation2 + $0x3f0] sm:$0xff] %v1846
    %2103 = vst [vmem:[#allocation2 + $0x3f8] sm:$0xff] %v1847
    %2104 = vst [vmem:[#allocation2 + $0x400] sm:$0xff] %v1848
    %2105 = vst [vmem:[#allocation2 + $0x408] sm:$0xff] %v1849
    %2106 = vst [vmem:[#allocation2 + $0x410] sm:$0xff] %v1850
    %2107 = vst [vmem:[#allocation2 + $0x418] sm:$0xff] %v1851
    %2108 = vst [vmem:[#allocation2 + $0x420] sm:$0xff] %v1852
    %2109 = vst [vmem:[#allocation2 + $0x428] sm:$0xff] %v1853
    %2110 = vst [vmem:[#allocation2 + $0x430] sm:$0xff] %v1854
    %2111 = vst [vmem:[#allocation2 + $0x438] sm:$0xff] %v1855
    %2112 = vst [vmem:[#allocation2 + $0x440] sm:$0xff] %v1856
    %2113 = vst [vmem:[#allocation2 + $0x448] sm:$0xff] %v1857
    %2114 = vst [vmem:[#allocation2 + $0x450] sm:$0xff] %v1858
    %2115 = vst [vmem:[#allocation2 + $0x458] sm:$0xff] %v1859
    %2116 = vst [vmem:[#allocation2 + $0x460] sm:$0xff] %v1860
    %2117 = vst [vmem:[#allocation2 + $0x468] sm:$0xff] %v1861
    %2118 = vst [vmem:[#allocation2 + $0x470] sm:$0xff] %v1862
    %2119 = vst [vmem:[#allocation2 + $0x478] sm:$0xff] %v1863
    %2120 = vst [vmem:[#allocation2 + $0x480] sm:$0xff] %v1864
    %2121 = vst [vmem:[#allocation2 + $0x488] sm:$0xff] %v1865
    %2122 = vst [vmem:[#allocation2 + $0x490] sm:$0xff] %v1866
    %2123 = vst [vmem:[#allocation2 + $0x498] sm:$0xff] %v1867
    %2124 = vst [vmem:[#allocation2 + $0x4a0] sm:$0xff] %v1868
    %2125 = vst [vmem:[#allocation2 + $0x4a8] sm:$0xff] %v1869
    %2126 = vst [vmem:[#allocation2 + $0x4b0] sm:$0xff] %v1870
    %2127 = vst [vmem:[#allocation2 + $0x4b8] sm:$0xff] %v1871
    %2128 = vst [vmem:[#allocation2 + $0x4c0] sm:$0xff] %v1872
    %2129 = vst [vmem:[#allocation2 + $0x4c8] sm:$0xff] %v1873
    %2130 = vst [vmem:[#allocation2 + $0x4d0] sm:$0xff] %v1874
    %2131 = vst [vmem:[#allocation2 + $0x4d8] sm:$0xff] %v1875
    %2132 = vst [vmem:[#allocation2 + $0x4e0] sm:$0xff] %v1876
    %2133 = vst [vmem:[#allocation2 + $0x4e8] sm:$0xff] %v1877
    %2134 = vst [vmem:[#allocation2 + $0x4f0] sm:$0xff] %v1878
    %2135 = vst [vmem:[#allocation2 + $0x4f8] sm:$0xff] %v1879
    %2136 = vst [vmem:[#allocation2 + $0x500] sm:$0xff] %v1880
    %2137 = vst [vmem:[#allocation2 + $0x508] sm:$0xff] %v1881
    %2138 = vst [vmem:[#allocation2 + $0x510] sm:$0xff] %v1882
    %2139 = vst [vmem:[#allocation2 + $0x518] sm:$0xff] %v1883
    %2140 = vst [vmem:[#allocation2 + $0x520] sm:$0xff] %v1884
    %2141 = vst [vmem:[#allocation2 + $0x528] sm:$0xff] %v1885
    %2142 = vst [vmem:[#allocation2 + $0x530] sm:$0xff] %v1886
    %2143 = vst [vmem:[#allocation2 + $0x538] sm:$0xff] %v1887
    %2144 = vst [vmem:[#allocation2 + $0x540] sm:$0xff] %v1888
    %2145 = vst [vmem:[#allocation2 + $0x548] sm:$0xff] %v1889
    %2146 = vst [vmem:[#allocation2 + $0x550] sm:$0xff] %v1890
    %2147 = vst [vmem:[#allocation2 + $0x558] sm:$0xff] %v1891
    %2148 = vst [vmem:[#allocation2 + $0x560] sm:$0xff] %v1892
    %2149 = vst [vmem:[#allocation2 + $0x568] sm:$0xff] %v1893
    %2150 = vst [vmem:[#allocation2 + $0x570] sm:$0xff] %v1894
    %2151 = vst [vmem:[#allocation2 + $0x578] sm:$0xff] %v1895
    %2152 = vst [vmem:[#allocation2 + $0x580] sm:$0xff] %v1896
    %2153 = vst [vmem:[#allocation2 + $0x588] sm:$0xff] %v1897
    %2154 = vst [vmem:[#allocation2 + $0x590] sm:$0xff] %v1898
    %2155 = vst [vmem:[#allocation2 + $0x598] sm:$0xff] %v1899
    %2156 = vst [vmem:[#allocation2 + $0x5a0] sm:$0xff] %v1900
    %2157 = vst [vmem:[#allocation2 + $0x5a8] sm:$0xff] %v1901
    %2158 = vst [vmem:[#allocation2 + $0x5b0] sm:$0xff] %v1902
    %2159 = vst [vmem:[#allocation2 + $0x5b8] sm:$0xff] %v1903
    %2160 = vst [vmem:[#allocation2 + $0x5c0] sm:$0xff] %v1904
    %2161 = vst [vmem:[#allocation2 + $0x5c8] sm:$0xff] %v1905
    %2162 = vst [vmem:[#allocation2 + $0x5d0] sm:$0xff] %v1906
    %2163 = vst [vmem:[#allocation2 + $0x5d8] sm:$0xff] %v1907
    %2164 = vst [vmem:[#allocation2 + $0x5e0] sm:$0xff] %v1908
    %2165 = vst [vmem:[#allocation2 + $0x5e8] sm:$0xff] %v1909
    %2166 = vst [vmem:[#allocation2 + $0x5f0] sm:$0xff] %v1910
    %2167 = vst [vmem:[#allocation2 + $0x5f8] sm:$0xff] %v1911
    %2168 = vst [vmem:[#allocation2 + $0x600] sm:$0xff] %v1912
    %2169 = vst [vmem:[#allocation2 + $0x608] sm:$0xff] %v1913
    %2170 = vst [vmem:[#allocation2 + $0x610] sm:$0xff] %v1914
    %2171 = vst [vmem:[#allocation2 + $0x618] sm:$0xff] %v1915
    %2172 = vst [vmem:[#allocation2 + $0x620] sm:$0xff] %v1916
    %2173 = vst [vmem:[#allocation2 + $0x628] sm:$0xff] %v1917
    %2174 = vst [vmem:[#allocation2 + $0x630] sm:$0xff] %v1918
    %2175 = vst [vmem:[#allocation2 + $0x638] sm:$0xff] %v1919
    %2176 = vst [vmem:[#allocation2 + $0x640] sm:$0xff] %v1920
    %2177 = vst [vmem:[#allocation2 + $0x648] sm:$0xff] %v1921
    %2178 = vst [vmem:[#allocation2 + $0x650] sm:$0xff] %v1922
    %2179 = vst [vmem:[#allocation2 + $0x658] sm:$0xff] %v1923
    %2180 = vst [vmem:[#allocation2 + $0x660] sm:$0xff] %v1924
    %2181 = vst [vmem:[#allocation2 + $0x668] sm:$0xff] %v1925
    %2182 = vst [vmem:[#allocation2 + $0x670] sm:$0xff] %v1926
    %2183 = vst [vmem:[#allocation2 + $0x678] sm:$0xff] %v1927
    %2184 = vst [vmem:[#allocation2 + $0x680] sm:$0xff] %v1928
    %2185 = vst [vmem:[#allocation2 + $0x688] sm:$0xff] %v1929
    %2186 = vst [vmem:[#allocation2 + $0x690] sm:$0xff] %v1930
    %2187 = vst [vmem:[#allocation2 + $0x698] sm:$0xff] %v1931
    %2188 = vst [vmem:[#allocation2 + $0x6a0] sm:$0xff] %v1932
    %2189 = vst [vmem:[#allocation2 + $0x6a8] sm:$0xff] %v1933
    %2190 = vst [vmem:[#allocation2 + $0x6b0] sm:$0xff] %v1934
    %2191 = vst [vmem:[#allocation2 + $0x6b8] sm:$0xff] %v1935
    %2192 = vst [vmem:[#allocation2 + $0x6c0] sm:$0xff] %v1936
    %2193 = vst [vmem:[#allocation2 + $0x6c8] sm:$0xff] %v1937
    %2194 = vst [vmem:[#allocation2 + $0x6d0] sm:$0xff] %v1938
    %2195 = vst [vmem:[#allocation2 + $0x6d8] sm:$0xff] %v1939
    %2196 = vst [vmem:[#allocation2 + $0x6e0] sm:$0xff] %v1940
    %2197 = vst [vmem:[#allocation2 + $0x6e8] sm:$0xff] %v1941
    %2198 = vst [vmem:[#allocation2 + $0x6f0] sm:$0xff] %v1942
    %2199 = vst [vmem:[#allocation2 + $0x6f8] sm:$0xff] %v1943
    %2200 = vst [vmem:[#allocation2 + $0x700] sm:$0xff] %v1944
    %2201 = vst [vmem:[#allocation2 + $0x708] sm:$0xff] %v1945
    %2202 = vst [vmem:[#allocation2 + $0x710] sm:$0xff] %v1946
    %2203 = vst [vmem:[#allocation2 + $0x718] sm:$0xff] %v1947
    %2204 = vst [vmem:[#allocation2 + $0x720] sm:$0xff] %v1948
    %2205 = vst [vmem:[#allocation2 + $0x728] sm:$0xff] %v1949
    %2206 = vst [vmem:[#allocation2 + $0x730] sm:$0xff] %v1950
    %2207 = vst [vmem:[#allocation2 + $0x738] sm:$0xff] %v1951
    %2208 = vst [vmem:[#allocation2 + $0x740] sm:$0xff] %v1952
    %2209 = vst [vmem:[#allocation2 + $0x748] sm:$0xff] %v1953
    %2210 = vst [vmem:[#allocation2 + $0x750] sm:$0xff] %v1954
    %2211 = vst [vmem:[#allocation2 + $0x758] sm:$0xff] %v1955
    %2212 = vst [vmem:[#allocation2 + $0x760] sm:$0xff] %v1956
    %2213 = vst [vmem:[#allocation2 + $0x768] sm:$0xff] %v1957
    %2214 = vst [vmem:[#allocation2 + $0x770] sm:$0xff] %v1958
    %2215 = vst [vmem:[#allocation2 + $0x778] sm:$0xff] %v1959
    %2216 = vst [vmem:[#allocation2 + $0x780] sm:$0xff] %v1960
    %2217 = vst [vmem:[#allocation2 + $0x788] sm:$0xff] %v1961
    %2218 = vst [vmem:[#allocation2 + $0x790] sm:$0xff] %v1962
    %2219 = vst [vmem:[#allocation2 + $0x798] sm:$0xff] %v1963
    %2220 = vst [vmem:[#allocation2 + $0x7a0] sm:$0xff] %v1964
    %2221 = vst [vmem:[#allocation2 + $0x7a8] sm:$0xff] %v1965
    %2222 = vst [vmem:[#allocation2 + $0x7b0] sm:$0xff] %v1966
    %2223 = vst [vmem:[#allocation2 + $0x7b8] sm:$0xff] %v1967
    %2224 = vst [vmem:[#allocation2 + $0x7c0] sm:$0xff] %v1968
    %2225 = vst [vmem:[#allocation2 + $0x7c8] sm:$0xff] %v1969
    %2226 = vst [vmem:[#allocation2 + $0x7d0] sm:$0xff] %v1970
    %2227 = vst [vmem:[#allocation2 + $0x7d8] sm:$0xff] %v1971
    %2228 = vst [vmem:[#allocation2 + $0x7e0] sm:$0xff] %v1972
    %2229 = vst [vmem:[#allocation2 + $0x7e8] sm:$0xff] %v1973
    %2230 = vst [vmem:[#allocation2 + $0x7f0] sm:$0xff] %v1974
    %2231 = vst [vmem:[#allocation2 + $0x7f8] sm:$0xff] %v1975
    // Predicated region
    $region30: #{tpu_custom_call.1} parent=1 // pred_check
      %p2232 = pneg %p60
    $region31: #{tpu_custom_call.1} parent=1 // pred_check_branch
      %2234 = sbr.rel (%p2232) target = $region33
    $region32: #{tpu_custom_call.1} parent=1 // pred_region
      %v2235 = vld [vmem:[#allocation2] sm:$0xff]
      %v2236 = vld [vmem:[#allocation2 + $0x8] sm:$0xff]
      %v2237 = vld [vmem:[#allocation2 + $0x10] sm:$0xff]
      %v2238 = vld [vmem:[#allocation2 + $0x18] sm:$0xff]
      %v2239 = vld [vmem:[#allocation2 + $0x20] sm:$0xff]
      %v2240 = vld [vmem:[#allocation2 + $0x28] sm:$0xff]
      %v2241 = vld [vmem:[#allocation2 + $0x30] sm:$0xff]
      %v2242 = vld [vmem:[#allocation2 + $0x38] sm:$0xff]
      %v2243 = vld [vmem:[#allocation2 + $0x40] sm:$0xff]
      %v2244 = vld [vmem:[#allocation2 + $0x48] sm:$0xff]
      %v2245 = vld [vmem:[#allocation2 + $0x50] sm:$0xff]
      %v2246 = vld [vmem:[#allocation2 + $0x58] sm:$0xff]
      %v2247 = vld [vmem:[#allocation2 + $0x60] sm:$0xff]
      %v2248 = vld [vmem:[#allocation2 + $0x68] sm:$0xff]
      %v2249 = vld [vmem:[#allocation2 + $0x70] sm:$0xff]
      %v2250 = vld [vmem:[#allocation2 + $0x78] sm:$0xff]
      %v2251 = vld [vmem:[#allocation2 + $0x80] sm:$0xff]
      %v2252 = vld [vmem:[#allocation2 + $0x88] sm:$0xff]
      %v2253 = vld [vmem:[#allocation2 + $0x90] sm:$0xff]
      %v2254 = vld [vmem:[#allocation2 + $0x98] sm:$0xff]
      %v2255 = vld [vmem:[#allocation2 + $0xa0] sm:$0xff]
      %v2256 = vld [vmem:[#allocation2 + $0xa8] sm:$0xff]
      %v2257 = vld [vmem:[#allocation2 + $0xb0] sm:$0xff]
      %v2258 = vld [vmem:[#allocation2 + $0xb8] sm:$0xff]
      %v2259 = vld [vmem:[#allocation2 + $0xc0] sm:$0xff]
      %v2260 = vld [vmem:[#allocation2 + $0xc8] sm:$0xff]
      %v2261 = vld [vmem:[#allocation2 + $0xd0] sm:$0xff]
      %v2262 = vld [vmem:[#allocation2 + $0xd8] sm:$0xff]
      %v2263 = vld [vmem:[#allocation2 + $0xe0] sm:$0xff]
      %v2264 = vld [vmem:[#allocation2 + $0xe8] sm:$0xff]
      %v2265 = vld [vmem:[#allocation2 + $0xf0] sm:$0xff]
      %v2266 = vld [vmem:[#allocation2 + $0xf8] sm:$0xff]
      %v2267 = vld [vmem:[#allocation2 + $0x100] sm:$0xff]
      %v2268 = vld [vmem:[#allocation2 + $0x108] sm:$0xff]
      %v2269 = vld [vmem:[#allocation2 + $0x110] sm:$0xff]
      %v2270 = vld [vmem:[#allocation2 + $0x118] sm:$0xff]
      %v2271 = vld [vmem:[#allocation2 + $0x120] sm:$0xff]
      %v2272 = vld [vmem:[#allocation2 + $0x128] sm:$0xff]
      %v2273 = vld [vmem:[#allocation2 + $0x130] sm:$0xff]
      %v2274 = vld [vmem:[#allocation2 + $0x138] sm:$0xff]
      %v2275 = vld [vmem:[#allocation2 + $0x140] sm:$0xff]
      %v2276 = vld [vmem:[#allocation2 + $0x148] sm:$0xff]
      %v2277 = vld [vmem:[#allocation2 + $0x150] sm:$0xff]
      %v2278 = vld [vmem:[#allocation2 + $0x158] sm:$0xff]
      %v2279 = vld [vmem:[#allocation2 + $0x160] sm:$0xff]
      %v2280 = vld [vmem:[#allocation2 + $0x168] sm:$0xff]
      %v2281 = vld [vmem:[#allocation2 + $0x170] sm:$0xff]
      %v2282 = vld [vmem:[#allocation2 + $0x178] sm:$0xff]
      %v2283 = vld [vmem:[#allocation2 + $0x180] sm:$0xff]
      %v2284 = vld [vmem:[#allocation2 + $0x188] sm:$0xff]
      %v2285 = vld [vmem:[#allocation2 + $0x190] sm:$0xff]
      %v2286 = vld [vmem:[#allocation2 + $0x198] sm:$0xff]
      %v2287 = vld [vmem:[#allocation2 + $0x1a0] sm:$0xff]
      %v2288 = vld [vmem:[#allocation2 + $0x1a8] sm:$0xff]
      %v2289 = vld [vmem:[#allocation2 + $0x1b0] sm:$0xff]
      %v2290 = vld [vmem:[#allocation2 + $0x1b8] sm:$0xff]
      %v2291 = vld [vmem:[#allocation2 + $0x1c0] sm:$0xff]
      %v2292 = vld [vmem:[#allocation2 + $0x1c8] sm:$0xff]
      %v2293 = vld [vmem:[#allocation2 + $0x1d0] sm:$0xff]
      %v2294 = vld [vmem:[#allocation2 + $0x1d8] sm:$0xff]
      %v2295 = vld [vmem:[#allocation2 + $0x1e0] sm:$0xff]
      %v2296 = vld [vmem:[#allocation2 + $0x1e8] sm:$0xff]
      %v2297 = vld [vmem:[#allocation2 + $0x1f0] sm:$0xff]
      %v2298 = vld [vmem:[#allocation2 + $0x1f8] sm:$0xff]
      %v2299 = vld [vmem:[#allocation2 + $0x200] sm:$0xff]
      %v2300 = vld [vmem:[#allocation2 + $0x208] sm:$0xff]
      %v2301 = vld [vmem:[#allocation2 + $0x210] sm:$0xff]
      %v2302 = vld [vmem:[#allocation2 + $0x218] sm:$0xff]
      %v2303 = vld [vmem:[#allocation2 + $0x220] sm:$0xff]
      %v2304 = vld [vmem:[#allocation2 + $0x228] sm:$0xff]
      %v2305 = vld [vmem:[#allocation2 + $0x230] sm:$0xff]
      %v2306 = vld [vmem:[#allocation2 + $0x238] sm:$0xff]
      %v2307 = vld [vmem:[#allocation2 + $0x240] sm:$0xff]
      %v2308 = vld [vmem:[#allocation2 + $0x248] sm:$0xff]
      %v2309 = vld [vmem:[#allocation2 + $0x250] sm:$0xff]
      %v2310 = vld [vmem:[#allocation2 + $0x258] sm:$0xff]
      %v2311 = vld [vmem:[#allocation2 + $0x260] sm:$0xff]
      %v2312 = vld [vmem:[#allocation2 + $0x268] sm:$0xff]
      %v2313 = vld [vmem:[#allocation2 + $0x270] sm:$0xff]
      %v2314 = vld [vmem:[#allocation2 + $0x278] sm:$0xff]
      %v2315 = vld [vmem:[#allocation2 + $0x280] sm:$0xff]
      %v2316 = vld [vmem:[#allocation2 + $0x288] sm:$0xff]
      %v2317 = vld [vmem:[#allocation2 + $0x290] sm:$0xff]
      %v2318 = vld [vmem:[#allocation2 + $0x298] sm:$0xff]
      %v2319 = vld [vmem:[#allocation2 + $0x2a0] sm:$0xff]
      %v2320 = vld [vmem:[#allocation2 + $0x2a8] sm:$0xff]
      %v2321 = vld [vmem:[#allocation2 + $0x2b0] sm:$0xff]
      %v2322 = vld [vmem:[#allocation2 + $0x2b8] sm:$0xff]
      %v2323 = vld [vmem:[#allocation2 + $0x2c0] sm:$0xff]
      %v2324 = vld [vmem:[#allocation2 + $0x2c8] sm:$0xff]
      %v2325 = vld [vmem:[#allocation2 + $0x2d0] sm:$0xff]
      %v2326 = vld [vmem:[#allocation2 + $0x2d8] sm:$0xff]
      %v2327 = vld [vmem:[#allocation2 + $0x2e0] sm:$0xff]
      %v2328 = vld [vmem:[#allocation2 + $0x2e8] sm:$0xff]
      %v2329 = vld [vmem:[#allocation2 + $0x2f0] sm:$0xff]
      %v2330 = vld [vmem:[#allocation2 + $0x2f8] sm:$0xff]
      %v2331 = vld [vmem:[#allocation2 + $0x300] sm:$0xff]
      %v2332 = vld [vmem:[#allocation2 + $0x308] sm:$0xff]
      %v2333 = vld [vmem:[#allocation2 + $0x310] sm:$0xff]
      %v2334 = vld [vmem:[#allocation2 + $0x318] sm:$0xff]
      %v2335 = vld [vmem:[#allocation2 + $0x320] sm:$0xff]
      %v2336 = vld [vmem:[#allocation2 + $0x328] sm:$0xff]
      %v2337 = vld [vmem:[#allocation2 + $0x330] sm:$0xff]
      %v2338 = vld [vmem:[#allocation2 + $0x338] sm:$0xff]
      %v2339 = vld [vmem:[#allocation2 + $0x340] sm:$0xff]
      %v2340 = vld [vmem:[#allocation2 + $0x348] sm:$0xff]
      %v2341 = vld [vmem:[#allocation2 + $0x350] sm:$0xff]
      %v2342 = vld [vmem:[#allocation2 + $0x358] sm:$0xff]
      %v2343 = vld [vmem:[#allocation2 + $0x360] sm:$0xff]
      %v2344 = vld [vmem:[#allocation2 + $0x368] sm:$0xff]
      %v2345 = vld [vmem:[#allocation2 + $0x370] sm:$0xff]
      %v2346 = vld [vmem:[#allocation2 + $0x378] sm:$0xff]
      %v2347 = vld [vmem:[#allocation2 + $0x380] sm:$0xff]
      %v2348 = vld [vmem:[#allocation2 + $0x388] sm:$0xff]
      %v2349 = vld [vmem:[#allocation2 + $0x390] sm:$0xff]
      %v2350 = vld [vmem:[#allocation2 + $0x398] sm:$0xff]
      %v2351 = vld [vmem:[#allocation2 + $0x3a0] sm:$0xff]
      %v2352 = vld [vmem:[#allocation2 + $0x3a8] sm:$0xff]
      %v2353 = vld [vmem:[#allocation2 + $0x3b0] sm:$0xff]
      %v2354 = vld [vmem:[#allocation2 + $0x3b8] sm:$0xff]
      %v2355 = vld [vmem:[#allocation2 + $0x3c0] sm:$0xff]
      %v2356 = vld [vmem:[#allocation2 + $0x3c8] sm:$0xff]
      %v2357 = vld [vmem:[#allocation2 + $0x3d0] sm:$0xff]
      %v2358 = vld [vmem:[#allocation2 + $0x3d8] sm:$0xff]
      %v2359 = vld [vmem:[#allocation2 + $0x3e0] sm:$0xff]
      %v2360 = vld [vmem:[#allocation2 + $0x3e8] sm:$0xff]
      %v2361 = vld [vmem:[#allocation2 + $0x3f0] sm:$0xff]
      %v2362 = vld [vmem:[#allocation2 + $0x3f8] sm:$0xff]
      %v2363 = vld [vmem:[#allocation2 + $0x400] sm:$0xff]
      %v2364 = vld [vmem:[#allocation2 + $0x408] sm:$0xff]
      %v2365 = vld [vmem:[#allocation2 + $0x410] sm:$0xff]
      %v2366 = vld [vmem:[#allocation2 + $0x418] sm:$0xff]
      %v2367 = vld [vmem:[#allocation2 + $0x420] sm:$0xff]
      %v2368 = vld [vmem:[#allocation2 + $0x428] sm:$0xff]
      %v2369 = vld [vmem:[#allocation2 + $0x430] sm:$0xff]
      %v2370 = vld [vmem:[#allocation2 + $0x438] sm:$0xff]
      %v2371 = vld [vmem:[#allocation2 + $0x440] sm:$0xff]
      %v2372 = vld [vmem:[#allocation2 + $0x448] sm:$0xff]
      %v2373 = vld [vmem:[#allocation2 + $0x450] sm:$0xff]
      %v2374 = vld [vmem:[#allocation2 + $0x458] sm:$0xff]
      %v2375 = vld [vmem:[#allocation2 + $0x460] sm:$0xff]
      %v2376 = vld [vmem:[#allocation2 + $0x468] sm:$0xff]
      %v2377 = vld [vmem:[#allocation2 + $0x470] sm:$0xff]
      %v2378 = vld [vmem:[#allocation2 + $0x478] sm:$0xff]
      %v2379 = vld [vmem:[#allocation2 + $0x480] sm:$0xff]
      %v2380 = vld [vmem:[#allocation2 + $0x488] sm:$0xff]
      %v2381 = vld [vmem:[#allocation2 + $0x490] sm:$0xff]
      %v2382 = vld [vmem:[#allocation2 + $0x498] sm:$0xff]
      %v2383 = vld [vmem:[#allocation2 + $0x4a0] sm:$0xff]
      %v2384 = vld [vmem:[#allocation2 + $0x4a8] sm:$0xff]
      %v2385 = vld [vmem:[#allocation2 + $0x4b0] sm:$0xff]
      %v2386 = vld [vmem:[#allocation2 + $0x4b8] sm:$0xff]
      %v2387 = vld [vmem:[#allocation2 + $0x4c0] sm:$0xff]
      %v2388 = vld [vmem:[#allocation2 + $0x4c8] sm:$0xff]
      %v2389 = vld [vmem:[#allocation2 + $0x4d0] sm:$0xff]
      %v2390 = vld [vmem:[#allocation2 + $0x4d8] sm:$0xff]
      %v2391 = vld [vmem:[#allocation2 + $0x4e0] sm:$0xff]
      %v2392 = vld [vmem:[#allocation2 + $0x4e8] sm:$0xff]
      %v2393 = vld [vmem:[#allocation2 + $0x4f0] sm:$0xff]
      %v2394 = vld [vmem:[#allocation2 + $0x4f8] sm:$0xff]
      %v2395 = vld [vmem:[#allocation2 + $0x500] sm:$0xff]
      %v2396 = vld [vmem:[#allocation2 + $0x508] sm:$0xff]
      %v2397 = vld [vmem:[#allocation2 + $0x510] sm:$0xff]
      %v2398 = vld [vmem:[#allocation2 + $0x518] sm:$0xff]
      %v2399 = vld [vmem:[#allocation2 + $0x520] sm:$0xff]
      %v2400 = vld [vmem:[#allocation2 + $0x528] sm:$0xff]
      %v2401 = vld [vmem:[#allocation2 + $0x530] sm:$0xff]
      %v2402 = vld [vmem:[#allocation2 + $0x538] sm:$0xff]
      %v2403 = vld [vmem:[#allocation2 + $0x540] sm:$0xff]
      %v2404 = vld [vmem:[#allocation2 + $0x548] sm:$0xff]
      %v2405 = vld [vmem:[#allocation2 + $0x550] sm:$0xff]
      %v2406 = vld [vmem:[#allocation2 + $0x558] sm:$0xff]
      %v2407 = vld [vmem:[#allocation2 + $0x560] sm:$0xff]
      %v2408 = vld [vmem:[#allocation2 + $0x568] sm:$0xff]
      %v2409 = vld [vmem:[#allocation2 + $0x570] sm:$0xff]
      %v2410 = vld [vmem:[#allocation2 + $0x578] sm:$0xff]
      %v2411 = vld [vmem:[#allocation2 + $0x580] sm:$0xff]
      %v2412 = vld [vmem:[#allocation2 + $0x588] sm:$0xff]
      %v2413 = vld [vmem:[#allocation2 + $0x590] sm:$0xff]
      %v2414 = vld [vmem:[#allocation2 + $0x598] sm:$0xff]
      %v2415 = vld [vmem:[#allocation2 + $0x5a0] sm:$0xff]
      %v2416 = vld [vmem:[#allocation2 + $0x5a8] sm:$0xff]
      %v2417 = vld [vmem:[#allocation2 + $0x5b0] sm:$0xff]
      %v2418 = vld [vmem:[#allocation2 + $0x5b8] sm:$0xff]
      %v2419 = vld [vmem:[#allocation2 + $0x5c0] sm:$0xff]
      %v2420 = vld [vmem:[#allocation2 + $0x5c8] sm:$0xff]
      %v2421 = vld [vmem:[#allocation2 + $0x5d0] sm:$0xff]
      %v2422 = vld [vmem:[#allocation2 + $0x5d8] sm:$0xff]
      %v2423 = vld [vmem:[#allocation2 + $0x5e0] sm:$0xff]
      %v2424 = vld [vmem:[#allocation2 + $0x5e8] sm:$0xff]
      %v2425 = vld [vmem:[#allocation2 + $0x5f0] sm:$0xff]
      %v2426 = vld [vmem:[#allocation2 + $0x5f8] sm:$0xff]
      %v2427 = vld [vmem:[#allocation2 + $0x600] sm:$0xff]
      %v2428 = vld [vmem:[#allocation2 + $0x608] sm:$0xff]
      %v2429 = vld [vmem:[#allocation2 + $0x610] sm:$0xff]
      %v2430 = vld [vmem:[#allocation2 + $0x618] sm:$0xff]
      %v2431 = vld [vmem:[#allocation2 + $0x620] sm:$0xff]
      %v2432 = vld [vmem:[#allocation2 + $0x628] sm:$0xff]
      %v2433 = vld [vmem:[#allocation2 + $0x630] sm:$0xff]
      %v2434 = vld [vmem:[#allocation2 + $0x638] sm:$0xff]
      %v2435 = vld [vmem:[#allocation2 + $0x640] sm:$0xff]
      %v2436 = vld [vmem:[#allocation2 + $0x648] sm:$0xff]
      %v2437 = vld [vmem:[#allocation2 + $0x650] sm:$0xff]
      %v2438 = vld [vmem:[#allocation2 + $0x658] sm:$0xff]
      %v2439 = vld [vmem:[#allocation2 + $0x660] sm:$0xff]
      %v2440 = vld [vmem:[#allocation2 + $0x668] sm:$0xff]
      %v2441 = vld [vmem:[#allocation2 + $0x670] sm:$0xff]
      %v2442 = vld [vmem:[#allocation2 + $0x678] sm:$0xff]
      %v2443 = vld [vmem:[#allocation2 + $0x680] sm:$0xff]
      %v2444 = vld [vmem:[#allocation2 + $0x688] sm:$0xff]
      %v2445 = vld [vmem:[#allocation2 + $0x690] sm:$0xff]
      %v2446 = vld [vmem:[#allocation2 + $0x698] sm:$0xff]
      %v2447 = vld [vmem:[#allocation2 + $0x6a0] sm:$0xff]
      %v2448 = vld [vmem:[#allocation2 + $0x6a8] sm:$0xff]
      %v2449 = vld [vmem:[#allocation2 + $0x6b0] sm:$0xff]
      %v2450 = vld [vmem:[#allocation2 + $0x6b8] sm:$0xff]
      %v2451 = vld [vmem:[#allocation2 + $0x6c0] sm:$0xff]
      %v2452 = vld [vmem:[#allocation2 + $0x6c8] sm:$0xff]
      %v2453 = vld [vmem:[#allocation2 + $0x6d0] sm:$0xff]
      %v2454 = vld [vmem:[#allocation2 + $0x6d8] sm:$0xff]
      %v2455 = vld [vmem:[#allocation2 + $0x6e0] sm:$0xff]
      %v2456 = vld [vmem:[#allocation2 + $0x6e8] sm:$0xff]
      %v2457 = vld [vmem:[#allocation2 + $0x6f0] sm:$0xff]
      %v2458 = vld [vmem:[#allocation2 + $0x6f8] sm:$0xff]
      %v2459 = vld [vmem:[#allocation2 + $0x700] sm:$0xff]
      %v2460 = vld [vmem:[#allocation2 + $0x708] sm:$0xff]
      %v2461 = vld [vmem:[#allocation2 + $0x710] sm:$0xff]
      %v2462 = vld [vmem:[#allocation2 + $0x718] sm:$0xff]
      %v2463 = vld [vmem:[#allocation2 + $0x720] sm:$0xff]
      %v2464 = vld [vmem:[#allocation2 + $0x728] sm:$0xff]
      %v2465 = vld [vmem:[#allocation2 + $0x730] sm:$0xff]
      %v2466 = vld [vmem:[#allocation2 + $0x738] sm:$0xff]
      %v2467 = vld [vmem:[#allocation2 + $0x740] sm:$0xff]
      %v2468 = vld [vmem:[#allocation2 + $0x748] sm:$0xff]
      %v2469 = vld [vmem:[#allocation2 + $0x750] sm:$0xff]
      %v2470 = vld [vmem:[#allocation2 + $0x758] sm:$0xff]
      %v2471 = vld [vmem:[#allocation2 + $0x760] sm:$0xff]
      %v2472 = vld [vmem:[#allocation2 + $0x768] sm:$0xff]
      %v2473 = vld [vmem:[#allocation2 + $0x770] sm:$0xff]
      %v2474 = vld [vmem:[#allocation2 + $0x778] sm:$0xff]
      %v2475 = vld [vmem:[#allocation2 + $0x780] sm:$0xff]
      %v2476 = vld [vmem:[#allocation2 + $0x788] sm:$0xff]
      %v2477 = vld [vmem:[#allocation2 + $0x790] sm:$0xff]
      %v2478 = vld [vmem:[#allocation2 + $0x798] sm:$0xff]
      %v2479 = vld [vmem:[#allocation2 + $0x7a0] sm:$0xff]
      %v2480 = vld [vmem:[#allocation2 + $0x7a8] sm:$0xff]
      %v2481 = vld [vmem:[#allocation2 + $0x7b0] sm:$0xff]
      %v2482 = vld [vmem:[#allocation2 + $0x7b8] sm:$0xff]
      %v2483 = vld [vmem:[#allocation2 + $0x7c0] sm:$0xff]
      %v2484 = vld [vmem:[#allocation2 + $0x7c8] sm:$0xff]
      %v2485 = vld [vmem:[#allocation2 + $0x7d0] sm:$0xff]
      %v2486 = vld [vmem:[#allocation2 + $0x7d8] sm:$0xff]
      %v2487 = vld [vmem:[#allocation2 + $0x7e0] sm:$0xff]
      %v2488 = vld [vmem:[#allocation2 + $0x7e8] sm:$0xff]
      %v2489 = vld [vmem:[#allocation2 + $0x7f0] sm:$0xff]
      %v2490 = vld [vmem:[#allocation2 + $0x7f8] sm:$0xff]
      %v2491 = vld [vmem:[#allocation8] sm:$0xff]
      %v2493 = vperm.slane %v2491, 0
      %v2494 = vperm.slane %v2491, 1
      %v2495 = vperm.slane %v2491, 2
      %v2496 = vperm.slane %v2491, 3
      %v2497 = vperm.slane %v2491, 4
      %v2498 = vperm.slane %v2491, 5
      %v2499 = vperm.slane %v2491, 6
      %v2500 = vperm.slane %v2491, 7
      %v2509 = vadd.f32 %v2235, %v2493
      %v2510 = vadd.f32 %v2236, %v2494
      %v2511 = vadd.f32 %v2237, %v2495
      %v2512 = vadd.f32 %v2238, %v2496
      %v2513 = vadd.f32 %v2239, %v2497
      %v2514 = vadd.f32 %v2240, %v2498
      %v2515 = vadd.f32 %v2241, %v2499
      %v2516 = vadd.f32 %v2242, %v2500
      %v2517 = vadd.f32 %v2243, %v2493
      %v2518 = vadd.f32 %v2244, %v2494
      %v2519 = vadd.f32 %v2245, %v2495
      %v2520 = vadd.f32 %v2246, %v2496
      %v2521 = vadd.f32 %v2247, %v2497
      %v2522 = vadd.f32 %v2248, %v2498
      %v2523 = vadd.f32 %v2249, %v2499
      %v2524 = vadd.f32 %v2250, %v2500
      %v2525 = vadd.f32 %v2251, %v2493
      %v2526 = vadd.f32 %v2252, %v2494
      %v2527 = vadd.f32 %v2253, %v2495
      %v2528 = vadd.f32 %v2254, %v2496
      %v2529 = vadd.f32 %v2255, %v2497
      %v2530 = vadd.f32 %v2256, %v2498
      %v2531 = vadd.f32 %v2257, %v2499
      %v2532 = vadd.f32 %v2258, %v2500
      %v2533 = vadd.f32 %v2259, %v2493
      %v2534 = vadd.f32 %v2260, %v2494
      %v2535 = vadd.f32 %v2261, %v2495
      %v2536 = vadd.f32 %v2262, %v2496
      %v2537 = vadd.f32 %v2263, %v2497
      %v2538 = vadd.f32 %v2264, %v2498
      %v2539 = vadd.f32 %v2265, %v2499
      %v2540 = vadd.f32 %v2266, %v2500
      %v2541 = vadd.f32 %v2267, %v2493
      %v2542 = vadd.f32 %v2268, %v2494
      %v2543 = vadd.f32 %v2269, %v2495
      %v2544 = vadd.f32 %v2270, %v2496
      %v2545 = vadd.f32 %v2271, %v2497
      %v2546 = vadd.f32 %v2272, %v2498
      %v2547 = vadd.f32 %v2273, %v2499
      %v2548 = vadd.f32 %v2274, %v2500
      %v2549 = vadd.f32 %v2275, %v2493
      %v2550 = vadd.f32 %v2276, %v2494
      %v2551 = vadd.f32 %v2277, %v2495
      %v2552 = vadd.f32 %v2278, %v2496
      %v2553 = vadd.f32 %v2279, %v2497
      %v2554 = vadd.f32 %v2280, %v2498
      %v2555 = vadd.f32 %v2281, %v2499
      %v2556 = vadd.f32 %v2282, %v2500
      %v2557 = vadd.f32 %v2283, %v2493
      %v2558 = vadd.f32 %v2284, %v2494
      %v2559 = vadd.f32 %v2285, %v2495
      %v2560 = vadd.f32 %v2286, %v2496
      %v2561 = vadd.f32 %v2287, %v2497
      %v2562 = vadd.f32 %v2288, %v2498
      %v2563 = vadd.f32 %v2289, %v2499
      %v2564 = vadd.f32 %v2290, %v2500
      %v2565 = vadd.f32 %v2291, %v2493
      %v2566 = vadd.f32 %v2292, %v2494
      %v2567 = vadd.f32 %v2293, %v2495
      %v2568 = vadd.f32 %v2294, %v2496
      %v2569 = vadd.f32 %v2295, %v2497
      %v2570 = vadd.f32 %v2296, %v2498
      %v2571 = vadd.f32 %v2297, %v2499
      %v2572 = vadd.f32 %v2298, %v2500
      %v2573 = vadd.f32 %v2299, %v2493
      %v2574 = vadd.f32 %v2300, %v2494
      %v2575 = vadd.f32 %v2301, %v2495
      %v2576 = vadd.f32 %v2302, %v2496
      %v2577 = vadd.f32 %v2303, %v2497
      %v2578 = vadd.f32 %v2304, %v2498
      %v2579 = vadd.f32 %v2305, %v2499
      %v2580 = vadd.f32 %v2306, %v2500
      %v2581 = vadd.f32 %v2307, %v2493
      %v2582 = vadd.f32 %v2308, %v2494
      %v2583 = vadd.f32 %v2309, %v2495
      %v2584 = vadd.f32 %v2310, %v2496
      %v2585 = vadd.f32 %v2311, %v2497
      %v2586 = vadd.f32 %v2312, %v2498
      %v2587 = vadd.f32 %v2313, %v2499
      %v2588 = vadd.f32 %v2314, %v2500
      %v2589 = vadd.f32 %v2315, %v2493
      %v2590 = vadd.f32 %v2316, %v2494
      %v2591 = vadd.f32 %v2317, %v2495
      %v2592 = vadd.f32 %v2318, %v2496
      %v2593 = vadd.f32 %v2319, %v2497
      %v2594 = vadd.f32 %v2320, %v2498
      %v2595 = vadd.f32 %v2321, %v2499
      %v2596 = vadd.f32 %v2322, %v2500
      %v2597 = vadd.f32 %v2323, %v2493
      %v2598 = vadd.f32 %v2324, %v2494
      %v2599 = vadd.f32 %v2325, %v2495
      %v2600 = vadd.f32 %v2326, %v2496
      %v2601 = vadd.f32 %v2327, %v2497
      %v2602 = vadd.f32 %v2328, %v2498
      %v2603 = vadd.f32 %v2329, %v2499
      %v2604 = vadd.f32 %v2330, %v2500
      %v2605 = vadd.f32 %v2331, %v2493
      %v2606 = vadd.f32 %v2332, %v2494
      %v2607 = vadd.f32 %v2333, %v2495
      %v2608 = vadd.f32 %v2334, %v2496
      %v2609 = vadd.f32 %v2335, %v2497
      %v2610 = vadd.f32 %v2336, %v2498
      %v2611 = vadd.f32 %v2337, %v2499
      %v2612 = vadd.f32 %v2338, %v2500
      %v2613 = vadd.f32 %v2339, %v2493
      %v2614 = vadd.f32 %v2340, %v2494
      %v2615 = vadd.f32 %v2341, %v2495
      %v2616 = vadd.f32 %v2342, %v2496
      %v2617 = vadd.f32 %v2343, %v2497
      %v2618 = vadd.f32 %v2344, %v2498
      %v2619 = vadd.f32 %v2345, %v2499
      %v2620 = vadd.f32 %v2346, %v2500
      %v2621 = vadd.f32 %v2347, %v2493
      %v2622 = vadd.f32 %v2348, %v2494
      %v2623 = vadd.f32 %v2349, %v2495
      %v2624 = vadd.f32 %v2350, %v2496
      %v2625 = vadd.f32 %v2351, %v2497
      %v2626 = vadd.f32 %v2352, %v2498
      %v2627 = vadd.f32 %v2353, %v2499
      %v2628 = vadd.f32 %v2354, %v2500
      %v2629 = vadd.f32 %v2355, %v2493
      %v2630 = vadd.f32 %v2356, %v2494
      %v2631 = vadd.f32 %v2357, %v2495
      %v2632 = vadd.f32 %v2358, %v2496
      %v2633 = vadd.f32 %v2359, %v2497
      %v2634 = vadd.f32 %v2360, %v2498
      %v2635 = vadd.f32 %v2361, %v2499
      %v2636 = vadd.f32 %v2362, %v2500
      %v2637 = vadd.f32 %v2363, %v2493
      %v2638 = vadd.f32 %v2364, %v2494
      %v2639 = vadd.f32 %v2365, %v2495
      %v2640 = vadd.f32 %v2366, %v2496
      %v2641 = vadd.f32 %v2367, %v2497
      %v2642 = vadd.f32 %v2368, %v2498
      %v2643 = vadd.f32 %v2369, %v2499
      %v2644 = vadd.f32 %v2370, %v2500
      %v2645 = vadd.f32 %v2371, %v2493
      %v2646 = vadd.f32 %v2372, %v2494
      %v2647 = vadd.f32 %v2373, %v2495
      %v2648 = vadd.f32 %v2374, %v2496
      %v2649 = vadd.f32 %v2375, %v2497
      %v2650 = vadd.f32 %v2376, %v2498
      %v2651 = vadd.f32 %v2377, %v2499
      %v2652 = vadd.f32 %v2378, %v2500
      %v2653 = vadd.f32 %v2379, %v2493
      %v2654 = vadd.f32 %v2380, %v2494
      %v2655 = vadd.f32 %v2381, %v2495
      %v2656 = vadd.f32 %v2382, %v2496
      %v2657 = vadd.f32 %v2383, %v2497
      %v2658 = vadd.f32 %v2384, %v2498
      %v2659 = vadd.f32 %v2385, %v2499
      %v2660 = vadd.f32 %v2386, %v2500
      %v2661 = vadd.f32 %v2387, %v2493
      %v2662 = vadd.f32 %v2388, %v2494
      %v2663 = vadd.f32 %v2389, %v2495
      %v2664 = vadd.f32 %v2390, %v2496
      %v2665 = vadd.f32 %v2391, %v2497
      %v2666 = vadd.f32 %v2392, %v2498
      %v2667 = vadd.f32 %v2393, %v2499
      %v2668 = vadd.f32 %v2394, %v2500
      %v2669 = vadd.f32 %v2395, %v2493
      %v2670 = vadd.f32 %v2396, %v2494
      %v2671 = vadd.f32 %v2397, %v2495
      %v2672 = vadd.f32 %v2398, %v2496
      %v2673 = vadd.f32 %v2399, %v2497
      %v2674 = vadd.f32 %v2400, %v2498
      %v2675 = vadd.f32 %v2401, %v2499
      %v2676 = vadd.f32 %v2402, %v2500
      %v2677 = vadd.f32 %v2403, %v2493
      %v2678 = vadd.f32 %v2404, %v2494
      %v2679 = vadd.f32 %v2405, %v2495
      %v2680 = vadd.f32 %v2406, %v2496
      %v2681 = vadd.f32 %v2407, %v2497
      %v2682 = vadd.f32 %v2408, %v2498
      %v2683 = vadd.f32 %v2409, %v2499
      %v2684 = vadd.f32 %v2410, %v2500
      %v2685 = vadd.f32 %v2411, %v2493
      %v2686 = vadd.f32 %v2412, %v2494
      %v2687 = vadd.f32 %v2413, %v2495
      %v2688 = vadd.f32 %v2414, %v2496
      %v2689 = vadd.f32 %v2415, %v2497
      %v2690 = vadd.f32 %v2416, %v2498
      %v2691 = vadd.f32 %v2417, %v2499
      %v2692 = vadd.f32 %v2418, %v2500
      %v2693 = vadd.f32 %v2419, %v2493
      %v2694 = vadd.f32 %v2420, %v2494
      %v2695 = vadd.f32 %v2421, %v2495
      %v2696 = vadd.f32 %v2422, %v2496
      %v2697 = vadd.f32 %v2423, %v2497
      %v2698 = vadd.f32 %v2424, %v2498
      %v2699 = vadd.f32 %v2425, %v2499
      %v2700 = vadd.f32 %v2426, %v2500
      %v2701 = vadd.f32 %v2427, %v2493
      %v2702 = vadd.f32 %v2428, %v2494
      %v2703 = vadd.f32 %v2429, %v2495
      %v2704 = vadd.f32 %v2430, %v2496
      %v2705 = vadd.f32 %v2431, %v2497
      %v2706 = vadd.f32 %v2432, %v2498
      %v2707 = vadd.f32 %v2433, %v2499
      %v2708 = vadd.f32 %v2434, %v2500
      %v2709 = vadd.f32 %v2435, %v2493
      %v2710 = vadd.f32 %v2436, %v2494
      %v2711 = vadd.f32 %v2437, %v2495
      %v2712 = vadd.f32 %v2438, %v2496
      %v2713 = vadd.f32 %v2439, %v2497
      %v2714 = vadd.f32 %v2440, %v2498
      %v2715 = vadd.f32 %v2441, %v2499
      %v2716 = vadd.f32 %v2442, %v2500
      %v2717 = vadd.f32 %v2443, %v2493
      %v2718 = vadd.f32 %v2444, %v2494
      %v2719 = vadd.f32 %v2445, %v2495
      %v2720 = vadd.f32 %v2446, %v2496
      %v2721 = vadd.f32 %v2447, %v2497
      %v2722 = vadd.f32 %v2448, %v2498
      %v2723 = vadd.f32 %v2449, %v2499
      %v2724 = vadd.f32 %v2450, %v2500
      %v2725 = vadd.f32 %v2451, %v2493
      %v2726 = vadd.f32 %v2452, %v2494
      %v2727 = vadd.f32 %v2453, %v2495
      %v2728 = vadd.f32 %v2454, %v2496
      %v2729 = vadd.f32 %v2455, %v2497
      %v2730 = vadd.f32 %v2456, %v2498
      %v2731 = vadd.f32 %v2457, %v2499
      %v2732 = vadd.f32 %v2458, %v2500
      %v2733 = vadd.f32 %v2459, %v2493
      %v2734 = vadd.f32 %v2460, %v2494
      %v2735 = vadd.f32 %v2461, %v2495
      %v2736 = vadd.f32 %v2462, %v2496
      %v2737 = vadd.f32 %v2463, %v2497
      %v2738 = vadd.f32 %v2464, %v2498
      %v2739 = vadd.f32 %v2465, %v2499
      %v2740 = vadd.f32 %v2466, %v2500
      %v2741 = vadd.f32 %v2467, %v2493
      %v2742 = vadd.f32 %v2468, %v2494
      %v2743 = vadd.f32 %v2469, %v2495
      %v2744 = vadd.f32 %v2470, %v2496
      %v2745 = vadd.f32 %v2471, %v2497
      %v2746 = vadd.f32 %v2472, %v2498
      %v2747 = vadd.f32 %v2473, %v2499
      %v2748 = vadd.f32 %v2474, %v2500
      %v2749 = vadd.f32 %v2475, %v2493
      %v2750 = vadd.f32 %v2476, %v2494
      %v2751 = vadd.f32 %v2477, %v2495
      %v2752 = vadd.f32 %v2478, %v2496
      %v2753 = vadd.f32 %v2479, %v2497
      %v2754 = vadd.f32 %v2480, %v2498
      %v2755 = vadd.f32 %v2481, %v2499
      %v2756 = vadd.f32 %v2482, %v2500
      %v2757 = vadd.f32 %v2483, %v2493
      %v2758 = vadd.f32 %v2484, %v2494
      %v2759 = vadd.f32 %v2485, %v2495
      %v2760 = vadd.f32 %v2486, %v2496
      %v2761 = vadd.f32 %v2487, %v2497
      %v2762 = vadd.f32 %v2488, %v2498
      %v2763 = vadd.f32 %v2489, %v2499
      %v2764 = vadd.f32 %v2490, %v2500
      %v2765 = vpack.c.bf16 %v2510, %v2509
      %v2766 = vpack.c.bf16 %v2512, %v2511
      %v2767 = vpack.c.bf16 %v2514, %v2513
      %v2768 = vpack.c.bf16 %v2516, %v2515
      %v2769 = vpack.c.bf16 %v2518, %v2517
      %v2770 = vpack.c.bf16 %v2520, %v2519
      %v2771 = vpack.c.bf16 %v2522, %v2521
      %v2772 = vpack.c.bf16 %v2524, %v2523
      %v2773 = vpack.c.bf16 %v2526, %v2525
      %v2774 = vpack.c.bf16 %v2528, %v2527
      %v2775 = vpack.c.bf16 %v2530, %v2529
      %v2776 = vpack.c.bf16 %v2532, %v2531
      %v2777 = vpack.c.bf16 %v2534, %v2533
      %v2778 = vpack.c.bf16 %v2536, %v2535
      %v2779 = vpack.c.bf16 %v2538, %v2537
      %v2780 = vpack.c.bf16 %v2540, %v2539
      %v2781 = vpack.c.bf16 %v2542, %v2541
      %v2782 = vpack.c.bf16 %v2544, %v2543
      %v2783 = vpack.c.bf16 %v2546, %v2545
      %v2784 = vpack.c.bf16 %v2548, %v2547
      %v2785 = vpack.c.bf16 %v2550, %v2549
      %v2786 = vpack.c.bf16 %v2552, %v2551
      %v2787 = vpack.c.bf16 %v2554, %v2553
      %v2788 = vpack.c.bf16 %v2556, %v2555
      %v2789 = vpack.c.bf16 %v2558, %v2557
      %v2790 = vpack.c.bf16 %v2560, %v2559
      %v2791 = vpack.c.bf16 %v2562, %v2561
      %v2792 = vpack.c.bf16 %v2564, %v2563
      %v2793 = vpack.c.bf16 %v2566, %v2565
      %v2794 = vpack.c.bf16 %v2568, %v2567
      %v2795 = vpack.c.bf16 %v2570, %v2569
      %v2796 = vpack.c.bf16 %v2572, %v2571
      %v2797 = vpack.c.bf16 %v2574, %v2573
      %v2798 = vpack.c.bf16 %v2576, %v2575
      %v2799 = vpack.c.bf16 %v2578, %v2577
      %v2800 = vpack.c.bf16 %v2580, %v2579
      %v2801 = vpack.c.bf16 %v2582, %v2581
      %v2802 = vpack.c.bf16 %v2584, %v2583
      %v2803 = vpack.c.bf16 %v2586, %v2585
      %v2804 = vpack.c.bf16 %v2588, %v2587
      %v2805 = vpack.c.bf16 %v2590, %v2589
      %v2806 = vpack.c.bf16 %v2592, %v2591
      %v2807 = vpack.c.bf16 %v2594, %v2593
      %v2808 = vpack.c.bf16 %v2596, %v2595
      %v2809 = vpack.c.bf16 %v2598, %v2597
      %v2810 = vpack.c.bf16 %v2600, %v2599
      %v2811 = vpack.c.bf16 %v2602, %v2601
      %v2812 = vpack.c.bf16 %v2604, %v2603
      %v2813 = vpack.c.bf16 %v2606, %v2605
      %v2814 = vpack.c.bf16 %v2608, %v2607
      %v2815 = vpack.c.bf16 %v2610, %v2609
      %v2816 = vpack.c.bf16 %v2612, %v2611
      %v2817 = vpack.c.bf16 %v2614, %v2613
      %v2818 = vpack.c.bf16 %v2616, %v2615
      %v2819 = vpack.c.bf16 %v2618, %v2617
      %v2820 = vpack.c.bf16 %v2620, %v2619
      %v2821 = vpack.c.bf16 %v2622, %v2621
      %v2822 = vpack.c.bf16 %v2624, %v2623
      %v2823 = vpack.c.bf16 %v2626, %v2625
      %v2824 = vpack.c.bf16 %v2628, %v2627
      %v2825 = vpack.c.bf16 %v2630, %v2629
      %v2826 = vpack.c.bf16 %v2632, %v2631
      %v2827 = vpack.c.bf16 %v2634, %v2633
      %v2828 = vpack.c.bf16 %v2636, %v2635
      %v2829 = vpack.c.bf16 %v2638, %v2637
      %v2830 = vpack.c.bf16 %v2640, %v2639
      %v2831 = vpack.c.bf16 %v2642, %v2641
      %v2832 = vpack.c.bf16 %v2644, %v2643
      %v2833 = vpack.c.bf16 %v2646, %v2645
      %v2834 = vpack.c.bf16 %v2648, %v2647
      %v2835 = vpack.c.bf16 %v2650, %v2649
      %v2836 = vpack.c.bf16 %v2652, %v2651
      %v2837 = vpack.c.bf16 %v2654, %v2653
      %v2838 = vpack.c.bf16 %v2656, %v2655
      %v2839 = vpack.c.bf16 %v2658, %v2657
      %v2840 = vpack.c.bf16 %v2660, %v2659
      %v2841 = vpack.c.bf16 %v2662, %v2661
      %v2842 = vpack.c.bf16 %v2664, %v2663
      %v2843 = vpack.c.bf16 %v2666, %v2665
      %v2844 = vpack.c.bf16 %v2668, %v2667
      %v2845 = vpack.c.bf16 %v2670, %v2669
      %v2846 = vpack.c.bf16 %v2672, %v2671
      %v2847 = vpack.c.bf16 %v2674, %v2673
      %v2848 = vpack.c.bf16 %v2676, %v2675
      %v2849 = vpack.c.bf16 %v2678, %v2677
      %v2850 = vpack.c.bf16 %v2680, %v2679
      %v2851 = vpack.c.bf16 %v2682, %v2681
      %v2852 = vpack.c.bf16 %v2684, %v2683
      %v2853 = vpack.c.bf16 %v2686, %v2685
      %v2854 = vpack.c.bf16 %v2688, %v2687
      %v2855 = vpack.c.bf16 %v2690, %v2689
      %v2856 = vpack.c.bf16 %v2692, %v2691
      %v2857 = vpack.c.bf16 %v2694, %v2693
      %v2858 = vpack.c.bf16 %v2696, %v2695
      %v2859 = vpack.c.bf16 %v2698, %v2697
      %v2860 = vpack.c.bf16 %v2700, %v2699
      %v2861 = vpack.c.bf16 %v2702, %v2701
      %v2862 = vpack.c.bf16 %v2704, %v2703
      %v2863 = vpack.c.bf16 %v2706, %v2705
      %v2864 = vpack.c.bf16 %v2708, %v2707
      %v2865 = vpack.c.bf16 %v2710, %v2709
      %v2866 = vpack.c.bf16 %v2712, %v2711
      %v2867 = vpack.c.bf16 %v2714, %v2713
      %v2868 = vpack.c.bf16 %v2716, %v2715
      %v2869 = vpack.c.bf16 %v2718, %v2717
      %v2870 = vpack.c.bf16 %v2720, %v2719
      %v2871 = vpack.c.bf16 %v2722, %v2721
      %v2872 = vpack.c.bf16 %v2724, %v2723
      %v2873 = vpack.c.bf16 %v2726, %v2725
      %v2874 = vpack.c.bf16 %v2728, %v2727
      %v2875 = vpack.c.bf16 %v2730, %v2729
      %v2876 = vpack.c.bf16 %v2732, %v2731
      %v2877 = vpack.c.bf16 %v2734, %v2733
      %v2878 = vpack.c.bf16 %v2736, %v2735
      %v2879 = vpack.c.bf16 %v2738, %v2737
      %v2880 = vpack.c.bf16 %v2740, %v2739
      %v2881 = vpack.c.bf16 %v2742, %v2741
      %v2882 = vpack.c.bf16 %v2744, %v2743
      %v2883 = vpack.c.bf16 %v2746, %v2745
      %v2884 = vpack.c.bf16 %v2748, %v2747
      %v2885 = vpack.c.bf16 %v2750, %v2749
      %v2886 = vpack.c.bf16 %v2752, %v2751
      %v2887 = vpack.c.bf16 %v2754, %v2753
      %v2888 = vpack.c.bf16 %v2756, %v2755
      %v2889 = vpack.c.bf16 %v2758, %v2757
      %v2890 = vpack.c.bf16 %v2760, %v2759
      %v2891 = vpack.c.bf16 %v2762, %v2761
      %v2892 = vpack.c.bf16 %v2764, %v2763
      %2893 = vst [vmem:[#allocation9] sm:$0xff] %v2765
      %2894 = vst [vmem:[#allocation9 + $0x8] sm:$0xff] %v2766
      %2895 = vst [vmem:[#allocation9 + $0x10] sm:$0xff] %v2767
      %2896 = vst [vmem:[#allocation9 + $0x18] sm:$0xff] %v2768
      %2897 = vst [vmem:[#allocation9 + $0x20] sm:$0xff] %v2769
      %2898 = vst [vmem:[#allocation9 + $0x28] sm:$0xff] %v2770
      %2899 = vst [vmem:[#allocation9 + $0x30] sm:$0xff] %v2771
      %2900 = vst [vmem:[#allocation9 + $0x38] sm:$0xff] %v2772
      %2901 = vst [vmem:[#allocation9 + $0x40] sm:$0xff] %v2773
      %2902 = vst [vmem:[#allocation9 + $0x48] sm:$0xff] %v2774
      %2903 = vst [vmem:[#allocation9 + $0x50] sm:$0xff] %v2775
      %2904 = vst [vmem:[#allocation9 + $0x58] sm:$0xff] %v2776
      %2905 = vst [vmem:[#allocation9 + $0x60] sm:$0xff] %v2777
      %2906 = vst [vmem:[#allocation9 + $0x68] sm:$0xff] %v2778
      %2907 = vst [vmem:[#allocation9 + $0x70] sm:$0xff] %v2779
      %2908 = vst [vmem:[#allocation9 + $0x78] sm:$0xff] %v2780
      %2909 = vst [vmem:[#allocation9 + $0x80] sm:$0xff] %v2781
      %2910 = vst [vmem:[#allocation9 + $0x88] sm:$0xff] %v2782
      %2911 = vst [vmem:[#allocation9 + $0x90] sm:$0xff] %v2783
      %2912 = vst [vmem:[#allocation9 + $0x98] sm:$0xff] %v2784
      %2913 = vst [vmem:[#allocation9 + $0xa0] sm:$0xff] %v2785
      %2914 = vst [vmem:[#allocation9 + $0xa8] sm:$0xff] %v2786
      %2915 = vst [vmem:[#allocation9 + $0xb0] sm:$0xff] %v2787
      %2916 = vst [vmem:[#allocation9 + $0xb8] sm:$0xff] %v2788
      %2917 = vst [vmem:[#allocation9 + $0xc0] sm:$0xff] %v2789
      %2918 = vst [vmem:[#allocation9 + $0xc8] sm:$0xff] %v2790
      %2919 = vst [vmem:[#allocation9 + $0xd0] sm:$0xff] %v2791
      %2920 = vst [vmem:[#allocation9 + $0xd8] sm:$0xff] %v2792
      %2921 = vst [vmem:[#allocation9 + $0xe0] sm:$0xff] %v2793
      %2922 = vst [vmem:[#allocation9 + $0xe8] sm:$0xff] %v2794
      %2923 = vst [vmem:[#allocation9 + $0xf0] sm:$0xff] %v2795
      %2924 = vst [vmem:[#allocation9 + $0xf8] sm:$0xff] %v2796
      %2925 = vst [vmem:[#allocation9 + $0x100] sm:$0xff] %v2797
      %2926 = vst [vmem:[#allocation9 + $0x108] sm:$0xff] %v2798
      %2927 = vst [vmem:[#allocation9 + $0x110] sm:$0xff] %v2799
      %2928 = vst [vmem:[#allocation9 + $0x118] sm:$0xff] %v2800
      %2929 = vst [vmem:[#allocation9 + $0x120] sm:$0xff] %v2801
      %2930 = vst [vmem:[#allocation9 + $0x128] sm:$0xff] %v2802
      %2931 = vst [vmem:[#allocation9 + $0x130] sm:$0xff] %v2803
      %2932 = vst [vmem:[#allocation9 + $0x138] sm:$0xff] %v2804
      %2933 = vst [vmem:[#allocation9 + $0x140] sm:$0xff] %v2805
      %2934 = vst [vmem:[#allocation9 + $0x148] sm:$0xff] %v2806
      %2935 = vst [vmem:[#allocation9 + $0x150] sm:$0xff] %v2807
      %2936 = vst [vmem:[#allocation9 + $0x158] sm:$0xff] %v2808
      %2937 = vst [vmem:[#allocation9 + $0x160] sm:$0xff] %v2809
      %2938 = vst [vmem:[#allocation9 + $0x168] sm:$0xff] %v2810
      %2939 = vst [vmem:[#allocation9 + $0x170] sm:$0xff] %v2811
      %2940 = vst [vmem:[#allocation9 + $0x178] sm:$0xff] %v2812
      %2941 = vst [vmem:[#allocation9 + $0x180] sm:$0xff] %v2813
      %2942 = vst [vmem:[#allocation9 + $0x188] sm:$0xff] %v2814
      %2943 = vst [vmem:[#allocation9 + $0x190] sm:$0xff] %v2815
      %2944 = vst [vmem:[#allocation9 + $0x198] sm:$0xff] %v2816
      %2945 = vst [vmem:[#allocation9 + $0x1a0] sm:$0xff] %v2817
      %2946 = vst [vmem:[#allocation9 + $0x1a8] sm:$0xff] %v2818
      %2947 = vst [vmem:[#allocation9 + $0x1b0] sm:$0xff] %v2819
      %2948 = vst [vmem:[#allocation9 + $0x1b8] sm:$0xff] %v2820
      %2949 = vst [vmem:[#allocation9 + $0x1c0] sm:$0xff] %v2821
      %2950 = vst [vmem:[#allocation9 + $0x1c8] sm:$0xff] %v2822
      %2951 = vst [vmem:[#allocation9 + $0x1d0] sm:$0xff] %v2823
      %2952 = vst [vmem:[#allocation9 + $0x1d8] sm:$0xff] %v2824
      %2953 = vst [vmem:[#allocation9 + $0x1e0] sm:$0xff] %v2825
      %2954 = vst [vmem:[#allocation9 + $0x1e8] sm:$0xff] %v2826
      %2955 = vst [vmem:[#allocation9 + $0x1f0] sm:$0xff] %v2827
      %2956 = vst [vmem:[#allocation9 + $0x1f8] sm:$0xff] %v2828
      %2957 = vst [vmem:[#allocation9 + $0x200] sm:$0xff] %v2829
      %2958 = vst [vmem:[#allocation9 + $0x208] sm:$0xff] %v2830
      %2959 = vst [vmem:[#allocation9 + $0x210] sm:$0xff] %v2831
      %2960 = vst [vmem:[#allocation9 + $0x218] sm:$0xff] %v2832
      %2961 = vst [vmem:[#allocation9 + $0x220] sm:$0xff] %v2833
      %2962 = vst [vmem:[#allocation9 + $0x228] sm:$0xff] %v2834
      %2963 = vst [vmem:[#allocation9 + $0x230] sm:$0xff] %v2835
      %2964 = vst [vmem:[#allocation9 + $0x238] sm:$0xff] %v2836
      %2965 = vst [vmem:[#allocation9 + $0x240] sm:$0xff] %v2837
      %2966 = vst [vmem:[#allocation9 + $0x248] sm:$0xff] %v2838
      %2967 = vst [vmem:[#allocation9 + $0x250] sm:$0xff] %v2839
      %2968 = vst [vmem:[#allocation9 + $0x258] sm:$0xff] %v2840
      %2969 = vst [vmem:[#allocation9 + $0x260] sm:$0xff] %v2841
      %2970 = vst [vmem:[#allocation9 + $0x268] sm:$0xff] %v2842
      %2971 = vst [vmem:[#allocation9 + $0x270] sm:$0xff] %v2843
      %2972 = vst [vmem:[#allocation9 + $0x278] sm:$0xff] %v2844
      %2973 = vst [vmem:[#allocation9 + $0x280] sm:$0xff] %v2845
      %2974 = vst [vmem:[#allocation9 + $0x288] sm:$0xff] %v2846
      %2975 = vst [vmem:[#allocation9 + $0x290] sm:$0xff] %v2847
      %2976 = vst [vmem:[#allocation9 + $0x298] sm:$0xff] %v2848
      %2977 = vst [vmem:[#allocation9 + $0x2a0] sm:$0xff] %v2849
      %2978 = vst [vmem:[#allocation9 + $0x2a8] sm:$0xff] %v2850
      %2979 = vst [vmem:[#allocation9 + $0x2b0] sm:$0xff] %v2851
      %2980 = vst [vmem:[#allocation9 + $0x2b8] sm:$0xff] %v2852
      %2981 = vst [vmem:[#allocation9 + $0x2c0] sm:$0xff] %v2853
      %2982 = vst [vmem:[#allocation9 + $0x2c8] sm:$0xff] %v2854
      %2983 = vst [vmem:[#allocation9 + $0x2d0] sm:$0xff] %v2855
      %2984 = vst [vmem:[#allocation9 + $0x2d8] sm:$0xff] %v2856
      %2985 = vst [vmem:[#allocation9 + $0x2e0] sm:$0xff] %v2857
      %2986 = vst [vmem:[#allocation9 + $0x2e8] sm:$0xff] %v2858
      %2987 = vst [vmem:[#allocation9 + $0x2f0] sm:$0xff] %v2859
      %2988 = vst [vmem:[#allocation9 + $0x2f8] sm:$0xff] %v2860
      %2989 = vst [vmem:[#allocation9 + $0x300] sm:$0xff] %v2861
      %2990 = vst [vmem:[#allocation9 + $0x308] sm:$0xff] %v2862
      %2991 = vst [vmem:[#allocation9 + $0x310] sm:$0xff] %v2863
      %2992 = vst [vmem:[#allocation9 + $0x318] sm:$0xff] %v2864
      %2993 = vst [vmem:[#allocation9 + $0x320] sm:$0xff] %v2865
      %2994 = vst [vmem:[#allocation9 + $0x328] sm:$0xff] %v2866
      %2995 = vst [vmem:[#allocation9 + $0x330] sm:$0xff] %v2867
      %2996 = vst [vmem:[#allocation9 + $0x338] sm:$0xff] %v2868
      %2997 = vst [vmem:[#allocation9 + $0x340] sm:$0xff] %v2869
      %2998 = vst [vmem:[#allocation9 + $0x348] sm:$0xff] %v2870
      %2999 = vst [vmem:[#allocation9 + $0x350] sm:$0xff] %v2871
      %3000 = vst [vmem:[#allocation9 + $0x358] sm:$0xff] %v2872
      %3001 = vst [vmem:[#allocation9 + $0x360] sm:$0xff] %v2873
      %3002 = vst [vmem:[#allocation9 + $0x368] sm:$0xff] %v2874
      %3003 = vst [vmem:[#allocation9 + $0x370] sm:$0xff] %v2875
      %3004 = vst [vmem:[#allocation9 + $0x378] sm:$0xff] %v2876
      %3005 = vst [vmem:[#allocation9 + $0x380] sm:$0xff] %v2877
      %3006 = vst [vmem:[#allocation9 + $0x388] sm:$0xff] %v2878
      %3007 = vst [vmem:[#allocation9 + $0x390] sm:$0xff] %v2879
      %3008 = vst [vmem:[#allocation9 + $0x398] sm:$0xff] %v2880
      %3009 = vst [vmem:[#allocation9 + $0x3a0] sm:$0xff] %v2881
      %3010 = vst [vmem:[#allocation9 + $0x3a8] sm:$0xff] %v2882
      %3011 = vst [vmem:[#allocation9 + $0x3b0] sm:$0xff] %v2883
      %3012 = vst [vmem:[#allocation9 + $0x3b8] sm:$0xff] %v2884
      %3013 = vst [vmem:[#allocation9 + $0x3c0] sm:$0xff] %v2885
      %3014 = vst [vmem:[#allocation9 + $0x3c8] sm:$0xff] %v2886
      %3015 = vst [vmem:[#allocation9 + $0x3d0] sm:$0xff] %v2887
      %3016 = vst [vmem:[#allocation9 + $0x3d8] sm:$0xff] %v2888
      %3017 = vst [vmem:[#allocation9 + $0x3e0] sm:$0xff] %v2889
      %3018 = vst [vmem:[#allocation9 + $0x3e8] sm:$0xff] %v2890
      %3019 = vst [vmem:[#allocation9 + $0x3f0] sm:$0xff] %v2891
      %3020 = vst [vmem:[#allocation9 + $0x3f8] sm:$0xff] %v2892
    $region33: #{tpu_custom_call.1} parent=1 // pred_fallthru
      _
    // Predicated region
    $region34: #{tpu_custom_call.1} parent=1 // pred_check
      _
    $region35: #{tpu_custom_call.1} parent=1 // pred_check_branch
      %3022 = sbr.rel (0) target = $region37
    $region36: #{tpu_custom_call.1} parent=1 // pred_region
      %3024 = vsyncadd [#allocation5], 0
      %s3025 = sshll.u32 [#allocation9], 4
      %s3026 = int_to_ptr.vmem [resolvable:$true] %s3025
      %s3027 = sshll.u32 %s3, 4
      %s3028 = int_to_ptr.hbm [resolvable:$true] %s3027
      %3033 = dma.vmem_to_hbm [thread:$0]  %s3026, 16384, %s3028, [#allocation5], 512, 512, 32
    $region37: #{tpu_custom_call.1} parent=1 // pred_fallthru
      _
    // Predicated region
    $region38: #{tpu_custom_call.1} parent=1 // pred_check
      _
    $region39: #{tpu_custom_call.1} parent=1 // pred_check_branch
      %3035 = sbr.rel (0) target = $region41
    $region40: #{tpu_custom_call.1} parent=1 // pred_region
      %3037 = dma.done [#allocation5], 16384
    $region41: #{tpu_custom_call.1} parent=1 // pred_fallthru
      _
    %3038 = vsyncpa [#allocation4], 1
    %3039 = vsyncpa [#allocation7], 1
    %3040 = vsyncpa [#allocation5], 1

</llo_original>
